<compile_context>
chip_gen: v7x
topology: tpu7x:2x2x1
jax: 0.10.0
libtpu: 0.0.40
codegen_flags: <defaults>
</compile_context>

<pallas_src>
import functools

import jax
import jax.numpy as jnp
import numpy as np
from jax import lax
from jax.experimental import pallas as pl
from jax.experimental.pallas import tpu as pltpu


EPS = 1e-5  # torch.nn.LayerNorm default


def _layernorm(x, gamma, beta):
    mu = jnp.mean(x, axis=-1, keepdims=True)
    var = jnp.mean((x - mu) ** 2, axis=-1, keepdims=True)
    return (x - mu) * lax.rsqrt(var + EPS) * gamma + beta


def encoder_kernel(x_ref,
                   wih0_ref, whh0_ref, bih0_ref, bhh0_ref,
                   wih1_ref, whh1_ref, bih1_ref, bhh1_ref,
                   ln_g_ref, ln_b_ref,
                   fc1_w_ref, fc1_b_ref, ln1_g_ref, ln1_b_ref,
                   fc2_w_ref, fc2_b_ref, ln2_g_ref, ln2_b_ref,
                   out_ref, *, seq_len):
    TB, E = x_ref.shape
    T = seq_len
    B = TB // T
    HP = whh0_ref.shape[0]          # lane-padded hidden size (multiple of 128)
    G3 = 3 * HP
    H = ln_g_ref.shape[-1]          # real hidden size

    # ---- hoisted layer-0 input projection: one large MXU matmul ------------
    gi0 = jnp.dot(x_ref[...], wih0_ref[...],
                  preferred_element_type=jnp.float32) + bih0_ref[...]
    # One-time, lane-aligned gate split (HP is a multiple of 128).
    gi0_r = gi0[:, 0:HP]
    gi0_z = gi0[:, HP:2 * HP]
    gi0_n = gi0[:, 2 * HP:G3]

    # ---- hoisted weights / bias broadcasts ----------------------------------
    whh0 = whh0_ref[...]
    wih1 = wih1_ref[...]
    whh1 = whh1_ref[...]
    bhh0_b = jnp.broadcast_to(bhh0_ref[...], (B, G3))
    bih1_b = jnp.broadcast_to(bih1_ref[...], (B, G3))
    bhh1_b = jnp.broadcast_to(bhh1_ref[...], (B, G3))

    def cell(gr, gz, gn, h, whh, bhh_b):
        # PyTorch GRU cell (gate order r, z, n); only the recurrent matmul
        # remains on the serial chain.
        gh = jnp.dot(h, whh, preferred_element_type=jnp.float32) + bhh_b
        r = jax.nn.sigmoid(gr + gh[:, 0:HP])
        z = jax.nn.sigmoid(gz + gh[:, HP:2 * HP])
        n = jnp.tanh(gn + r * gh[:, 2 * HP:G3])
        return (1.0 - z) * n + z * h

    h0 = jnp.zeros((B, HP), jnp.float32)
    h1 = jnp.zeros((B, HP), jnp.float32)

    # Fully-unrolled time loop (T is static and small): static row offsets,
    # no dynamic slicing, maximum scheduling freedom across steps.
    for t in range(T):
        row = t * B
        h0 = cell(gi0_r[row:row + B, :],
                  gi0_z[row:row + B, :],
                  gi0_n[row:row + B, :],
                  h0, whh0, bhh0_b)
        gi1 = jnp.dot(h0, wih1, preferred_element_type=jnp.float32) + bih1_b
        h1 = cell(gi1[:, 0:HP], gi1[:, HP:2 * HP], gi1[:, 2 * HP:G3],
                  h1, whh1, bhh1_b)

    # ---- head: LayerNorm/tanh -> fc1/LN/tanh -> fc2/LN/tanh -----------------
    hidden = jnp.tanh(_layernorm(h1[:, :H], ln_g_ref[...], ln_b_ref[...]))
    o1 = jnp.dot(hidden, fc1_w_ref[...],
                 preferred_element_type=jnp.float32) + fc1_b_ref[...]
    o1 = jnp.tanh(_layernorm(o1, ln1_g_ref[...], ln1_b_ref[...]))
    o2 = jnp.dot(o1, fc2_w_ref[...],
                 preferred_element_type=jnp.float32) + fc2_b_ref[...]
    o2 = jnp.tanh(_layernorm(o2, ln2_g_ref[...], ln2_b_ref[...]))
    out_ref[...] = o2.astype(out_ref.dtype)


# ------------------------------ parameters ----------------------------------

def init_params(key, embed_size, hidden_size, output_size):
    """Deterministic parameter init (uniform +-1/sqrt(fan), like PyTorch)."""
    H, E, O = hidden_size, embed_size, output_size
    ks = list(jax.random.split(key, 16))
    kH = 1.0 / np.sqrt(H)

    def u(k, shape, bound):
        return jax.random.uniform(k, shape, jnp.float32, -bound, bound)

    params = dict(
        # GRU layer 0 (stored transposed: (in, 3H))
        wih0=u(ks[0], (E, 3 * H), kH), whh0=u(ks[1], (H, 3 * H), kH),
        bih0=u(ks[2], (1, 3 * H), kH), bhh0=u(ks[3], (1, 3 * H), kH),
        # GRU layer 1
        wih1=u(ks[4], (H, 3 * H), kH), whh1=u(ks[5], (H, 3 * H), kH),
        bih1=u(ks[6], (1, 3 * H), kH), bhh1=u(ks[7], (1, 3 * H), kH),
        # LayerNorm on hidden
        ln_g=jnp.ones((1, H), jnp.float32), ln_b=jnp.zeros((1, H), jnp.float32),
        # fc1: output_size -> output_size // 2 (module requires output_size == hidden_size)
        fc1_w=u(ks[8], (O, O // 2), 1.0 / np.sqrt(O)),
        fc1_b=u(ks[9], (1, O // 2), 1.0 / np.sqrt(O)),
        ln1_g=jnp.ones((1, O // 2), jnp.float32), ln1_b=jnp.zeros((1, O // 2), jnp.float32),
        # fc2: output_size // 2 -> output_size // 4
        fc2_w=u(ks[10], (O // 2, O // 4), 1.0 / np.sqrt(O // 2)),
        fc2_b=u(ks[11], (1, O // 4), 1.0 / np.sqrt(O // 2)),
        ln2_g=jnp.ones((1, O // 4), jnp.float32), ln2_b=jnp.zeros((1, O // 4), jnp.float32),
    )
    return params


_PARAM_ORDER = ["wih0", "whh0", "bih0", "bhh0",
                "wih1", "whh1", "bih1", "bhh1",
                "ln_g", "ln_b",
                "fc1_w", "fc1_b", "ln1_g", "ln1_b",
                "fc2_w", "fc2_b", "ln2_g", "ln2_b"]


# ------------------- lane-aligned gate padding (wrapper side) ----------------

def _round_up(n, m):
    return ((n + m - 1) // m) * m


def _pad_gate_cols(w, H, HP):
    """(in, 3H) -> (in, 3HP): each of the r/z/n gate blocks zero-padded to HP lanes."""
    if HP == H:
        return w
    parts = [w[:, g * H:(g + 1) * H] for g in range(3)]
    return jnp.concatenate([jnp.pad(p, ((0, 0), (0, HP - H))) for p in parts], axis=1)


def _pad_rows(w, H, HP):
    if HP == H:
        return w
    return jnp.pad(w, ((0, HP - H), (0, 0)))


def _pad_gru_params(params, H, HP):
    p = dict(params)
    p["wih0"] = _pad_gate_cols(params["wih0"], H, HP)                    # (E, 3HP)
    p["whh0"] = _pad_gate_cols(_pad_rows(params["whh0"], H, HP), H, HP)  # (HP, 3HP)
    p["bih0"] = _pad_gate_cols(params["bih0"], H, HP)
    p["bhh0"] = _pad_gate_cols(params["bhh0"], H, HP)
    p["wih1"] = _pad_gate_cols(_pad_rows(params["wih1"], H, HP), H, HP)
    p["whh1"] = _pad_gate_cols(_pad_rows(params["whh1"], H, HP), H, HP)
    p["bih1"] = _pad_gate_cols(params["bih1"], H, HP)
    p["bhh1"] = _pad_gate_cols(params["bhh1"], H, HP)
    return p


# ------------------------------ wrapper --------------------------------------

def question_column_encoder(x_btE, params):
    """x_btE: (B, T, E) float32 (PyTorch batch_first layout). Returns (B, O//4)."""
    B, T, E = x_btE.shape
    H = params["whh0"].shape[0]
    HP = _round_up(H, 128)
    O4 = params["fc2_w"].shape[1]

    # Time-major 2-D rows (row index = t*B + b); the reshape/transpose is a
    # cheap one-time XLA op, and keeps the kernel free of VMEM relayouts.
    x2d = jnp.transpose(x_btE, (1, 0, 2)).reshape(T * B, E)

    padded = _pad_gru_params(params, H, HP)
    args = [x2d] + [padded[name] for name in _PARAM_ORDER]

    # Explicit scoped-VMEM budget (defaults are 16/32 MiB, well under physical).
    total_bytes = sum(int(np.prod(a.shape)) * a.dtype.itemsize for a in args)
    total_bytes += B * O4 * 4
    vmem_limit = int(min(max(2 * total_bytes + (2 << 20), 32 * 1024 * 1024),
                         64 * 1024 * 1024))

    vmem = pl.BlockSpec(memory_space=pltpu.MemorySpace.VMEM)
    return pl.pallas_call(
        functools.partial(encoder_kernel, seq_len=T),
        out_shape=jax.ShapeDtypeStruct((B, O4), jnp.float32),
        in_specs=[vmem] * len(args),
        out_specs=vmem,
        compiler_params=pltpu.CompilerParams(vmem_limit_bytes=vmem_limit),
    )(*args)


# ------------------------------ reference ------------------------------------

def reference(x_btE, params):
    """Pure-JAX reference mirroring the PyTorch forward (unpadded params)."""
    B, T, E = x_btE.shape
    H = params["whh0"].shape[0]

    def cell(xt, h, wih, whh, bih, bhh):
        gi = xt @ wih + bih
        gh = h @ whh + bhh
        r = jax.nn.sigmoid(gi[:, :H] + gh[:, :H])
        z = jax.nn.sigmoid(gi[:, H:2 * H] + gh[:, H:2 * H])
        n = jnp.tanh(gi[:, 2 * H:] + r * gh[:, 2 * H:])
        return (1.0 - z) * n + z * h

    h0 = jnp.zeros((B, H), jnp.float32)
    h1 = jnp.zeros((B, H), jnp.float32)
    for t in range(T):
        xt = x_btE[:, t, :]
        h0 = cell(xt, h0, params["wih0"], params["whh0"], params["bih0"], params["bhh0"])
        h1 = cell(h0, h1, params["wih1"], params["whh1"], params["bih1"], params["bhh1"])

    hidden = jnp.tanh(_layernorm(h1, params["ln_g"], params["ln_b"]))
    o1 = jnp.tanh(_layernorm(hidden @ params["fc1_w"] + params["fc1_b"],
                             params["ln1_g"], params["ln1_b"]))
    o2 = jnp.tanh(_layernorm(o1 @ params["fc2_w"] + params["fc2_b"],
                             params["ln2_g"], params["ln2_b"]))
    return o2


if __name__ == "__main__":
    # Small shapes consistent with the module. NOTE: forward applies fc1
    # (in_features=output_size) to the hidden state (hidden_size), so the
    # module only works when output_size == hidden_size.
    B, T, E, H = 2, 8, 16, 32
    output_size = H

    key = jax.random.PRNGKey(0)
    kx, kp = jax.random.split(key)
    x = jax.random.normal(kx, (B, T, E), jnp.float32)
    params = init_params(kp, E, H, output_size)

    out = question_column_encoder(x, params)
    out = jax.block_until_ready(out)

    ref = reference(x, params)
    assert out.shape == (B, output_size // 4)
    np.testing.assert_allclose(np.asarray(out), np.asarray(ref), rtol=1e-4, atol=1e-4)
    print("KERNEL_OK")
</pallas_src>

<mosaic_0001>
module attributes {stable_mosaic.version = 11 : i64} {
  func.func @encoder_kernel(%arg0: memref<16x16xf32, #tpu.memory_space<vmem>>, %arg1: memref<16x384xf32, #tpu.memory_space<vmem>>, %arg2: memref<128x384xf32, #tpu.memory_space<vmem>>, %arg3: memref<1x384xf32, #tpu.memory_space<vmem>>, %arg4: memref<1x384xf32, #tpu.memory_space<vmem>>, %arg5: memref<128x384xf32, #tpu.memory_space<vmem>>, %arg6: memref<128x384xf32, #tpu.memory_space<vmem>>, %arg7: memref<1x384xf32, #tpu.memory_space<vmem>>, %arg8: memref<1x384xf32, #tpu.memory_space<vmem>>, %arg9: memref<1x32xf32, #tpu.memory_space<vmem>>, %arg10: memref<1x32xf32, #tpu.memory_space<vmem>>, %arg11: memref<32x16xf32, #tpu.memory_space<vmem>>, %arg12: memref<1x16xf32, #tpu.memory_space<vmem>>, %arg13: memref<1x16xf32, #tpu.memory_space<vmem>>, %arg14: memref<1x16xf32, #tpu.memory_space<vmem>>, %arg15: memref<16x8xf32, #tpu.memory_space<vmem>>, %arg16: memref<1x8xf32, #tpu.memory_space<vmem>>, %arg17: memref<1x8xf32, #tpu.memory_space<vmem>>, %arg18: memref<1x8xf32, #tpu.memory_space<vmem>>, %arg19: memref<2x8xf32, #tpu.memory_space<vmem>>) attributes {dimension_semantics = [], scalar_prefetch = 0 : i64, scratch_operands = 0 : i64, tpu.core_type = #tpu.core_type<tc>} {
    %c0 = arith.constant 0 : index
    %c0_0 = arith.constant 0 : index
    %0 = vector.load %arg0[%c0, %c0_0] : memref<16x16xf32, #tpu.memory_space<vmem>>, vector<16x16xf32>
    %c0_1 = arith.constant 0 : index
    %c0_2 = arith.constant 0 : index
    %1 = vector.load %arg1[%c0_1, %c0_2] : memref<16x384xf32, #tpu.memory_space<vmem>>, vector<16x384xf32>
    %cst = arith.constant dense<0.000000e+00> : vector<16x384xf32>
    %2 = tpu.matmul %0, %1, %cst {dimension_numbers = #tpu.dot_dimension_numbers<[1], [0], [0], [1], [0, 0, 1, 1], [], []>} : vector<16x16xf32>, vector<16x384xf32>, vector<16x384xf32> -> vector<16x384xf32>
    %c0_3 = arith.constant 0 : index
    %c0_4 = arith.constant 0 : index
    %3 = vector.load %arg3[%c0_3, %c0_4] : memref<1x384xf32, #tpu.memory_space<vmem>>, vector<1x384xf32>
    %4 = vector.broadcast %3 : vector<1x384xf32> to vector<16x384xf32>
    %5 = arith.addf %2, %4 : vector<16x384xf32>
    %6 = vector.extract_strided_slice %5 {offsets = [0, 0], sizes = [16, 128], strides = [1, 1]} : vector<16x384xf32> to vector<16x128xf32>
    %7 = vector.extract_strided_slice %5 {offsets = [0, 128], sizes = [16, 128], strides = [1, 1]} : vector<16x384xf32> to vector<16x128xf32>
    %8 = vector.extract_strided_slice %5 {offsets = [0, 256], sizes = [16, 128], strides = [1, 1]} : vector<16x384xf32> to vector<16x128xf32>
    %c0_5 = arith.constant 0 : index
    %c0_6 = arith.constant 0 : index
    %9 = vector.load %arg2[%c0_5, %c0_6] : memref<128x384xf32, #tpu.memory_space<vmem>>, vector<128x384xf32>
    %c0_7 = arith.constant 0 : index
    %c0_8 = arith.constant 0 : index
    %10 = vector.load %arg5[%c0_7, %c0_8] : memref<128x384xf32, #tpu.memory_space<vmem>>, vector<128x384xf32>
    %c0_9 = arith.constant 0 : index
    %c0_10 = arith.constant 0 : index
    %11 = vector.load %arg6[%c0_9, %c0_10] : memref<128x384xf32, #tpu.memory_space<vmem>>, vector<128x384xf32>
    %c0_11 = arith.constant 0 : index
    %c0_12 = arith.constant 0 : index
    %12 = vector.load %arg4[%c0_11, %c0_12] : memref<1x384xf32, #tpu.memory_space<vmem>>, vector<1x384xf32>
    %13 = vector.shape_cast %12 : vector<1x384xf32> to vector<1x384xf32>
    %14 = vector.broadcast %13 : vector<1x384xf32> to vector<2x384xf32>
    %c0_13 = arith.constant 0 : index
    %c0_14 = arith.constant 0 : index
    %15 = vector.load %arg7[%c0_13, %c0_14] : memref<1x384xf32, #tpu.memory_space<vmem>>, vector<1x384xf32>
    %16 = vector.shape_cast %15 : vector<1x384xf32> to vector<1x384xf32>
    %17 = vector.broadcast %16 : vector<1x384xf32> to vector<2x384xf32>
    %c0_15 = arith.constant 0 : index
    %c0_16 = arith.constant 0 : index
    %18 = vector.load %arg8[%c0_15, %c0_16] : memref<1x384xf32, #tpu.memory_space<vmem>>, vector<1x384xf32>
    %19 = vector.shape_cast %18 : vector<1x384xf32> to vector<1x384xf32>
    %20 = vector.broadcast %19 : vector<1x384xf32> to vector<2x384xf32>
    %cst_17 = arith.constant 0.000000e+00 : f32
    %21 = vector.broadcast %cst_17 : f32 to vector<2x128xf32>
    %cst_18 = arith.constant 0.000000e+00 : f32
    %22 = vector.broadcast %cst_18 : f32 to vector<2x128xf32>
    %23 = vector.extract_strided_slice %6 {offsets = [0, 0], sizes = [2, 128], strides = [1, 1]} : vector<16x128xf32> to vector<2x128xf32>
    %24 = vector.extract_strided_slice %7 {offsets = [0, 0], sizes = [2, 128], strides = [1, 1]} : vector<16x128xf32> to vector<2x128xf32>
    %25 = vector.extract_strided_slice %8 {offsets = [0, 0], sizes = [2, 128], strides = [1, 1]} : vector<16x128xf32> to vector<2x128xf32>
    %cst_19 = arith.constant dense<0.000000e+00> : vector<2x384xf32>
    %26 = tpu.matmul %21, %9, %cst_19 {dimension_numbers = #tpu.dot_dimension_numbers<[1], [0], [0], [1], [0, 0, 1, 1], [], []>} : vector<2x128xf32>, vector<128x384xf32>, vector<2x384xf32> -> vector<2x384xf32>
    %27 = arith.addf %26, %14 : vector<2x384xf32>
    %28 = vector.extract_strided_slice %27 {offsets = [0, 0], sizes = [2, 128], strides = [1, 1]} : vector<2x384xf32> to vector<2x128xf32>
    %29 = arith.addf %23, %28 : vector<2x128xf32>
    %30 = arith.negf %29 : vector<2x128xf32>
    %31 = math.exp %30 : vector<2x128xf32>
    %cst_20 = arith.constant 1.000000e+00 : f32
    %32 = vector.broadcast %cst_20 : f32 to vector<2x128xf32>
    %33 = arith.addf %32, %31 : vector<2x128xf32>
    %34 = arith.divf %32, %33 : vector<2x128xf32>
    %35 = vector.extract_strided_slice %27 {offsets = [0, 128], sizes = [2, 128], strides = [1, 1]} : vector<2x384xf32> to vector<2x128xf32>
    %36 = arith.addf %24, %35 : vector<2x128xf32>
    %37 = arith.negf %36 : vector<2x128xf32>
    %38 = math.exp %37 : vector<2x128xf32>
    %cst_21 = arith.constant 1.000000e+00 : f32
    %39 = vector.broadcast %cst_21 : f32 to vector<2x128xf32>
    %40 = arith.addf %39, %38 : vector<2x128xf32>
    %41 = arith.divf %39, %40 : vector<2x128xf32>
    %42 = vector.extract_strided_slice %27 {offsets = [0, 256], sizes = [2, 128], strides = [1, 1]} : vector<2x384xf32> to vector<2x128xf32>
    %43 = arith.mulf %34, %42 : vector<2x128xf32>
    %44 = arith.addf %25, %43 : vector<2x128xf32>
    %45 = math.tanh %44 : vector<2x128xf32>
    %cst_22 = arith.constant 1.000000e+00 : f32
    %46 = vector.broadcast %cst_22 : f32 to vector<2x128xf32>
    %47 = arith.subf %46, %41 : vector<2x128xf32>
    %48 = arith.mulf %47, %45 : vector<2x128xf32>
    %49 = arith.mulf %41, %21 : vector<2x128xf32>
    %50 = arith.addf %48, %49 : vector<2x128xf32>
    %cst_23 = arith.constant dense<0.000000e+00> : vector<2x384xf32>
    %51 = tpu.matmul %50, %10, %cst_23 {dimension_numbers = #tpu.dot_dimension_numbers<[1], [0], [0], [1], [0, 0, 1, 1], [], []>} : vector<2x128xf32>, vector<128x384xf32>, vector<2x384xf32> -> vector<2x384xf32>
    %52 = arith.addf %51, %17 : vector<2x384xf32>
    %53 = vector.extract_strided_slice %52 {offsets = [0, 0], sizes = [2, 128], strides = [1, 1]} : vector<2x384xf32> to vector<2x128xf32>
    %54 = vector.extract_strided_slice %52 {offsets = [0, 128], sizes = [2, 128], strides = [1, 1]} : vector<2x384xf32> to vector<2x128xf32>
    %55 = vector.extract_strided_slice %52 {offsets = [0, 256], sizes = [2, 128], strides = [1, 1]} : vector<2x384xf32> to vector<2x128xf32>
    %cst_24 = arith.constant dense<0.000000e+00> : vector<2x384xf32>
    %56 = tpu.matmul %22, %11, %cst_24 {dimension_numbers = #tpu.dot_dimension_numbers<[1], [0], [0], [1], [0, 0, 1, 1], [], []>} : vector<2x128xf32>, vector<128x384xf32>, vector<2x384xf32> -> vector<2x384xf32>
    %57 = arith.addf %56, %20 : vector<2x384xf32>
    %58 = vector.extract_strided_slice %57 {offsets = [0, 0], sizes = [2, 128], strides = [1, 1]} : vector<2x384xf32> to vector<2x128xf32>
    %59 = arith.addf %53, %58 : vector<2x128xf32>
    %60 = arith.negf %59 : vector<2x128xf32>
    %61 = math.exp %60 : vector<2x128xf32>
    %cst_25 = arith.constant 1.000000e+00 : f32
    %62 = vector.broadcast %cst_25 : f32 to vector<2x128xf32>
    %63 = arith.addf %62, %61 : vector<2x128xf32>
    %64 = arith.divf %62, %63 : vector<2x128xf32>
    %65 = vector.extract_strided_slice %57 {offsets = [0, 128], sizes = [2, 128], strides = [1, 1]} : vector<2x384xf32> to vector<2x128xf32>
    %66 = arith.addf %54, %65 : vector<2x128xf32>
    %67 = arith.negf %66 : vector<2x128xf32>
    %68 = math.exp %67 : vector<2x128xf32>
    %cst_26 = arith.constant 1.000000e+00 : f32
    %69 = vector.broadcast %cst_26 : f32 to vector<2x128xf32>
    %70 = arith.addf %69, %68 : vector<2x128xf32>
    %71 = arith.divf %69, %70 : vector<2x128xf32>
    %72 = vector.extract_strided_slice %57 {offsets = [0, 256], sizes = [2, 128], strides = [1, 1]} : vector<2x384xf32> to vector<2x128xf32>
    %73 = arith.mulf %64, %72 : vector<2x128xf32>
    %74 = arith.addf %55, %73 : vector<2x128xf32>
    %75 = math.tanh %74 : vector<2x128xf32>
    %cst_27 = arith.constant 1.000000e+00 : f32
    %76 = vector.broadcast %cst_27 : f32 to vector<2x128xf32>
    %77 = arith.subf %76, %71 : vector<2x128xf32>
    %78 = arith.mulf %77, %75 : vector<2x128xf32>
    %79 = arith.mulf %71, %22 : vector<2x128xf32>
    %80 = arith.addf %78, %79 : vector<2x128xf32>
    %81 = vector.extract_strided_slice %6 {offsets = [2, 0], sizes = [2, 128], strides = [1, 1]} : vector<16x128xf32> to vector<2x128xf32>
    %82 = vector.extract_strided_slice %7 {offsets = [2, 0], sizes = [2, 128], strides = [1, 1]} : vector<16x128xf32> to vector<2x128xf32>
    %83 = vector.extract_strided_slice %8 {offsets = [2, 0], sizes = [2, 128], strides = [1, 1]} : vector<16x128xf32> to vector<2x128xf32>
    %cst_28 = arith.constant dense<0.000000e+00> : vector<2x384xf32>
    %84 = tpu.matmul %50, %9, %cst_28 {dimension_numbers = #tpu.dot_dimension_numbers<[1], [0], [0], [1], [0, 0, 1, 1], [], []>} : vector<2x128xf32>, vector<128x384xf32>, vector<2x384xf32> -> vector<2x384xf32>
    %85 = arith.addf %84, %14 : vector<2x384xf32>
    %86 = vector.extract_strided_slice %85 {offsets = [0, 0], sizes = [2, 128], strides = [1, 1]} : vector<2x384xf32> to vector<2x128xf32>
    %87 = arith.addf %81, %86 : vector<2x128xf32>
    %88 = arith.negf %87 : vector<2x128xf32>
    %89 = math.exp %88 : vector<2x128xf32>
    %cst_29 = arith.constant 1.000000e+00 : f32
    %90 = vector.broadcast %cst_29 : f32 to vector<2x128xf32>
    %91 = arith.addf %90, %89 : vector<2x128xf32>
    %92 = arith.divf %90, %91 : vector<2x128xf32>
    %93 = vector.extract_strided_slice %85 {offsets = [0, 128], sizes = [2, 128], strides = [1, 1]} : vector<2x384xf32> to vector<2x128xf32>
    %94 = arith.addf %82, %93 : vector<2x128xf32>
    %95 = arith.negf %94 : vector<2x128xf32>
    %96 = math.exp %95 : vector<2x128xf32>
    %cst_30 = arith.constant 1.000000e+00 : f32
    %97 = vector.broadcast %cst_30 : f32 to vector<2x128xf32>
    %98 = arith.addf %97, %96 : vector<2x128xf32>
    %99 = arith.divf %97, %98 : vector<2x128xf32>
    %100 = vector.extract_strided_slice %85 {offsets = [0, 256], sizes = [2, 128], strides = [1, 1]} : vector<2x384xf32> to vector<2x128xf32>
    %101 = arith.mulf %92, %100 : vector<2x128xf32>
    %102 = arith.addf %83, %101 : vector<2x128xf32>
    %103 = math.tanh %102 : vector<2x128xf32>
    %cst_31 = arith.constant 1.000000e+00 : f32
    %104 = vector.broadcast %cst_31 : f32 to vector<2x128xf32>
    %105 = arith.subf %104, %99 : vector<2x128xf32>
    %106 = arith.mulf %105, %103 : vector<2x128xf32>
    %107 = arith.mulf %99, %50 : vector<2x128xf32>
    %108 = arith.addf %106, %107 : vector<2x128xf32>
    %cst_32 = arith.constant dense<0.000000e+00> : vector<2x384xf32>
    %109 = tpu.matmul %108, %10, %cst_32 {dimension_numbers = #tpu.dot_dimension_numbers<[1], [0], [0], [1], [0, 0, 1, 1], [], []>} : vector<2x128xf32>, vector<128x384xf32>, vector<2x384xf32> -> vector<2x384xf32>
    %110 = arith.addf %109, %17 : vector<2x384xf32>
    %111 = vector.extract_strided_slice %110 {offsets = [0, 0], sizes = [2, 128], strides = [1, 1]} : vector<2x384xf32> to vector<2x128xf32>
    %112 = vector.extract_strided_slice %110 {offsets = [0, 128], sizes = [2, 128], strides = [1, 1]} : vector<2x384xf32> to vector<2x128xf32>
    %113 = vector.extract_strided_slice %110 {offsets = [0, 256], sizes = [2, 128], strides = [1, 1]} : vector<2x384xf32> to vector<2x128xf32>
    %cst_33 = arith.constant dense<0.000000e+00> : vector<2x384xf32>
    %114 = tpu.matmul %80, %11, %cst_33 {dimension_numbers = #tpu.dot_dimension_numbers<[1], [0], [0], [1], [0, 0, 1, 1], [], []>} : vector<2x128xf32>, vector<128x384xf32>, vector<2x384xf32> -> vector<2x384xf32>
    %115 = arith.addf %114, %20 : vector<2x384xf32>
    %116 = vector.extract_strided_slice %115 {offsets = [0, 0], sizes = [2, 128], strides = [1, 1]} : vector<2x384xf32> to vector<2x128xf32>
    %117 = arith.addf %111, %116 : vector<2x128xf32>
    %118 = arith.negf %117 : vector<2x128xf32>
    %119 = math.exp %118 : vector<2x128xf32>
    %cst_34 = arith.constant 1.000000e+00 : f32
    %120 = vector.broadcast %cst_34 : f32 to vector<2x128xf32>
    %121 = arith.addf %120, %119 : vector<2x128xf32>
    %122 = arith.divf %120, %121 : vector<2x128xf32>
    %123 = vector.extract_strided_slice %115 {offsets = [0, 128], sizes = [2, 128], strides = [1, 1]} : vector<2x384xf32> to vector<2x128xf32>
    %124 = arith.addf %112, %123 : vector<2x128xf32>
    %125 = arith.negf %124 : vector<2x128xf32>
    %126 = math.exp %125 : vector<2x128xf32>
    %cst_35 = arith.constant 1.000000e+00 : f32
    %127 = vector.broadcast %cst_35 : f32 to vector<2x128xf32>
    %128 = arith.addf %127, %126 : vector<2x128xf32>
    %129 = arith.divf %127, %128 : vector<2x128xf32>
    %130 = vector.extract_strided_slice %115 {offsets = [0, 256], sizes = [2, 128], strides = [1, 1]} : vector<2x384xf32> to vector<2x128xf32>
    %131 = arith.mulf %122, %130 : vector<2x128xf32>
    %132 = arith.addf %113, %131 : vector<2x128xf32>
    %133 = math.tanh %132 : vector<2x128xf32>
    %cst_36 = arith.constant 1.000000e+00 : f32
    %134 = vector.broadcast %cst_36 : f32 to vector<2x128xf32>
    %135 = arith.subf %134, %129 : vector<2x128xf32>
    %136 = arith.mulf %135, %133 : vector<2x128xf32>
    %137 = arith.mulf %129, %80 : vector<2x128xf32>
    %138 = arith.addf %136, %137 : vector<2x128xf32>
    %139 = vector.extract_strided_slice %6 {offsets = [4, 0], sizes = [2, 128], strides = [1, 1]} : vector<16x128xf32> to vector<2x128xf32>
    %140 = vector.extract_strided_slice %7 {offsets = [4, 0], sizes = [2, 128], strides = [1, 1]} : vector<16x128xf32> to vector<2x128xf32>
    %141 = vector.extract_strided_slice %8 {offsets = [4, 0], sizes = [2, 128], strides = [1, 1]} : vector<16x128xf32> to vector<2x128xf32>
    %cst_37 = arith.constant dense<0.000000e+00> : vector<2x384xf32>
    %142 = tpu.matmul %108, %9, %cst_37 {dimension_numbers = #tpu.dot_dimension_numbers<[1], [0], [0], [1], [0, 0, 1, 1], [], []>} : vector<2x128xf32>, vector<128x384xf32>, vector<2x384xf32> -> vector<2x384xf32>
    %143 = arith.addf %142, %14 : vector<2x384xf32>
    %144 = vector.extract_strided_slice %143 {offsets = [0, 0], sizes = [2, 128], strides = [1, 1]} : vector<2x384xf32> to vector<2x128xf32>
    %145 = arith.addf %139, %144 : vector<2x128xf32>
    %146 = arith.negf %145 : vector<2x128xf32>
    %147 = math.exp %146 : vector<2x128xf32>
    %cst_38 = arith.constant 1.000000e+00 : f32
    %148 = vector.broadcast %cst_38 : f32 to vector<2x128xf32>
    %149 = arith.addf %148, %147 : vector<2x128xf32>
    %150 = arith.divf %148, %149 : vector<2x128xf32>
    %151 = vector.extract_strided_slice %143 {offsets = [0, 128], sizes = [2, 128], strides = [1, 1]} : vector<2x384xf32> to vector<2x128xf32>
    %152 = arith.addf %140, %151 : vector<2x128xf32>
    %153 = arith.negf %152 : vector<2x128xf32>
    %154 = math.exp %153 : vector<2x128xf32>
    %cst_39 = arith.constant 1.000000e+00 : f32
    %155 = vector.broadcast %cst_39 : f32 to vector<2x128xf32>
    %156 = arith.addf %155, %154 : vector<2x128xf32>
    %157 = arith.divf %155, %156 : vector<2x128xf32>
    %158 = vector.extract_strided_slice %143 {offsets = [0, 256], sizes = [2, 128], strides = [1, 1]} : vector<2x384xf32> to vector<2x128xf32>
    %159 = arith.mulf %150, %158 : vector<2x128xf32>
    %160 = arith.addf %141, %159 : vector<2x128xf32>
    %161 = math.tanh %160 : vector<2x128xf32>
    %cst_40 = arith.constant 1.000000e+00 : f32
    %162 = vector.broadcast %cst_40 : f32 to vector<2x128xf32>
    %163 = arith.subf %162, %157 : vector<2x128xf32>
    %164 = arith.mulf %163, %161 : vector<2x128xf32>
    %165 = arith.mulf %157, %108 : vector<2x128xf32>
    %166 = arith.addf %164, %165 : vector<2x128xf32>
    %cst_41 = arith.constant dense<0.000000e+00> : vector<2x384xf32>
    %167 = tpu.matmul %166, %10, %cst_41 {dimension_numbers = #tpu.dot_dimension_numbers<[1], [0], [0], [1], [0, 0, 1, 1], [], []>} : vector<2x128xf32>, vector<128x384xf32>, vector<2x384xf32> -> vector<2x384xf32>
    %168 = arith.addf %167, %17 : vector<2x384xf32>
    %169 = vector.extract_strided_slice %168 {offsets = [0, 0], sizes = [2, 128], strides = [1, 1]} : vector<2x384xf32> to vector<2x128xf32>
    %170 = vector.extract_strided_slice %168 {offsets = [0, 128], sizes = [2, 128], strides = [1, 1]} : vector<2x384xf32> to vector<2x128xf32>
    %171 = vector.extract_strided_slice %168 {offsets = [0, 256], sizes = [2, 128], strides = [1, 1]} : vector<2x384xf32> to vector<2x128xf32>
    %cst_42 = arith.constant dense<0.000000e+00> : vector<2x384xf32>
    %172 = tpu.matmul %138, %11, %cst_42 {dimension_numbers = #tpu.dot_dimension_numbers<[1], [0], [0], [1], [0, 0, 1, 1], [], []>} : vector<2x128xf32>, vector<128x384xf32>, vector<2x384xf32> -> vector<2x384xf32>
    %173 = arith.addf %172, %20 : vector<2x384xf32>
    %174 = vector.extract_strided_slice %173 {offsets = [0, 0], sizes = [2, 128], strides = [1, 1]} : vector<2x384xf32> to vector<2x128xf32>
    %175 = arith.addf %169, %174 : vector<2x128xf32>
    %176 = arith.negf %175 : vector<2x128xf32>
    %177 = math.exp %176 : vector<2x128xf32>
    %cst_43 = arith.constant 1.000000e+00 : f32
    %178 = vector.broadcast %cst_43 : f32 to vector<2x128xf32>
    %179 = arith.addf %178, %177 : vector<2x128xf32>
    %180 = arith.divf %178, %179 : vector<2x128xf32>
    %181 = vector.extract_strided_slice %173 {offsets = [0, 128], sizes = [2, 128], strides = [1, 1]} : vector<2x384xf32> to vector<2x128xf32>
    %182 = arith.addf %170, %181 : vector<2x128xf32>
    %183 = arith.negf %182 : vector<2x128xf32>
    %184 = math.exp %183 : vector<2x128xf32>
    %cst_44 = arith.constant 1.000000e+00 : f32
    %185 = vector.broadcast %cst_44 : f32 to vector<2x128xf32>
    %186 = arith.addf %185, %184 : vector<2x128xf32>
    %187 = arith.divf %185, %186 : vector<2x128xf32>
    %188 = vector.extract_strided_slice %173 {offsets = [0, 256], sizes = [2, 128], strides = [1, 1]} : vector<2x384xf32> to vector<2x128xf32>
    %189 = arith.mulf %180, %188 : vector<2x128xf32>
    %190 = arith.addf %171, %189 : vector<2x128xf32>
    %191 = math.tanh %190 : vector<2x128xf32>
    %cst_45 = arith.constant 1.000000e+00 : f32
    %192 = vector.broadcast %cst_45 : f32 to vector<2x128xf32>
    %193 = arith.subf %192, %187 : vector<2x128xf32>
    %194 = arith.mulf %193, %191 : vector<2x128xf32>
    %195 = arith.mulf %187, %138 : vector<2x128xf32>
    %196 = arith.addf %194, %195 : vector<2x128xf32>
    %197 = vector.extract_strided_slice %6 {offsets = [6, 0], sizes = [2, 128], strides = [1, 1]} : vector<16x128xf32> to vector<2x128xf32>
    %198 = vector.extract_strided_slice %7 {offsets = [6, 0], sizes = [2, 128], strides = [1, 1]} : vector<16x128xf32> to vector<2x128xf32>
    %199 = vector.extract_strided_slice %8 {offsets = [6, 0], sizes = [2, 128], strides = [1, 1]} : vector<16x128xf32> to vector<2x128xf32>
    %cst_46 = arith.constant dense<0.000000e+00> : vector<2x384xf32>
    %200 = tpu.matmul %166, %9, %cst_46 {dimension_numbers = #tpu.dot_dimension_numbers<[1], [0], [0], [1], [0, 0, 1, 1], [], []>} : vector<2x128xf32>, vector<128x384xf32>, vector<2x384xf32> -> vector<2x384xf32>
    %201 = arith.addf %200, %14 : vector<2x384xf32>
    %202 = vector.extract_strided_slice %201 {offsets = [0, 0], sizes = [2, 128], strides = [1, 1]} : vector<2x384xf32> to vector<2x128xf32>
    %203 = arith.addf %197, %202 : vector<2x128xf32>
    %204 = arith.negf %203 : vector<2x128xf32>
    %205 = math.exp %204 : vector<2x128xf32>
    %cst_47 = arith.constant 1.000000e+00 : f32
    %206 = vector.broadcast %cst_47 : f32 to vector<2x128xf32>
    %207 = arith.addf %206, %205 : vector<2x128xf32>
    %208 = arith.divf %206, %207 : vector<2x128xf32>
    %209 = vector.extract_strided_slice %201 {offsets = [0, 128], sizes = [2, 128], strides = [1, 1]} : vector<2x384xf32> to vector<2x128xf32>
    %210 = arith.addf %198, %209 : vector<2x128xf32>
    %211 = arith.negf %210 : vector<2x128xf32>
    %212 = math.exp %211 : vector<2x128xf32>
    %cst_48 = arith.constant 1.000000e+00 : f32
    %213 = vector.broadcast %cst_48 : f32 to vector<2x128xf32>
    %214 = arith.addf %213, %212 : vector<2x128xf32>
    %215 = arith.divf %213, %214 : vector<2x128xf32>
    %216 = vector.extract_strided_slice %201 {offsets = [0, 256], sizes = [2, 128], strides = [1, 1]} : vector<2x384xf32> to vector<2x128xf32>
    %217 = arith.mulf %208, %216 : vector<2x128xf32>
    %218 = arith.addf %199, %217 : vector<2x128xf32>
    %219 = math.tanh %218 : vector<2x128xf32>
    %cst_49 = arith.constant 1.000000e+00 : f32
    %220 = vector.broadcast %cst_49 : f32 to vector<2x128xf32>
    %221 = arith.subf %220, %215 : vector<2x128xf32>
    %222 = arith.mulf %221, %219 : vector<2x128xf32>
    %223 = arith.mulf %215, %166 : vector<2x128xf32>
    %224 = arith.addf %222, %223 : vector<2x128xf32>
    %cst_50 = arith.constant dense<0.000000e+00> : vector<2x384xf32>
    %225 = tpu.matmul %224, %10, %cst_50 {dimension_numbers = #tpu.dot_dimension_numbers<[1], [0], [0], [1], [0, 0, 1, 1], [], []>} : vector<2x128xf32>, vector<128x384xf32>, vector<2x384xf32> -> vector<2x384xf32>
    %226 = arith.addf %225, %17 : vector<2x384xf32>
    %227 = vector.extract_strided_slice %226 {offsets = [0, 0], sizes = [2, 128], strides = [1, 1]} : vector<2x384xf32> to vector<2x128xf32>
    %228 = vector.extract_strided_slice %226 {offsets = [0, 128], sizes = [2, 128], strides = [1, 1]} : vector<2x384xf32> to vector<2x128xf32>
    %229 = vector.extract_strided_slice %226 {offsets = [0, 256], sizes = [2, 128], strides = [1, 1]} : vector<2x384xf32> to vector<2x128xf32>
    %cst_51 = arith.constant dense<0.000000e+00> : vector<2x384xf32>
    %230 = tpu.matmul %196, %11, %cst_51 {dimension_numbers = #tpu.dot_dimension_numbers<[1], [0], [0], [1], [0, 0, 1, 1], [], []>} : vector<2x128xf32>, vector<128x384xf32>, vector<2x384xf32> -> vector<2x384xf32>
    %231 = arith.addf %230, %20 : vector<2x384xf32>
    %232 = vector.extract_strided_slice %231 {offsets = [0, 0], sizes = [2, 128], strides = [1, 1]} : vector<2x384xf32> to vector<2x128xf32>
    %233 = arith.addf %227, %232 : vector<2x128xf32>
    %234 = arith.negf %233 : vector<2x128xf32>
    %235 = math.exp %234 : vector<2x128xf32>
    %cst_52 = arith.constant 1.000000e+00 : f32
    %236 = vector.broadcast %cst_52 : f32 to vector<2x128xf32>
    %237 = arith.addf %236, %235 : vector<2x128xf32>
    %238 = arith.divf %236, %237 : vector<2x128xf32>
    %239 = vector.extract_strided_slice %231 {offsets = [0, 128], sizes = [2, 128], strides = [1, 1]} : vector<2x384xf32> to vector<2x128xf32>
    %240 = arith.addf %228, %239 : vector<2x128xf32>
    %241 = arith.negf %240 : vector<2x128xf32>
    %242 = math.exp %241 : vector<2x128xf32>
    %cst_53 = arith.constant 1.000000e+00 : f32
    %243 = vector.broadcast %cst_53 : f32 to vector<2x128xf32>
    %244 = arith.addf %243, %242 : vector<2x128xf32>
    %245 = arith.divf %243, %244 : vector<2x128xf32>
    %246 = vector.extract_strided_slice %231 {offsets = [0, 256], sizes = [2, 128], strides = [1, 1]} : vector<2x384xf32> to vector<2x128xf32>
    %247 = arith.mulf %238, %246 : vector<2x128xf32>
    %248 = arith.addf %229, %247 : vector<2x128xf32>
    %249 = math.tanh %248 : vector<2x128xf32>
    %cst_54 = arith.constant 1.000000e+00 : f32
    %250 = vector.broadcast %cst_54 : f32 to vector<2x128xf32>
    %251 = arith.subf %250, %245 : vector<2x128xf32>
    %252 = arith.mulf %251, %249 : vector<2x128xf32>
    %253 = arith.mulf %245, %196 : vector<2x128xf32>
    %254 = arith.addf %252, %253 : vector<2x128xf32>
    %255 = vector.extract_strided_slice %6 {offsets = [8, 0], sizes = [2, 128], strides = [1, 1]} : vector<16x128xf32> to vector<2x128xf32>
    %256 = vector.extract_strided_slice %7 {offsets = [8, 0], sizes = [2, 128], strides = [1, 1]} : vector<16x128xf32> to vector<2x128xf32>
    %257 = vector.extract_strided_slice %8 {offsets = [8, 0], sizes = [2, 128], strides = [1, 1]} : vector<16x128xf32> to vector<2x128xf32>
    %cst_55 = arith.constant dense<0.000000e+00> : vector<2x384xf32>
    %258 = tpu.matmul %224, %9, %cst_55 {dimension_numbers = #tpu.dot_dimension_numbers<[1], [0], [0], [1], [0, 0, 1, 1], [], []>} : vector<2x128xf32>, vector<128x384xf32>, vector<2x384xf32> -> vector<2x384xf32>
    %259 = arith.addf %258, %14 : vector<2x384xf32>
    %260 = vector.extract_strided_slice %259 {offsets = [0, 0], sizes = [2, 128], strides = [1, 1]} : vector<2x384xf32> to vector<2x128xf32>
    %261 = arith.addf %255, %260 : vector<2x128xf32>
    %262 = arith.negf %261 : vector<2x128xf32>
    %263 = math.exp %262 : vector<2x128xf32>
    %cst_56 = arith.constant 1.000000e+00 : f32
    %264 = vector.broadcast %cst_56 : f32 to vector<2x128xf32>
    %265 = arith.addf %264, %263 : vector<2x128xf32>
    %266 = arith.divf %264, %265 : vector<2x128xf32>
    %267 = vector.extract_strided_slice %259 {offsets = [0, 128], sizes = [2, 128], strides = [1, 1]} : vector<2x384xf32> to vector<2x128xf32>
    %268 = arith.addf %256, %267 : vector<2x128xf32>
    %269 = arith.negf %268 : vector<2x128xf32>
    %270 = math.exp %269 : vector<2x128xf32>
    %cst_57 = arith.constant 1.000000e+00 : f32
    %271 = vector.broadcast %cst_57 : f32 to vector<2x128xf32>
    %272 = arith.addf %271, %270 : vector<2x128xf32>
    %273 = arith.divf %271, %272 : vector<2x128xf32>
    %274 = vector.extract_strided_slice %259 {offsets = [0, 256], sizes = [2, 128], strides = [1, 1]} : vector<2x384xf32> to vector<2x128xf32>
    %275 = arith.mulf %266, %274 : vector<2x128xf32>
    %276 = arith.addf %257, %275 : vector<2x128xf32>
    %277 = math.tanh %276 : vector<2x128xf32>
    %cst_58 = arith.constant 1.000000e+00 : f32
    %278 = vector.broadcast %cst_58 : f32 to vector<2x128xf32>
    %279 = arith.subf %278, %273 : vector<2x128xf32>
    %280 = arith.mulf %279, %277 : vector<2x128xf32>
    %281 = arith.mulf %273, %224 : vector<2x128xf32>
    %282 = arith.addf %280, %281 : vector<2x128xf32>
    %cst_59 = arith.constant dense<0.000000e+00> : vector<2x384xf32>
    %283 = tpu.matmul %282, %10, %cst_59 {dimension_numbers = #tpu.dot_dimension_numbers<[1], [0], [0], [1], [0, 0, 1, 1], [], []>} : vector<2x128xf32>, vector<128x384xf32>, vector<2x384xf32> -> vector<2x384xf32>
    %284 = arith.addf %283, %17 : vector<2x384xf32>
    %285 = vector.extract_strided_slice %284 {offsets = [0, 0], sizes = [2, 128], strides = [1, 1]} : vector<2x384xf32> to vector<2x128xf32>
    %286 = vector.extract_strided_slice %284 {offsets = [0, 128], sizes = [2, 128], strides = [1, 1]} : vector<2x384xf32> to vector<2x128xf32>
    %287 = vector.extract_strided_slice %284 {offsets = [0, 256], sizes = [2, 128], strides = [1, 1]} : vector<2x384xf32> to vector<2x128xf32>
    %cst_60 = arith.constant dense<0.000000e+00> : vector<2x384xf32>
    %288 = tpu.matmul %254, %11, %cst_60 {dimension_numbers = #tpu.dot_dimension_numbers<[1], [0], [0], [1], [0, 0, 1, 1], [], []>} : vector<2x128xf32>, vector<128x384xf32>, vector<2x384xf32> -> vector<2x384xf32>
    %289 = arith.addf %288, %20 : vector<2x384xf32>
    %290 = vector.extract_strided_slice %289 {offsets = [0, 0], sizes = [2, 128], strides = [1, 1]} : vector<2x384xf32> to vector<2x128xf32>
    %291 = arith.addf %285, %290 : vector<2x128xf32>
    %292 = arith.negf %291 : vector<2x128xf32>
    %293 = math.exp %292 : vector<2x128xf32>
    %cst_61 = arith.constant 1.000000e+00 : f32
    %294 = vector.broadcast %cst_61 : f32 to vector<2x128xf32>
    %295 = arith.addf %294, %293 : vector<2x128xf32>
    %296 = arith.divf %294, %295 : vector<2x128xf32>
    %297 = vector.extract_strided_slice %289 {offsets = [0, 128], sizes = [2, 128], strides = [1, 1]} : vector<2x384xf32> to vector<2x128xf32>
    %298 = arith.addf %286, %297 : vector<2x128xf32>
    %299 = arith.negf %298 : vector<2x128xf32>
    %300 = math.exp %299 : vector<2x128xf32>
    %cst_62 = arith.constant 1.000000e+00 : f32
    %301 = vector.broadcast %cst_62 : f32 to vector<2x128xf32>
    %302 = arith.addf %301, %300 : vector<2x128xf32>
    %303 = arith.divf %301, %302 : vector<2x128xf32>
    %304 = vector.extract_strided_slice %289 {offsets = [0, 256], sizes = [2, 128], strides = [1, 1]} : vector<2x384xf32> to vector<2x128xf32>
    %305 = arith.mulf %296, %304 : vector<2x128xf32>
    %306 = arith.addf %287, %305 : vector<2x128xf32>
    %307 = math.tanh %306 : vector<2x128xf32>
    %cst_63 = arith.constant 1.000000e+00 : f32
    %308 = vector.broadcast %cst_63 : f32 to vector<2x128xf32>
    %309 = arith.subf %308, %303 : vector<2x128xf32>
    %310 = arith.mulf %309, %307 : vector<2x128xf32>
    %311 = arith.mulf %303, %254 : vector<2x128xf32>
    %312 = arith.addf %310, %311 : vector<2x128xf32>
    %313 = vector.extract_strided_slice %6 {offsets = [10, 0], sizes = [2, 128], strides = [1, 1]} : vector<16x128xf32> to vector<2x128xf32>
    %314 = vector.extract_strided_slice %7 {offsets = [10, 0], sizes = [2, 128], strides = [1, 1]} : vector<16x128xf32> to vector<2x128xf32>
    %315 = vector.extract_strided_slice %8 {offsets = [10, 0], sizes = [2, 128], strides = [1, 1]} : vector<16x128xf32> to vector<2x128xf32>
    %cst_64 = arith.constant dense<0.000000e+00> : vector<2x384xf32>
    %316 = tpu.matmul %282, %9, %cst_64 {dimension_numbers = #tpu.dot_dimension_numbers<[1], [0], [0], [1], [0, 0, 1, 1], [], []>} : vector<2x128xf32>, vector<128x384xf32>, vector<2x384xf32> -> vector<2x384xf32>
    %317 = arith.addf %316, %14 : vector<2x384xf32>
    %318 = vector.extract_strided_slice %317 {offsets = [0, 0], sizes = [2, 128], strides = [1, 1]} : vector<2x384xf32> to vector<2x128xf32>
    %319 = arith.addf %313, %318 : vector<2x128xf32>
    %320 = arith.negf %319 : vector<2x128xf32>
    %321 = math.exp %320 : vector<2x128xf32>
    %cst_65 = arith.constant 1.000000e+00 : f32
    %322 = vector.broadcast %cst_65 : f32 to vector<2x128xf32>
    %323 = arith.addf %322, %321 : vector<2x128xf32>
    %324 = arith.divf %322, %323 : vector<2x128xf32>
    %325 = vector.extract_strided_slice %317 {offsets = [0, 128], sizes = [2, 128], strides = [1, 1]} : vector<2x384xf32> to vector<2x128xf32>
    %326 = arith.addf %314, %325 : vector<2x128xf32>
    %327 = arith.negf %326 : vector<2x128xf32>
    %328 = math.exp %327 : vector<2x128xf32>
    %cst_66 = arith.constant 1.000000e+00 : f32
    %329 = vector.broadcast %cst_66 : f32 to vector<2x128xf32>
    %330 = arith.addf %329, %328 : vector<2x128xf32>
    %331 = arith.divf %329, %330 : vector<2x128xf32>
    %332 = vector.extract_strided_slice %317 {offsets = [0, 256], sizes = [2, 128], strides = [1, 1]} : vector<2x384xf32> to vector<2x128xf32>
    %333 = arith.mulf %324, %332 : vector<2x128xf32>
    %334 = arith.addf %315, %333 : vector<2x128xf32>
    %335 = math.tanh %334 : vector<2x128xf32>
    %cst_67 = arith.constant 1.000000e+00 : f32
    %336 = vector.broadcast %cst_67 : f32 to vector<2x128xf32>
    %337 = arith.subf %336, %331 : vector<2x128xf32>
    %338 = arith.mulf %337, %335 : vector<2x128xf32>
    %339 = arith.mulf %331, %282 : vector<2x128xf32>
    %340 = arith.addf %338, %339 : vector<2x128xf32>
    %cst_68 = arith.constant dense<0.000000e+00> : vector<2x384xf32>
    %341 = tpu.matmul %340, %10, %cst_68 {dimension_numbers = #tpu.dot_dimension_numbers<[1], [0], [0], [1], [0, 0, 1, 1], [], []>} : vector<2x128xf32>, vector<128x384xf32>, vector<2x384xf32> -> vector<2x384xf32>
    %342 = arith.addf %341, %17 : vector<2x384xf32>
    %343 = vector.extract_strided_slice %342 {offsets = [0, 0], sizes = [2, 128], strides = [1, 1]} : vector<2x384xf32> to vector<2x128xf32>
    %344 = vector.extract_strided_slice %342 {offsets = [0, 128], sizes = [2, 128], strides = [1, 1]} : vector<2x384xf32> to vector<2x128xf32>
    %345 = vector.extract_strided_slice %342 {offsets = [0, 256], sizes = [2, 128], strides = [1, 1]} : vector<2x384xf32> to vector<2x128xf32>
    %cst_69 = arith.constant dense<0.000000e+00> : vector<2x384xf32>
    %346 = tpu.matmul %312, %11, %cst_69 {dimension_numbers = #tpu.dot_dimension_numbers<[1], [0], [0], [1], [0, 0, 1, 1], [], []>} : vector<2x128xf32>, vector<128x384xf32>, vector<2x384xf32> -> vector<2x384xf32>
    %347 = arith.addf %346, %20 : vector<2x384xf32>
    %348 = vector.extract_strided_slice %347 {offsets = [0, 0], sizes = [2, 128], strides = [1, 1]} : vector<2x384xf32> to vector<2x128xf32>
    %349 = arith.addf %343, %348 : vector<2x128xf32>
    %350 = arith.negf %349 : vector<2x128xf32>
    %351 = math.exp %350 : vector<2x128xf32>
    %cst_70 = arith.constant 1.000000e+00 : f32
    %352 = vector.broadcast %cst_70 : f32 to vector<2x128xf32>
    %353 = arith.addf %352, %351 : vector<2x128xf32>
    %354 = arith.divf %352, %353 : vector<2x128xf32>
    %355 = vector.extract_strided_slice %347 {offsets = [0, 128], sizes = [2, 128], strides = [1, 1]} : vector<2x384xf32> to vector<2x128xf32>
    %356 = arith.addf %344, %355 : vector<2x128xf32>
    %357 = arith.negf %356 : vector<2x128xf32>
    %358 = math.exp %357 : vector<2x128xf32>
    %cst_71 = arith.constant 1.000000e+00 : f32
    %359 = vector.broadcast %cst_71 : f32 to vector<2x128xf32>
    %360 = arith.addf %359, %358 : vector<2x128xf32>
    %361 = arith.divf %359, %360 : vector<2x128xf32>
    %362 = vector.extract_strided_slice %347 {offsets = [0, 256], sizes = [2, 128], strides = [1, 1]} : vector<2x384xf32> to vector<2x128xf32>
    %363 = arith.mulf %354, %362 : vector<2x128xf32>
    %364 = arith.addf %345, %363 : vector<2x128xf32>
    %365 = math.tanh %364 : vector<2x128xf32>
    %cst_72 = arith.constant 1.000000e+00 : f32
    %366 = vector.broadcast %cst_72 : f32 to vector<2x128xf32>
    %367 = arith.subf %366, %361 : vector<2x128xf32>
    %368 = arith.mulf %367, %365 : vector<2x128xf32>
    %369 = arith.mulf %361, %312 : vector<2x128xf32>
    %370 = arith.addf %368, %369 : vector<2x128xf32>
    %371 = vector.extract_strided_slice %6 {offsets = [12, 0], sizes = [2, 128], strides = [1, 1]} : vector<16x128xf32> to vector<2x128xf32>
    %372 = vector.extract_strided_slice %7 {offsets = [12, 0], sizes = [2, 128], strides = [1, 1]} : vector<16x128xf32> to vector<2x128xf32>
    %373 = vector.extract_strided_slice %8 {offsets = [12, 0], sizes = [2, 128], strides = [1, 1]} : vector<16x128xf32> to vector<2x128xf32>
    %cst_73 = arith.constant dense<0.000000e+00> : vector<2x384xf32>
    %374 = tpu.matmul %340, %9, %cst_73 {dimension_numbers = #tpu.dot_dimension_numbers<[1], [0], [0], [1], [0, 0, 1, 1], [], []>} : vector<2x128xf32>, vector<128x384xf32>, vector<2x384xf32> -> vector<2x384xf32>
    %375 = arith.addf %374, %14 : vector<2x384xf32>
    %376 = vector.extract_strided_slice %375 {offsets = [0, 0], sizes = [2, 128], strides = [1, 1]} : vector<2x384xf32> to vector<2x128xf32>
    %377 = arith.addf %371, %376 : vector<2x128xf32>
    %378 = arith.negf %377 : vector<2x128xf32>
    %379 = math.exp %378 : vector<2x128xf32>
    %cst_74 = arith.constant 1.000000e+00 : f32
    %380 = vector.broadcast %cst_74 : f32 to vector<2x128xf32>
    %381 = arith.addf %380, %379 : vector<2x128xf32>
    %382 = arith.divf %380, %381 : vector<2x128xf32>
    %383 = vector.extract_strided_slice %375 {offsets = [0, 128], sizes = [2, 128], strides = [1, 1]} : vector<2x384xf32> to vector<2x128xf32>
    %384 = arith.addf %372, %383 : vector<2x128xf32>
    %385 = arith.negf %384 : vector<2x128xf32>
    %386 = math.exp %385 : vector<2x128xf32>
    %cst_75 = arith.constant 1.000000e+00 : f32
    %387 = vector.broadcast %cst_75 : f32 to vector<2x128xf32>
    %388 = arith.addf %387, %386 : vector<2x128xf32>
    %389 = arith.divf %387, %388 : vector<2x128xf32>
    %390 = vector.extract_strided_slice %375 {offsets = [0, 256], sizes = [2, 128], strides = [1, 1]} : vector<2x384xf32> to vector<2x128xf32>
    %391 = arith.mulf %382, %390 : vector<2x128xf32>
    %392 = arith.addf %373, %391 : vector<2x128xf32>
    %393 = math.tanh %392 : vector<2x128xf32>
    %cst_76 = arith.constant 1.000000e+00 : f32
    %394 = vector.broadcast %cst_76 : f32 to vector<2x128xf32>
    %395 = arith.subf %394, %389 : vector<2x128xf32>
    %396 = arith.mulf %395, %393 : vector<2x128xf32>
    %397 = arith.mulf %389, %340 : vector<2x128xf32>
    %398 = arith.addf %396, %397 : vector<2x128xf32>
    %cst_77 = arith.constant dense<0.000000e+00> : vector<2x384xf32>
    %399 = tpu.matmul %398, %10, %cst_77 {dimension_numbers = #tpu.dot_dimension_numbers<[1], [0], [0], [1], [0, 0, 1, 1], [], []>} : vector<2x128xf32>, vector<128x384xf32>, vector<2x384xf32> -> vector<2x384xf32>
    %400 = arith.addf %399, %17 : vector<2x384xf32>
    %401 = vector.extract_strided_slice %400 {offsets = [0, 0], sizes = [2, 128], strides = [1, 1]} : vector<2x384xf32> to vector<2x128xf32>
    %402 = vector.extract_strided_slice %400 {offsets = [0, 128], sizes = [2, 128], strides = [1, 1]} : vector<2x384xf32> to vector<2x128xf32>
    %403 = vector.extract_strided_slice %400 {offsets = [0, 256], sizes = [2, 128], strides = [1, 1]} : vector<2x384xf32> to vector<2x128xf32>
    %cst_78 = arith.constant dense<0.000000e+00> : vector<2x384xf32>
    %404 = tpu.matmul %370, %11, %cst_78 {dimension_numbers = #tpu.dot_dimension_numbers<[1], [0], [0], [1], [0, 0, 1, 1], [], []>} : vector<2x128xf32>, vector<128x384xf32>, vector<2x384xf32> -> vector<2x384xf32>
    %405 = arith.addf %404, %20 : vector<2x384xf32>
    %406 = vector.extract_strided_slice %405 {offsets = [0, 0], sizes = [2, 128], strides = [1, 1]} : vector<2x384xf32> to vector<2x128xf32>
    %407 = arith.addf %401, %406 : vector<2x128xf32>
    %408 = arith.negf %407 : vector<2x128xf32>
    %409 = math.exp %408 : vector<2x128xf32>
    %cst_79 = arith.constant 1.000000e+00 : f32
    %410 = vector.broadcast %cst_79 : f32 to vector<2x128xf32>
    %411 = arith.addf %410, %409 : vector<2x128xf32>
    %412 = arith.divf %410, %411 : vector<2x128xf32>
    %413 = vector.extract_strided_slice %405 {offsets = [0, 128], sizes = [2, 128], strides = [1, 1]} : vector<2x384xf32> to vector<2x128xf32>
    %414 = arith.addf %402, %413 : vector<2x128xf32>
    %415 = arith.negf %414 : vector<2x128xf32>
    %416 = math.exp %415 : vector<2x128xf32>
    %cst_80 = arith.constant 1.000000e+00 : f32
    %417 = vector.broadcast %cst_80 : f32 to vector<2x128xf32>
    %418 = arith.addf %417, %416 : vector<2x128xf32>
    %419 = arith.divf %417, %418 : vector<2x128xf32>
    %420 = vector.extract_strided_slice %405 {offsets = [0, 256], sizes = [2, 128], strides = [1, 1]} : vector<2x384xf32> to vector<2x128xf32>
    %421 = arith.mulf %412, %420 : vector<2x128xf32>
    %422 = arith.addf %403, %421 : vector<2x128xf32>
    %423 = math.tanh %422 : vector<2x128xf32>
    %cst_81 = arith.constant 1.000000e+00 : f32
    %424 = vector.broadcast %cst_81 : f32 to vector<2x128xf32>
    %425 = arith.subf %424, %419 : vector<2x128xf32>
    %426 = arith.mulf %425, %423 : vector<2x128xf32>
    %427 = arith.mulf %419, %370 : vector<2x128xf32>
    %428 = arith.addf %426, %427 : vector<2x128xf32>
    %429 = vector.extract_strided_slice %6 {offsets = [14, 0], sizes = [2, 128], strides = [1, 1]} : vector<16x128xf32> to vector<2x128xf32>
    %430 = vector.extract_strided_slice %7 {offsets = [14, 0], sizes = [2, 128], strides = [1, 1]} : vector<16x128xf32> to vector<2x128xf32>
    %431 = vector.extract_strided_slice %8 {offsets = [14, 0], sizes = [2, 128], strides = [1, 1]} : vector<16x128xf32> to vector<2x128xf32>
    %cst_82 = arith.constant dense<0.000000e+00> : vector<2x384xf32>
    %432 = tpu.matmul %398, %9, %cst_82 {dimension_numbers = #tpu.dot_dimension_numbers<[1], [0], [0], [1], [0, 0, 1, 1], [], []>} : vector<2x128xf32>, vector<128x384xf32>, vector<2x384xf32> -> vector<2x384xf32>
    %433 = arith.addf %432, %14 : vector<2x384xf32>
    %434 = vector.extract_strided_slice %433 {offsets = [0, 0], sizes = [2, 128], strides = [1, 1]} : vector<2x384xf32> to vector<2x128xf32>
    %435 = arith.addf %429, %434 : vector<2x128xf32>
    %436 = arith.negf %435 : vector<2x128xf32>
    %437 = math.exp %436 : vector<2x128xf32>
    %cst_83 = arith.constant 1.000000e+00 : f32
    %438 = vector.broadcast %cst_83 : f32 to vector<2x128xf32>
    %439 = arith.addf %438, %437 : vector<2x128xf32>
    %440 = arith.divf %438, %439 : vector<2x128xf32>
    %441 = vector.extract_strided_slice %433 {offsets = [0, 128], sizes = [2, 128], strides = [1, 1]} : vector<2x384xf32> to vector<2x128xf32>
    %442 = arith.addf %430, %441 : vector<2x128xf32>
    %443 = arith.negf %442 : vector<2x128xf32>
    %444 = math.exp %443 : vector<2x128xf32>
    %cst_84 = arith.constant 1.000000e+00 : f32
    %445 = vector.broadcast %cst_84 : f32 to vector<2x128xf32>
    %446 = arith.addf %445, %444 : vector<2x128xf32>
    %447 = arith.divf %445, %446 : vector<2x128xf32>
    %448 = vector.extract_strided_slice %433 {offsets = [0, 256], sizes = [2, 128], strides = [1, 1]} : vector<2x384xf32> to vector<2x128xf32>
    %449 = arith.mulf %440, %448 : vector<2x128xf32>
    %450 = arith.addf %431, %449 : vector<2x128xf32>
    %451 = math.tanh %450 : vector<2x128xf32>
    %cst_85 = arith.constant 1.000000e+00 : f32
    %452 = vector.broadcast %cst_85 : f32 to vector<2x128xf32>
    %453 = arith.subf %452, %447 : vector<2x128xf32>
    %454 = arith.mulf %453, %451 : vector<2x128xf32>
    %455 = arith.mulf %447, %398 : vector<2x128xf32>
    %456 = arith.addf %454, %455 : vector<2x128xf32>
    %cst_86 = arith.constant dense<0.000000e+00> : vector<2x384xf32>
    %457 = tpu.matmul %456, %10, %cst_86 {dimension_numbers = #tpu.dot_dimension_numbers<[1], [0], [0], [1], [0, 0, 1, 1], [], []>} : vector<2x128xf32>, vector<128x384xf32>, vector<2x384xf32> -> vector<2x384xf32>
    %458 = arith.addf %457, %17 : vector<2x384xf32>
    %459 = vector.extract_strided_slice %458 {offsets = [0, 0], sizes = [2, 128], strides = [1, 1]} : vector<2x384xf32> to vector<2x128xf32>
    %460 = vector.extract_strided_slice %458 {offsets = [0, 128], sizes = [2, 128], strides = [1, 1]} : vector<2x384xf32> to vector<2x128xf32>
    %461 = vector.extract_strided_slice %458 {offsets = [0, 256], sizes = [2, 128], strides = [1, 1]} : vector<2x384xf32> to vector<2x128xf32>
    %cst_87 = arith.constant dense<0.000000e+00> : vector<2x384xf32>
    %462 = tpu.matmul %428, %11, %cst_87 {dimension_numbers = #tpu.dot_dimension_numbers<[1], [0], [0], [1], [0, 0, 1, 1], [], []>} : vector<2x128xf32>, vector<128x384xf32>, vector<2x384xf32> -> vector<2x384xf32>
    %463 = arith.addf %462, %20 : vector<2x384xf32>
    %464 = vector.extract_strided_slice %463 {offsets = [0, 0], sizes = [2, 128], strides = [1, 1]} : vector<2x384xf32> to vector<2x128xf32>
    %465 = arith.addf %459, %464 : vector<2x128xf32>
    %466 = arith.negf %465 : vector<2x128xf32>
    %467 = math.exp %466 : vector<2x128xf32>
    %cst_88 = arith.constant 1.000000e+00 : f32
    %468 = vector.broadcast %cst_88 : f32 to vector<2x128xf32>
    %469 = arith.addf %468, %467 : vector<2x128xf32>
    %470 = arith.divf %468, %469 : vector<2x128xf32>
    %471 = vector.extract_strided_slice %463 {offsets = [0, 128], sizes = [2, 128], strides = [1, 1]} : vector<2x384xf32> to vector<2x128xf32>
    %472 = arith.addf %460, %471 : vector<2x128xf32>
    %473 = arith.negf %472 : vector<2x128xf32>
    %474 = math.exp %473 : vector<2x128xf32>
    %cst_89 = arith.constant 1.000000e+00 : f32
    %475 = vector.broadcast %cst_89 : f32 to vector<2x128xf32>
    %476 = arith.addf %475, %474 : vector<2x128xf32>
    %477 = arith.divf %475, %476 : vector<2x128xf32>
    %478 = vector.extract_strided_slice %463 {offsets = [0, 256], sizes = [2, 128], strides = [1, 1]} : vector<2x384xf32> to vector<2x128xf32>
    %479 = arith.mulf %470, %478 : vector<2x128xf32>
    %480 = arith.addf %461, %479 : vector<2x128xf32>
    %481 = math.tanh %480 : vector<2x128xf32>
    %cst_90 = arith.constant 1.000000e+00 : f32
    %482 = vector.broadcast %cst_90 : f32 to vector<2x128xf32>
    %483 = arith.subf %482, %477 : vector<2x128xf32>
    %484 = arith.mulf %483, %481 : vector<2x128xf32>
    %485 = arith.mulf %477, %428 : vector<2x128xf32>
    %486 = arith.addf %484, %485 : vector<2x128xf32>
    %487 = vector.extract_strided_slice %486 {offsets = [0, 0], sizes = [2, 32], strides = [1, 1]} : vector<2x128xf32> to vector<2x32xf32>
    %c0_91 = arith.constant 0 : index
    %c0_92 = arith.constant 0 : index
    %488 = vector.load %arg9[%c0_91, %c0_92] : memref<1x32xf32, #tpu.memory_space<vmem>>, vector<1x32xf32>
    %c0_93 = arith.constant 0 : index
    %c0_94 = arith.constant 0 : index
    %489 = vector.load %arg10[%c0_93, %c0_94] : memref<1x32xf32, #tpu.memory_space<vmem>>, vector<1x32xf32>
    %cst_95 = arith.constant dense<0.000000e+00> : vector<2xf32>
    %490 = vector.multi_reduction <add>, %487, %cst_95 [1] : vector<2x32xf32> to vector<2xf32>
    %491 = vector.shape_cast %490 : vector<2xf32> to vector<2x1xf32>
    %cst_96 = arith.constant 3.200000e+01 : f32
    %492 = vector.broadcast %cst_96 : f32 to vector<2x1xf32>
    %493 = arith.divf %491, %492 : vector<2x1xf32>
    %494 = vector.broadcast %493 : vector<2x1xf32> to vector<2x32xf32>
    %495 = arith.subf %487, %494 : vector<2x32xf32>
    %496 = arith.mulf %495, %495 : vector<2x32xf32>
    %cst_97 = arith.constant dense<0.000000e+00> : vector<2xf32>
    %497 = vector.multi_reduction <add>, %496, %cst_97 [1] : vector<2x32xf32> to vector<2xf32>
    %498 = vector.shape_cast %497 : vector<2xf32> to vector<2x1xf32>
    %cst_98 = arith.constant 3.200000e+01 : f32
    %499 = vector.broadcast %cst_98 : f32 to vector<2x1xf32>
    %500 = arith.divf %498, %499 : vector<2x1xf32>
    %501 = vector.broadcast %493 : vector<2x1xf32> to vector<2x32xf32>
    %502 = arith.subf %487, %501 : vector<2x32xf32>
    %cst_99 = arith.constant 9.99999974E-6 : f32
    %503 = vector.broadcast %cst_99 : f32 to vector<2x1xf32>
    %504 = arith.addf %500, %503 : vector<2x1xf32>
    %505 = math.rsqrt %504 : vector<2x1xf32>
    %506 = vector.broadcast %505 : vector<2x1xf32> to vector<2x32xf32>
    %507 = arith.mulf %502, %506 : vector<2x32xf32>
    %508 = vector.broadcast %488 : vector<1x32xf32> to vector<2x32xf32>
    %509 = arith.mulf %507, %508 : vector<2x32xf32>
    %510 = vector.broadcast %489 : vector<1x32xf32> to vector<2x32xf32>
    %511 = arith.addf %509, %510 : vector<2x32xf32>
    %512 = math.tanh %511 : vector<2x32xf32>
    %c0_100 = arith.constant 0 : index
    %c0_101 = arith.constant 0 : index
    %513 = vector.load %arg11[%c0_100, %c0_101] : memref<32x16xf32, #tpu.memory_space<vmem>>, vector<32x16xf32>
    %cst_102 = arith.constant dense<0.000000e+00> : vector<2x16xf32>
    %514 = tpu.matmul %512, %513, %cst_102 {dimension_numbers = #tpu.dot_dimension_numbers<[1], [0], [0], [1], [0, 0, 1, 1], [], []>} : vector<2x32xf32>, vector<32x16xf32>, vector<2x16xf32> -> vector<2x16xf32>
    %c0_103 = arith.constant 0 : index
    %c0_104 = arith.constant 0 : index
    %515 = vector.load %arg12[%c0_103, %c0_104] : memref<1x16xf32, #tpu.memory_space<vmem>>, vector<1x16xf32>
    %516 = vector.broadcast %515 : vector<1x16xf32> to vector<2x16xf32>
    %517 = arith.addf %514, %516 : vector<2x16xf32>
    %c0_105 = arith.constant 0 : index
    %c0_106 = arith.constant 0 : index
    %518 = vector.load %arg13[%c0_105, %c0_106] : memref<1x16xf32, #tpu.memory_space<vmem>>, vector<1x16xf32>
    %c0_107 = arith.constant 0 : index
    %c0_108 = arith.constant 0 : index
    %519 = vector.load %arg14[%c0_107, %c0_108] : memref<1x16xf32, #tpu.memory_space<vmem>>, vector<1x16xf32>
    %cst_109 = arith.constant dense<0.000000e+00> : vector<2xf32>
    %520 = vector.multi_reduction <add>, %517, %cst_109 [1] : vector<2x16xf32> to vector<2xf32>
    %521 = vector.shape_cast %520 : vector<2xf32> to vector<2x1xf32>
    %cst_110 = arith.constant 1.600000e+01 : f32
    %522 = vector.broadcast %cst_110 : f32 to vector<2x1xf32>
    %523 = arith.divf %521, %522 : vector<2x1xf32>
    %524 = vector.broadcast %523 : vector<2x1xf32> to vector<2x16xf32>
    %525 = arith.subf %517, %524 : vector<2x16xf32>
    %526 = arith.mulf %525, %525 : vector<2x16xf32>
    %cst_111 = arith.constant dense<0.000000e+00> : vector<2xf32>
    %527 = vector.multi_reduction <add>, %526, %cst_111 [1] : vector<2x16xf32> to vector<2xf32>
    %528 = vector.shape_cast %527 : vector<2xf32> to vector<2x1xf32>
    %cst_112 = arith.constant 1.600000e+01 : f32
    %529 = vector.broadcast %cst_112 : f32 to vector<2x1xf32>
    %530 = arith.divf %528, %529 : vector<2x1xf32>
    %531 = vector.broadcast %523 : vector<2x1xf32> to vector<2x16xf32>
    %532 = arith.subf %517, %531 : vector<2x16xf32>
    %cst_113 = arith.constant 9.99999974E-6 : f32
    %533 = vector.broadcast %cst_113 : f32 to vector<2x1xf32>
    %534 = arith.addf %530, %533 : vector<2x1xf32>
    %535 = math.rsqrt %534 : vector<2x1xf32>
    %536 = vector.broadcast %535 : vector<2x1xf32> to vector<2x16xf32>
    %537 = arith.mulf %532, %536 : vector<2x16xf32>
    %538 = vector.broadcast %518 : vector<1x16xf32> to vector<2x16xf32>
    %539 = arith.mulf %537, %538 : vector<2x16xf32>
    %540 = vector.broadcast %519 : vector<1x16xf32> to vector<2x16xf32>
    %541 = arith.addf %539, %540 : vector<2x16xf32>
    %542 = math.tanh %541 : vector<2x16xf32>
    %c0_114 = arith.constant 0 : index
    %c0_115 = arith.constant 0 : index
    %543 = vector.load %arg15[%c0_114, %c0_115] : memref<16x8xf32, #tpu.memory_space<vmem>>, vector<16x8xf32>
    %cst_116 = arith.constant dense<0.000000e+00> : vector<2x8xf32>
    %544 = tpu.matmul %542, %543, %cst_116 {dimension_numbers = #tpu.dot_dimension_numbers<[1], [0], [0], [1], [0, 0, 1, 1], [], []>} : vector<2x16xf32>, vector<16x8xf32>, vector<2x8xf32> -> vector<2x8xf32>
    %c0_117 = arith.constant 0 : index
    %c0_118 = arith.constant 0 : index
    %545 = vector.load %arg16[%c0_117, %c0_118] : memref<1x8xf32, #tpu.memory_space<vmem>>, vector<1x8xf32>
    %546 = vector.broadcast %545 : vector<1x8xf32> to vector<2x8xf32>
    %547 = arith.addf %544, %546 : vector<2x8xf32>
    %c0_119 = arith.constant 0 : index
    %c0_120 = arith.constant 0 : index
    %548 = vector.load %arg17[%c0_119, %c0_120] : memref<1x8xf32, #tpu.memory_space<vmem>>, vector<1x8xf32>
    %c0_121 = arith.constant 0 : index
    %c0_122 = arith.constant 0 : index
    %549 = vector.load %arg18[%c0_121, %c0_122] : memref<1x8xf32, #tpu.memory_space<vmem>>, vector<1x8xf32>
    %cst_123 = arith.constant dense<0.000000e+00> : vector<2xf32>
    %550 = vector.multi_reduction <add>, %547, %cst_123 [1] : vector<2x8xf32> to vector<2xf32>
    %551 = vector.shape_cast %550 : vector<2xf32> to vector<2x1xf32>
    %cst_124 = arith.constant 8.000000e+00 : f32
    %552 = vector.broadcast %cst_124 : f32 to vector<2x1xf32>
    %553 = arith.divf %551, %552 : vector<2x1xf32>
    %554 = vector.broadcast %553 : vector<2x1xf32> to vector<2x8xf32>
    %555 = arith.subf %547, %554 : vector<2x8xf32>
    %556 = arith.mulf %555, %555 : vector<2x8xf32>
    %cst_125 = arith.constant dense<0.000000e+00> : vector<2xf32>
    %557 = vector.multi_reduction <add>, %556, %cst_125 [1] : vector<2x8xf32> to vector<2xf32>
    %558 = vector.shape_cast %557 : vector<2xf32> to vector<2x1xf32>
    %cst_126 = arith.constant 8.000000e+00 : f32
    %559 = vector.broadcast %cst_126 : f32 to vector<2x1xf32>
    %560 = arith.divf %558, %559 : vector<2x1xf32>
    %561 = vector.broadcast %553 : vector<2x1xf32> to vector<2x8xf32>
    %562 = arith.subf %547, %561 : vector<2x8xf32>
    %cst_127 = arith.constant 9.99999974E-6 : f32
    %563 = vector.broadcast %cst_127 : f32 to vector<2x1xf32>
    %564 = arith.addf %560, %563 : vector<2x1xf32>
    %565 = math.rsqrt %564 : vector<2x1xf32>
    %566 = vector.broadcast %565 : vector<2x1xf32> to vector<2x8xf32>
    %567 = arith.mulf %562, %566 : vector<2x8xf32>
    %568 = vector.broadcast %548 : vector<1x8xf32> to vector<2x8xf32>
    %569 = arith.mulf %567, %568 : vector<2x8xf32>
    %570 = vector.broadcast %549 : vector<1x8xf32> to vector<2x8xf32>
    %571 = arith.addf %569, %570 : vector<2x8xf32>
    %572 = math.tanh %571 : vector<2x8xf32>
    %c0_128 = arith.constant 0 : index
    %c0_129 = arith.constant 0 : index
    %573 = vector.load %arg19[%c0_128, %c0_129] : memref<2x8xf32, #tpu.memory_space<vmem>>, vector<2x8xf32>
    tpu.vector_store %arg19[%c0_128, %c0_129], %572 {strides = array<i32>} : memref<2x8xf32, #tpu.memory_space<vmem>>, vector<2x8xf32>,
    return
  }
}

</mosaic_0001>

<llo_original>
// kernel: tpu_custom_call.1
$region0: #{tpu_custom_call.1}
  #allocation0 [shape = 'u32[]', space=smem, size = 0x4, offset = 0x4, fixed_abs, tag = 'smem constant byte address 0x4 - core index']
  #allocation1 [shape = 'u32[144,128]{1,0:T(1,128)}', space=vmem, size = 0x12000, scoped, tag = 'internal scratch']
  %s0 = inlined_call_operand.vmem [shape: f32[16,16], index: 0, kind: input, shape index: {}]
  %s1 = inlined_call_operand.vmem [shape: f32[16,384], index: 1, kind: input, shape index: {}]
  %s2 = inlined_call_operand.hbm [shape: f32[128,384], index: 2, kind: input, shape index: {}]
  %s3 = inlined_call_operand.hbm [shape: f32[1,384], index: 3, kind: input, shape index: {}]
  %s4 = inlined_call_operand.hbm [shape: f32[1,384], index: 4, kind: input, shape index: {}]
  %s5 = inlined_call_operand.hbm [shape: f32[128,384], index: 5, kind: input, shape index: {}]
  %s6 = inlined_call_operand.hbm [shape: f32[128,384], index: 6, kind: input, shape index: {}]
  %s7 = inlined_call_operand.vmem [shape: f32[1,384], index: 7, kind: input, shape index: {}]
  %s8 = inlined_call_operand.vmem [shape: f32[1,384], index: 8, kind: input, shape index: {}]
  %s9 = inlined_call_operand.vmem [shape: f32[1,32], index: 9, kind: input, shape index: {}]
  %s10 = inlined_call_operand.vmem [shape: f32[1,32], index: 10, kind: input, shape index: {}]
  %s11 = inlined_call_operand.vmem [shape: f32[32,16], index: 11, kind: input, shape index: {}]
  %s12 = inlined_call_operand.vmem [shape: f32[1,16], index: 12, kind: input, shape index: {}]
  %s13 = inlined_call_operand.vmem [shape: f32[1,16], index: 13, kind: input, shape index: {}]
  %s14 = inlined_call_operand.vmem [shape: f32[1,16], index: 14, kind: input, shape index: {}]
  %s15 = inlined_call_operand.vmem [shape: f32[16,8], index: 15, kind: input, shape index: {}]
  %s16 = inlined_call_operand.vmem [shape: f32[1,8], index: 16, kind: input, shape index: {}]
  %s17 = inlined_call_operand.vmem [shape: f32[1,8], index: 17, kind: input, shape index: {}]
  %s18 = inlined_call_operand.vmem [shape: f32[1,8], index: 18, kind: input, shape index: {}]
  %s19 = inlined_call_operand.hbm [shape: f32[2,8], index: 19, kind: output, shape index: {}]
  %s20 = sld [smem:[#allocation0]]
  $region106: #{tpu_custom_call.1} parent=0
    _
  %s22 = ssub.s32 1, %s20
  %s23 = scalar_select 0, %s22, %s20
  $region1: #{tpu_custom_call.1} parent=0
    #allocation2 [shape = 'u8[196608]{0}', space=vmem, size = 0x30000, scoped, tag = 'input window, operand 2, single buffered']
    #allocation3 [shape = 's32[1]{0}', space=sflag, size = 0x4, scoped, tag = 'scoped memory for tpu_custom_call.1']
    #allocation4 [shape = 's32[1]{0}', space=sflag, size = 0x4, scoped, tag = 'scoped memory for tpu_custom_call.1']
    #allocation5 [shape = 'u8[1536]{0}', space=vmem, size = 0x800, scoped, tag = 'input window, operand 3, single buffered']
    #allocation6 [shape = 's32[1]{0}', space=sflag, size = 0x4, scoped, tag = 'scoped memory for tpu_custom_call.1']
    #allocation7 [shape = 'u8[1536]{0}', space=vmem, size = 0x800, scoped, tag = 'input window, operand 4, single buffered']
    #allocation8 [shape = 'u8[196608]{0}', space=vmem, size = 0x30000, scoped, tag = 'input window, operand 5, single buffered']
    #allocation9 [shape = 's32[1]{0}', space=sflag, size = 0x4, scoped, tag = 'scoped memory for tpu_custom_call.1']
    #allocation10 [shape = 'u8[196608]{0}', space=vmem, size = 0x30000, scoped, tag = 'input window, operand 6, single buffered']
    #allocation11 [shape = 'u8[1024]{0}', space=vmem, size = 0x400, scoped, tag = 'output window, operand 0, single buffered']
    %24 = vsyncpa [#allocation3], 0
    %25 = vsyncpa [#allocation6], 0
    %26 = vsyncpa [#allocation9], 0
    %27 = vsyncpa [#allocation4], 0
    // Predicated region
    $region2: #{tpu_custom_call.1} parent=1 // pred_check
      _
    $region3: #{tpu_custom_call.1} parent=1 // pred_check_branch
      %29 = sbr.rel (0) target = $region5
    $region4: #{tpu_custom_call.1} parent=1 // pred_region
      _
    $region5: #{tpu_custom_call.1} parent=1 // pred_fallthru
      _
    // Predicated region
    $region6: #{tpu_custom_call.1} parent=1 // pred_check
      _
    $region7: #{tpu_custom_call.1} parent=1 // pred_check_branch
      %31 = sbr.rel (0) target = $region9
    $region8: #{tpu_custom_call.1} parent=1 // pred_region
      _
    $region9: #{tpu_custom_call.1} parent=1 // pred_fallthru
      _
    // Predicated region
    $region10: #{tpu_custom_call.1} parent=1 // pred_check
      _
    $region11: #{tpu_custom_call.1} parent=1 // pred_check_branch
      %33 = sbr.rel (0) target = $region13
    $region12: #{tpu_custom_call.1} parent=1 // pred_region
      %s35 = ssub.s32 6144, 6144
      %36 = vsyncadd [#allocation3], %s35
      %s37 = sshll.u32 [#allocation2], 4
      %s38 = int_to_ptr.vmem [resolvable:$true] %s37
      %43 = dma.hbm_to_vmem [thread:$0]  %s2, 6144, %s38, [#allocation3], 384, 384, 24
    $region13: #{tpu_custom_call.1} parent=1 // pred_fallthru
      _
    // Predicated region
    $region14: #{tpu_custom_call.1} parent=1 // pred_check
      _
    $region15: #{tpu_custom_call.1} parent=1 // pred_check_branch
      %45 = sbr.rel (0) target = $region17
    $region16: #{tpu_custom_call.1} parent=1 // pred_region
      %s47 = ssub.s32 48, 48
      %48 = vsyncadd [#allocation6], %s47
      %s50 = sshll.u32 [#allocation5], 4
      %s51 = int_to_ptr.vmem [resolvable:$true] %s50
      %53 = dma.hbm_to_vmem [thread:$0]  %s3, 48, %s51, [#allocation6]
    $region17: #{tpu_custom_call.1} parent=1 // pred_fallthru
      _
    // Predicated region
    $region18: #{tpu_custom_call.1} parent=1 // pred_check
      _
    $region19: #{tpu_custom_call.1} parent=1 // pred_check_branch
      %55 = sbr.rel (0) target = $region21
    $region20: #{tpu_custom_call.1} parent=1 // pred_region
      %s57 = ssub.s32 48, 48
      %58 = vsyncadd [#allocation6], %s57
      %s60 = sshll.u32 [#allocation7], 4
      %s61 = int_to_ptr.vmem [resolvable:$true] %s60
      %63 = dma.hbm_to_vmem [thread:$0]  %s4, 48, %s61, [#allocation6]
    $region21: #{tpu_custom_call.1} parent=1 // pred_fallthru
      _
    // Predicated region
    $region22: #{tpu_custom_call.1} parent=1 // pred_check
      _
    $region23: #{tpu_custom_call.1} parent=1 // pred_check_branch
      %65 = sbr.rel (0) target = $region25
    $region24: #{tpu_custom_call.1} parent=1 // pred_region
      %s67 = ssub.s32 6144, 6144
      %68 = vsyncadd [#allocation9], %s67
      %s69 = sshll.u32 [#allocation8], 4
      %s70 = int_to_ptr.vmem [resolvable:$true] %s69
      %75 = dma.hbm_to_vmem [thread:$0]  %s5, 6144, %s70, [#allocation9], 384, 384, 24
    $region25: #{tpu_custom_call.1} parent=1 // pred_fallthru
      _
    // Predicated region
    $region26: #{tpu_custom_call.1} parent=1 // pred_check
      _
    $region27: #{tpu_custom_call.1} parent=1 // pred_check_branch
      %77 = sbr.rel (0) target = $region29
    $region28: #{tpu_custom_call.1} parent=1 // pred_region
      %s79 = ssub.s32 6144, 6144
      %80 = vsyncadd [#allocation9], %s79
      %s81 = sshll.u32 [#allocation10], 4
      %s82 = int_to_ptr.vmem [resolvable:$true] %s81
      %87 = dma.hbm_to_vmem [thread:$0]  %s6, 6144, %s82, [#allocation9], 384, 384, 24
    $region29: #{tpu_custom_call.1} parent=1 // pred_fallthru
      _
    // Predicated region
    $region30: #{tpu_custom_call.1} parent=1 // pred_check
      _
    $region31: #{tpu_custom_call.1} parent=1 // pred_check_branch
      %89 = sbr.rel (0) target = $region33
    $region32: #{tpu_custom_call.1} parent=1 // pred_region
      _
    $region33: #{tpu_custom_call.1} parent=1 // pred_fallthru
      _
    // Predicated region
    $region34: #{tpu_custom_call.1} parent=1 // pred_check
      _
    $region35: #{tpu_custom_call.1} parent=1 // pred_check_branch
      %91 = sbr.rel (0) target = $region37
    $region36: #{tpu_custom_call.1} parent=1 // pred_region
      _
    $region37: #{tpu_custom_call.1} parent=1 // pred_fallthru
      _
    // Predicated region
    $region38: #{tpu_custom_call.1} parent=1 // pred_check
      _
    $region39: #{tpu_custom_call.1} parent=1 // pred_check_branch
      %93 = sbr.rel (0) target = $region41
    $region40: #{tpu_custom_call.1} parent=1 // pred_region
      _
    $region41: #{tpu_custom_call.1} parent=1 // pred_fallthru
      _
    // Predicated region
    $region42: #{tpu_custom_call.1} parent=1 // pred_check
      _
    $region43: #{tpu_custom_call.1} parent=1 // pred_check_branch
      %95 = sbr.rel (0) target = $region45
    $region44: #{tpu_custom_call.1} parent=1 // pred_region
      _
    $region45: #{tpu_custom_call.1} parent=1 // pred_fallthru
      _
    // Predicated region
    $region46: #{tpu_custom_call.1} parent=1 // pred_check
      _
    $region47: #{tpu_custom_call.1} parent=1 // pred_check_branch
      %97 = sbr.rel (0) target = $region49
    $region48: #{tpu_custom_call.1} parent=1 // pred_region
      _
    $region49: #{tpu_custom_call.1} parent=1 // pred_fallthru
      _
    // Predicated region
    $region50: #{tpu_custom_call.1} parent=1 // pred_check
      _
    $region51: #{tpu_custom_call.1} parent=1 // pred_check_branch
      %99 = sbr.rel (0) target = $region53
    $region52: #{tpu_custom_call.1} parent=1 // pred_region
      _
    $region53: #{tpu_custom_call.1} parent=1 // pred_fallthru
      _
    // Predicated region
    $region54: #{tpu_custom_call.1} parent=1 // pred_check
      _
    $region55: #{tpu_custom_call.1} parent=1 // pred_check_branch
      %101 = sbr.rel (0) target = $region57
    $region56: #{tpu_custom_call.1} parent=1 // pred_region
      _
    $region57: #{tpu_custom_call.1} parent=1 // pred_fallthru
      _
    // Predicated region
    $region58: #{tpu_custom_call.1} parent=1 // pred_check
      _
    $region59: #{tpu_custom_call.1} parent=1 // pred_check_branch
      %103 = sbr.rel (0) target = $region61
    $region60: #{tpu_custom_call.1} parent=1 // pred_region
      _
    $region61: #{tpu_custom_call.1} parent=1 // pred_fallthru
      _
    // Predicated region
    $region62: #{tpu_custom_call.1} parent=1 // pred_check
      _
    $region63: #{tpu_custom_call.1} parent=1 // pred_check_branch
      %105 = sbr.rel (0) target = $region65
    $region64: #{tpu_custom_call.1} parent=1 // pred_region
      _
    $region65: #{tpu_custom_call.1} parent=1 // pred_fallthru
      _
    // Predicated region
    $region66: #{tpu_custom_call.1} parent=1 // pred_check
      _
    $region67: #{tpu_custom_call.1} parent=1 // pred_check_branch
      %107 = sbr.rel (0) target = $region69
    $region68: #{tpu_custom_call.1} parent=1 // pred_region
      _
    $region69: #{tpu_custom_call.1} parent=1 // pred_fallthru
      _
    // Predicated region
    $region70: #{tpu_custom_call.1} parent=1 // pred_check
      _
    $region71: #{tpu_custom_call.1} parent=1 // pred_check_branch
      %109 = sbr.rel (0) target = $region73
    $region72: #{tpu_custom_call.1} parent=1 // pred_region
      _
    $region73: #{tpu_custom_call.1} parent=1 // pred_fallthru
      _
    // Predicated region
    $region74: #{tpu_custom_call.1} parent=1 // pred_check
      _
    $region75: #{tpu_custom_call.1} parent=1 // pred_check_branch
      %111 = sbr.rel (0) target = $region77
    $region76: #{tpu_custom_call.1} parent=1 // pred_region
      _
    $region77: #{tpu_custom_call.1} parent=1 // pred_fallthru
      _
    // Predicated region
    $region78: #{tpu_custom_call.1} parent=1 // pred_check
      _
    $region79: #{tpu_custom_call.1} parent=1 // pred_check_branch
      %113 = sbr.rel (0) target = $region81
    $region80: #{tpu_custom_call.1} parent=1 // pred_region
      %114 = dma.done [#allocation3], 6144
    $region81: #{tpu_custom_call.1} parent=1 // pred_fallthru
      _
    // Predicated region
    $region82: #{tpu_custom_call.1} parent=1 // pred_check
      _
    $region83: #{tpu_custom_call.1} parent=1 // pred_check_branch
      %116 = sbr.rel (0) target = $region85
    $region84: #{tpu_custom_call.1} parent=1 // pred_region
      %117 = dma.done [#allocation6], 48
    $region85: #{tpu_custom_call.1} parent=1 // pred_fallthru
      _
    // Predicated region
    $region86: #{tpu_custom_call.1} parent=1 // pred_check
      _
    $region87: #{tpu_custom_call.1} parent=1 // pred_check_branch
      %119 = sbr.rel (0) target = $region89
    $region88: #{tpu_custom_call.1} parent=1 // pred_region
      %120 = dma.done [#allocation6], 48
    $region89: #{tpu_custom_call.1} parent=1 // pred_fallthru
      _
    // Predicated region
    $region90: #{tpu_custom_call.1} parent=1 // pred_check
      _
    $region91: #{tpu_custom_call.1} parent=1 // pred_check_branch
      %122 = sbr.rel (0) target = $region93
    $region92: #{tpu_custom_call.1} parent=1 // pred_region
      %123 = dma.done [#allocation9], 6144
    $region93: #{tpu_custom_call.1} parent=1 // pred_fallthru
      _
    // Predicated region
    $region94: #{tpu_custom_call.1} parent=1 // pred_check
      _
    $region95: #{tpu_custom_call.1} parent=1 // pred_check_branch
      %125 = sbr.rel (0) target = $region97
    $region96: #{tpu_custom_call.1} parent=1 // pred_region
      %126 = dma.done [#allocation9], 6144
    $region97: #{tpu_custom_call.1} parent=1 // pred_fallthru
      _
    %v127 = vld [vmem:[%s0] sm:$0xff]
    %v128 = vld [vmem:[%s0 + $0x8] sm:$0xff]
    %v129 = vld [vmem:[%s1] sm:$0xff]
    %v130 = vld [vmem:[%s1 + $0x8] sm:$0xff]
    %v131 = vld [vmem:[%s1 + $0x10] sm:$0xff]
    %v132 = vld [vmem:[%s1 + $0x18] sm:$0xff]
    %v133 = vld [vmem:[%s1 + $0x20] sm:$0xff]
    %v134 = vld [vmem:[%s1 + $0x28] sm:$0xff]
    %v135 = vld [vmem:[#allocation5] sm:$0x7]
    %v137 = vlaneseq
    %v138 = vshrl.u32 %v137, 7
    %v139 = vsub.s32 0, %v138
    %v140 = vrot.slane %v135, %v139
    %v141 = vlaneseq
    %v142 = vshrl.u32 %v141, 7
    %v143 = vsub.s32 1, %v142
    %v144 = vrot.slane %v135, %v143
    %v145 = vlaneseq
    %v146 = vshrl.u32 %v145, 7
    %v147 = vsub.s32 2, %v146
    %v148 = vrot.slane %v135, %v147
    %vm152 = vcmask 130048
    %v154 = vsel %vm152, %v127, 0
    %v157 = vsel %vm152, %v128, 0
    %159 = vmatprep.subr.mxu0 %v130
    %160 = vmatpush1.msra.mxu0 %v129
    %161 = vmatprep.subr.mxu0 %v133
    %162 = vmatpush1.msra.mxu0 %v132
    %163 = vmatprep.subr.mxu0 0.0
    %164 = vmatpush1.msra.mxu0 0.0
    %165 = vmatprep.subr.mxu0 0.0
    %166 = vmatpush1.msra.mxu0 0.0
    %167 = vmatprep.subr.mxu0 0.0
    %168 = vmatpush1.msra.mxu0 0.0
    %169 = vmatprep.subr.mxu0 0.0
    %170 = vmatpush1.msra.mxu0 0.0
    %171 = vmatprep.subr.mxu0 0.0
    %172 = vmatpush1.msra.mxu0 0.0
    %173 = vmatprep.subr.mxu0 0.0
    %174 = vmatpush1.msra.mxu0 0.0
    %175 = vmatprep.subr.mxu0 0.0
    %176 = vmatpush1.msra.mxu0 0.0
    %177 = vmatprep.subr.mxu0 0.0
    %178 = vmatpush1.msra.mxu0 0.0
    %179 = vmatprep.subr.mxu0 0.0
    %180 = vmatpush1.msra.mxu0 0.0
    %181 = vmatprep.subr.mxu0 0.0
    %182 = vmatpush1.msra.mxu0 0.0
    %183 = vmatprep.subr.mxu0 0.0
    %184 = vmatpush1.msra.mxu0 0.0
    %185 = vmatprep.subr.mxu0 0.0
    %186 = vmatpush1.msra.mxu0 0.0
    %187 = vmatprep.subr.mxu0 0.0
    %188 = vmatpush1.msra.mxu0 0.0
    %189 = vmatprep.subr.mxu0 0.0
    %190 = vmatpush1.msra.mxu0 0.0
    %191 = vmatprep.subr.mxu0 0.0
    %192 = vmatpush1.msra.mxu0 0.0
    %193 = vmatprep.subr.mxu0 0.0
    %194 = vmatpush1.msra.mxu0 0.0
    %195 = vmatprep.subr.mxu0 0.0
    %196 = vmatpush1.msra.mxu0 0.0
    %197 = vmatprep.subr.mxu0 0.0
    %198 = vmatpush1.msra.mxu0 0.0
    %199 = vmatprep.subr.mxu0 0.0
    %200 = vmatpush1.msra.mxu0 0.0
    %201 = vmatprep.subr.mxu0 0.0
    %202 = vmatpush1.msra.mxu0 0.0
    %203 = vmatprep.subr.mxu0 0.0
    %204 = vmatpush1.msra.mxu0 0.0
    %205 = vmatprep.subr.mxu0 0.0
    %206 = vmatpush1.msra.mxu0 0.0
    %207 = vmatprep.subr.mxu0 0.0
    %208 = vmatpush1.msra.mxu0 0.0
    %209 = vmatprep.subr.mxu0 0.0
    %210 = vmatpush1.msra.mxu0 0.0
    %211 = vmatprep.subr.mxu0 0.0
    %212 = vmatpush1.msra.mxu0 0.0
    %213 = vmatprep.subr.mxu0 0.0
    %214 = vmatpush1.msra.mxu0 0.0
    %215 = vmatprep.subr.mxu0 0.0
    %216 = vmatpush1.msra.mxu0 0.0
    %217 = vmatprep.subr.mxu0 0.0
    %218 = vmatpush1.msra.mxu0 0.0
    %219 = vmatprep.subr.mxu0 0.0
    %220 = vmatpush1.msra.mxu0 0.0
    %221 = vmatprep.subr.mxu0 0.0
    %222 = vmatpush1.msra.mxu0 0.0
    %223 = vmatprep.mubr.f32.mxu0 0.0
    %224 = vmatmul.mubr.f32.gmra.mrb[0].mxu0 %v154
    %v225 = vpop.f32.mrb[0].mxu0
    %v226 = vadd.f32 %v140, %v225
    %v227 = vpop.f32.mrb[0].mxu0
    %v228 = vadd.f32 %v144, %v227
    %229 = vmatprep.mubr.f32.mxu0 0.0
    %230 = vmatmul.mubr.f32.gmra.mrb[0].mxu0 %v157
    %v231 = vpop.f32.mrb[0].mxu0
    %v232 = vadd.f32 %v140, %v231
    %v233 = vpop.f32.mrb[0].mxu0
    %v234 = vadd.f32 %v144, %v233
    %235 = vdwg.mxu0
    %236 = vmatprep.subr.mxu0 0.0
    %237 = vmatpush1.msra.mxu0 %v131
    %238 = vmatprep.subr.mxu0 0.0
    %239 = vmatpush1.msra.mxu0 %v134
    %240 = vmatprep.subr.mxu0 0.0
    %241 = vmatpush1.msra.mxu0 0.0
    %242 = vmatprep.subr.mxu0 0.0
    %243 = vmatpush1.msra.mxu0 0.0
    %244 = vmatprep.subr.mxu0 0.0
    %245 = vmatpush1.msra.mxu0 0.0
    %246 = vmatprep.subr.mxu0 0.0
    %247 = vmatpush1.msra.mxu0 0.0
    %248 = vmatprep.subr.mxu0 0.0
    %249 = vmatpush1.msra.mxu0 0.0
    %250 = vmatprep.subr.mxu0 0.0
    %251 = vmatpush1.msra.mxu0 0.0
    %252 = vmatprep.subr.mxu0 0.0
    %253 = vmatpush1.msra.mxu0 0.0
    %254 = vmatprep.subr.mxu0 0.0
    %255 = vmatpush1.msra.mxu0 0.0
    %256 = vmatprep.subr.mxu0 0.0
    %257 = vmatpush1.msra.mxu0 0.0
    %258 = vmatprep.subr.mxu0 0.0
    %259 = vmatpush1.msra.mxu0 0.0
    %260 = vmatprep.subr.mxu0 0.0
    %261 = vmatpush1.msra.mxu0 0.0
    %262 = vmatprep.subr.mxu0 0.0
    %263 = vmatpush1.msra.mxu0 0.0
    %264 = vmatprep.subr.mxu0 0.0
    %265 = vmatpush1.msra.mxu0 0.0
    %266 = vmatprep.subr.mxu0 0.0
    %267 = vmatpush1.msra.mxu0 0.0
    %268 = vmatprep.subr.mxu0 0.0
    %269 = vmatpush1.msra.mxu0 0.0
    %270 = vmatprep.subr.mxu0 0.0
    %271 = vmatpush1.msra.mxu0 0.0
    %272 = vmatprep.subr.mxu0 0.0
    %273 = vmatpush1.msra.mxu0 0.0
    %274 = vmatprep.subr.mxu0 0.0
    %275 = vmatpush1.msra.mxu0 0.0
    %276 = vmatprep.subr.mxu0 0.0
    %277 = vmatpush1.msra.mxu0 0.0
    %278 = vmatprep.subr.mxu0 0.0
    %279 = vmatpush1.msra.mxu0 0.0
    %280 = vmatprep.subr.mxu0 0.0
    %281 = vmatpush1.msra.mxu0 0.0
    %282 = vmatprep.subr.mxu0 0.0
    %283 = vmatpush1.msra.mxu0 0.0
    %284 = vmatprep.subr.mxu0 0.0
    %285 = vmatpush1.msra.mxu0 0.0
    %286 = vmatprep.subr.mxu0 0.0
    %287 = vmatpush1.msra.mxu0 0.0
    %288 = vmatprep.subr.mxu0 0.0
    %289 = vmatpush1.msra.mxu0 0.0
    %290 = vmatprep.subr.mxu0 0.0
    %291 = vmatpush1.msra.mxu0 0.0
    %292 = vmatprep.subr.mxu0 0.0
    %293 = vmatpush1.msra.mxu0 0.0
    %294 = vmatprep.subr.mxu0 0.0
    %295 = vmatpush1.msra.mxu0 0.0
    %296 = vmatprep.subr.mxu0 0.0
    %297 = vmatpush1.msra.mxu0 0.0
    %298 = vmatprep.subr.mxu0 0.0
    %299 = vmatpush1.msra.mxu0 0.0
    %300 = vmatprep.mubr.f32.mxu0 0.0
    %301 = vmatmul.mubr.f32.gmra.mrb[0].mxu0 %v154
    %v302 = vpop.f32.mrb[0].mxu0
    %v303 = vadd.f32 %v148, %v302
    %v304 = vpop.f32.mrb[0].mxu0
    %305 = vmatprep.mubr.f32.mxu0 0.0
    %306 = vmatmul.mubr.f32.gmra.mrb[0].mxu0 %v157
    %v307 = vpop.f32.mrb[0].mxu0
    %v308 = vadd.f32 %v148, %v307
    %v309 = vpop.f32.mrb[0].mxu0
    %310 = vdwg.mxu0
    %v311 = vld [vmem:[#allocation2] sm:$0xff]
    %v312 = vld [vmem:[#allocation2 + $0x8] sm:$0xff]
    %v313 = vld [vmem:[#allocation2 + $0x10] sm:$0xff]
    %v314 = vld [vmem:[#allocation2 + $0x18] sm:$0xff]
    %v315 = vld [vmem:[#allocation2 + $0x20] sm:$0xff]
    %v316 = vld [vmem:[#allocation2 + $0x28] sm:$0xff]
    %v317 = vld [vmem:[#allocation2 + $0x30] sm:$0xff]
    %v318 = vld [vmem:[#allocation2 + $0x38] sm:$0xff]
    %v319 = vld [vmem:[#allocation2 + $0x40] sm:$0xff]
    %v320 = vld [vmem:[#allocation2 + $0x48] sm:$0xff]
    %v321 = vld [vmem:[#allocation2 + $0x50] sm:$0xff]
    %v322 = vld [vmem:[#allocation2 + $0x58] sm:$0xff]
    %v323 = vld [vmem:[#allocation2 + $0x60] sm:$0xff]
    %v324 = vld [vmem:[#allocation2 + $0x68] sm:$0xff]
    %v325 = vld [vmem:[#allocation2 + $0x70] sm:$0xff]
    %v326 = vld [vmem:[#allocation2 + $0x78] sm:$0xff]
    %v327 = vld [vmem:[#allocation2 + $0x80] sm:$0xff]
    %v328 = vld [vmem:[#allocation2 + $0x88] sm:$0xff]
    %v329 = vld [vmem:[#allocation2 + $0x90] sm:$0xff]
    %v330 = vld [vmem:[#allocation2 + $0x98] sm:$0xff]
    %v331 = vld [vmem:[#allocation2 + $0xa0] sm:$0xff]
    %v332 = vld [vmem:[#allocation2 + $0xa8] sm:$0xff]
    %v333 = vld [vmem:[#allocation2 + $0xb0] sm:$0xff]
    %v334 = vld [vmem:[#allocation2 + $0xb8] sm:$0xff]
    %v335 = vld [vmem:[#allocation2 + $0xc0] sm:$0xff]
    %v336 = vld [vmem:[#allocation2 + $0xc8] sm:$0xff]
    %v337 = vld [vmem:[#allocation2 + $0xd0] sm:$0xff]
    %v338 = vld [vmem:[#allocation2 + $0xd8] sm:$0xff]
    %v339 = vld [vmem:[#allocation2 + $0xe0] sm:$0xff]
    %v340 = vld [vmem:[#allocation2 + $0xe8] sm:$0xff]
    %v341 = vld [vmem:[#allocation2 + $0xf0] sm:$0xff]
    %v342 = vld [vmem:[#allocation2 + $0xf8] sm:$0xff]
    %v343 = vld [vmem:[#allocation2 + $0x100] sm:$0xff]
    %v344 = vld [vmem:[#allocation2 + $0x108] sm:$0xff]
    %v345 = vld [vmem:[#allocation2 + $0x110] sm:$0xff]
    %v346 = vld [vmem:[#allocation2 + $0x118] sm:$0xff]
    %v347 = vld [vmem:[#allocation2 + $0x120] sm:$0xff]
    %v348 = vld [vmem:[#allocation2 + $0x128] sm:$0xff]
    %v349 = vld [vmem:[#allocation2 + $0x130] sm:$0xff]
    %v350 = vld [vmem:[#allocation2 + $0x138] sm:$0xff]
    %v351 = vld [vmem:[#allocation2 + $0x140] sm:$0xff]
    %v352 = vld [vmem:[#allocation2 + $0x148] sm:$0xff]
    %v353 = vld [vmem:[#allocation2 + $0x150] sm:$0xff]
    %v354 = vld [vmem:[#allocation2 + $0x158] sm:$0xff]
    %v355 = vld [vmem:[#allocation2 + $0x160] sm:$0xff]
    %v356 = vld [vmem:[#allocation2 + $0x168] sm:$0xff]
    %v357 = vld [vmem:[#allocation2 + $0x170] sm:$0xff]
    %v358 = vld [vmem:[#allocation2 + $0x178] sm:$0xff]
    %v359 = vld [vmem:[#allocation8] sm:$0xff]
    %v360 = vld [vmem:[#allocation8 + $0x8] sm:$0xff]
    %v361 = vld [vmem:[#allocation8 + $0x10] sm:$0xff]
    %v362 = vld [vmem:[#allocation8 + $0x18] sm:$0xff]
    %v363 = vld [vmem:[#allocation8 + $0x20] sm:$0xff]
    %v364 = vld [vmem:[#allocation8 + $0x28] sm:$0xff]
    %v365 = vld [vmem:[#allocation8 + $0x30] sm:$0xff]
    %v366 = vld [vmem:[#allocation8 + $0x38] sm:$0xff]
    %v367 = vld [vmem:[#allocation8 + $0x40] sm:$0xff]
    %v368 = vld [vmem:[#allocation8 + $0x48] sm:$0xff]
    %v369 = vld [vmem:[#allocation8 + $0x50] sm:$0xff]
    %v370 = vld [vmem:[#allocation8 + $0x58] sm:$0xff]
    %v371 = vld [vmem:[#allocation8 + $0x60] sm:$0xff]
    %v372 = vld [vmem:[#allocation8 + $0x68] sm:$0xff]
    %v373 = vld [vmem:[#allocation8 + $0x70] sm:$0xff]
    %v374 = vld [vmem:[#allocation8 + $0x78] sm:$0xff]
    %v375 = vld [vmem:[#allocation8 + $0x80] sm:$0xff]
    %v376 = vld [vmem:[#allocation8 + $0x88] sm:$0xff]
    %v377 = vld [vmem:[#allocation8 + $0x90] sm:$0xff]
    %v378 = vld [vmem:[#allocation8 + $0x98] sm:$0xff]
    %v379 = vld [vmem:[#allocation8 + $0xa0] sm:$0xff]
    %v380 = vld [vmem:[#allocation8 + $0xa8] sm:$0xff]
    %v381 = vld [vmem:[#allocation8 + $0xb0] sm:$0xff]
    %v382 = vld [vmem:[#allocation8 + $0xb8] sm:$0xff]
    %v383 = vld [vmem:[#allocation8 + $0xc0] sm:$0xff]
    %v384 = vld [vmem:[#allocation8 + $0xc8] sm:$0xff]
    %v385 = vld [vmem:[#allocation8 + $0xd0] sm:$0xff]
    %v386 = vld [vmem:[#allocation8 + $0xd8] sm:$0xff]
    %v387 = vld [vmem:[#allocation8 + $0xe0] sm:$0xff]
    %v388 = vld [vmem:[#allocation8 + $0xe8] sm:$0xff]
    %v389 = vld [vmem:[#allocation8 + $0xf0] sm:$0xff]
    %v390 = vld [vmem:[#allocation8 + $0xf8] sm:$0xff]
    %v391 = vld [vmem:[#allocation8 + $0x100] sm:$0xff]
    %v392 = vld [vmem:[#allocation8 + $0x108] sm:$0xff]
    %v393 = vld [vmem:[#allocation8 + $0x110] sm:$0xff]
    %v394 = vld [vmem:[#allocation8 + $0x118] sm:$0xff]
    %v395 = vld [vmem:[#allocation8 + $0x120] sm:$0xff]
    %v396 = vld [vmem:[#allocation8 + $0x128] sm:$0xff]
    %v397 = vld [vmem:[#allocation8 + $0x130] sm:$0xff]
    %v398 = vld [vmem:[#allocation8 + $0x138] sm:$0xff]
    %v399 = vld [vmem:[#allocation8 + $0x140] sm:$0xff]
    %v400 = vld [vmem:[#allocation8 + $0x148] sm:$0xff]
    %v401 = vld [vmem:[#allocation8 + $0x150] sm:$0xff]
    %v402 = vld [vmem:[#allocation8 + $0x158] sm:$0xff]
    %v403 = vld [vmem:[#allocation8 + $0x160] sm:$0xff]
    %v404 = vld [vmem:[#allocation8 + $0x168] sm:$0xff]
    %v405 = vld [vmem:[#allocation8 + $0x170] sm:$0xff]
    %v406 = vld [vmem:[#allocation8 + $0x178] sm:$0xff]
    %v407 = vld [vmem:[#allocation10] sm:$0xff]
    %v408 = vld [vmem:[#allocation10 + $0x8] sm:$0xff]
    %v409 = vld [vmem:[#allocation10 + $0x10] sm:$0xff]
    %v410 = vld [vmem:[#allocation10 + $0x18] sm:$0xff]
    %v411 = vld [vmem:[#allocation10 + $0x20] sm:$0xff]
    %v412 = vld [vmem:[#allocation10 + $0x28] sm:$0xff]
    %v413 = vld [vmem:[#allocation10 + $0x30] sm:$0xff]
    %v414 = vld [vmem:[#allocation10 + $0x38] sm:$0xff]
    %v415 = vld [vmem:[#allocation10 + $0x40] sm:$0xff]
    %v416 = vld [vmem:[#allocation10 + $0x48] sm:$0xff]
    %v417 = vld [vmem:[#allocation10 + $0x50] sm:$0xff]
    %v418 = vld [vmem:[#allocation10 + $0x58] sm:$0xff]
    %v419 = vld [vmem:[#allocation10 + $0x60] sm:$0xff]
    %v420 = vld [vmem:[#allocation10 + $0x68] sm:$0xff]
    %v421 = vld [vmem:[#allocation10 + $0x70] sm:$0xff]
    %v422 = vld [vmem:[#allocation10 + $0x78] sm:$0xff]
    %v423 = vld [vmem:[#allocation10 + $0x80] sm:$0xff]
    %v424 = vld [vmem:[#allocation10 + $0x88] sm:$0xff]
    %v425 = vld [vmem:[#allocation10 + $0x90] sm:$0xff]
    %v426 = vld [vmem:[#allocation10 + $0x98] sm:$0xff]
    %v427 = vld [vmem:[#allocation10 + $0xa0] sm:$0xff]
    %v428 = vld [vmem:[#allocation10 + $0xa8] sm:$0xff]
    %v429 = vld [vmem:[#allocation10 + $0xb0] sm:$0xff]
    %v430 = vld [vmem:[#allocation10 + $0xb8] sm:$0xff]
    %v431 = vld [vmem:[#allocation10 + $0xc0] sm:$0xff]
    %v432 = vld [vmem:[#allocation10 + $0xc8] sm:$0xff]
    %v433 = vld [vmem:[#allocation10 + $0xd0] sm:$0xff]
    %v434 = vld [vmem:[#allocation10 + $0xd8] sm:$0xff]
    %v435 = vld [vmem:[#allocation10 + $0xe0] sm:$0xff]
    %v436 = vld [vmem:[#allocation10 + $0xe8] sm:$0xff]
    %v437 = vld [vmem:[#allocation10 + $0xf0] sm:$0xff]
    %v438 = vld [vmem:[#allocation10 + $0xf8] sm:$0xff]
    %v439 = vld [vmem:[#allocation10 + $0x100] sm:$0xff]
    %v440 = vld [vmem:[#allocation10 + $0x108] sm:$0xff]
    %v441 = vld [vmem:[#allocation10 + $0x110] sm:$0xff]
    %v442 = vld [vmem:[#allocation10 + $0x118] sm:$0xff]
    %v443 = vld [vmem:[#allocation10 + $0x120] sm:$0xff]
    %v444 = vld [vmem:[#allocation10 + $0x128] sm:$0xff]
    %v445 = vld [vmem:[#allocation10 + $0x130] sm:$0xff]
    %v446 = vld [vmem:[#allocation10 + $0x138] sm:$0xff]
    %v447 = vld [vmem:[#allocation10 + $0x140] sm:$0xff]
    %v448 = vld [vmem:[#allocation10 + $0x148] sm:$0xff]
    %v449 = vld [vmem:[#allocation10 + $0x150] sm:$0xff]
    %v450 = vld [vmem:[#allocation10 + $0x158] sm:$0xff]
    %v451 = vld [vmem:[#allocation10 + $0x160] sm:$0xff]
    %v452 = vld [vmem:[#allocation10 + $0x168] sm:$0xff]
    %v453 = vld [vmem:[#allocation10 + $0x170] sm:$0xff]
    %v454 = vld [vmem:[#allocation10 + $0x178] sm:$0xff]
    %v455 = vld [vmem:[#allocation7] sm:$0x7]
    %v457 = vlaneseq
    %v458 = vshrl.u32 %v457, 7
    %v459 = vsub.s32 0, %v458
    %v460 = vrot.slane %v455, %v459
    %v461 = vlaneseq
    %v462 = vshrl.u32 %v461, 7
    %v463 = vsub.s32 1, %v462
    %v464 = vrot.slane %v455, %v463
    %v465 = vlaneseq
    %v466 = vshrl.u32 %v465, 7
    %v467 = vsub.s32 2, %v466
    %v468 = vrot.slane %v455, %v467
    %v472 = vld [vmem:[%s7] sm:$0x7]
    %v474 = vlaneseq
    %v475 = vshrl.u32 %v474, 7
    %v476 = vsub.s32 0, %v475
    %v477 = vrot.slane %v472, %v476
    %v478 = vlaneseq
    %v479 = vshrl.u32 %v478, 7
    %v480 = vsub.s32 1, %v479
    %v481 = vrot.slane %v472, %v480
    %v482 = vlaneseq
    %v483 = vshrl.u32 %v482, 7
    %v484 = vsub.s32 2, %v483
    %v485 = vrot.slane %v472, %v484
    %v489 = vld [vmem:[%s8] sm:$0x7]
    %v491 = vlaneseq
    %v492 = vshrl.u32 %v491, 7
    %v493 = vsub.s32 0, %v492
    %v494 = vrot.slane %v489, %v493
    %v495 = vlaneseq
    %v496 = vshrl.u32 %v495, 7
    %v497 = vsub.s32 1, %v496
    %v498 = vrot.slane %v489, %v497
    %v499 = vlaneseq
    %v500 = vshrl.u32 %v499, 7
    %v501 = vsub.s32 2, %v500
    %v502 = vrot.slane %v489, %v501
    %506 = vmatprep.subr.mxu0 %v312
    %507 = vmatpush1.msra.mxu0 %v311
    %508 = vmatprep.subr.mxu0 %v315
    %509 = vmatpush1.msra.mxu0 %v314
    %510 = vmatprep.subr.mxu0 %v318
    %511 = vmatpush1.msra.mxu0 %v317
    %512 = vmatprep.subr.mxu0 %v321
    %513 = vmatpush1.msra.mxu0 %v320
    %514 = vmatprep.subr.mxu0 %v324
    %515 = vmatpush1.msra.mxu0 %v323
    %516 = vmatprep.subr.mxu0 %v327
    %517 = vmatpush1.msra.mxu0 %v326
    %518 = vmatprep.subr.mxu0 %v330
    %519 = vmatpush1.msra.mxu0 %v329
    %520 = vmatprep.subr.mxu0 %v333
    %521 = vmatpush1.msra.mxu0 %v332
    %522 = vmatprep.subr.mxu0 %v336
    %523 = vmatpush1.msra.mxu0 %v335
    %524 = vmatprep.subr.mxu0 %v339
    %525 = vmatpush1.msra.mxu0 %v338
    %526 = vmatprep.subr.mxu0 %v342
    %527 = vmatpush1.msra.mxu0 %v341
    %528 = vmatprep.subr.mxu0 %v345
    %529 = vmatpush1.msra.mxu0 %v344
    %530 = vmatprep.subr.mxu0 %v348
    %531 = vmatpush1.msra.mxu0 %v347
    %532 = vmatprep.subr.mxu0 %v351
    %533 = vmatpush1.msra.mxu0 %v350
    %534 = vmatprep.subr.mxu0 %v354
    %535 = vmatpush1.msra.mxu0 %v353
    %536 = vmatprep.subr.mxu0 %v357
    %537 = vmatpush1.msra.mxu0 %v356
    %538 = vmatprep.subr.mxu0 0.0
    %539 = vmatpush1.msra.mxu0 0.0
    %540 = vmatprep.subr.mxu0 0.0
    %541 = vmatpush1.msra.mxu0 0.0
    %542 = vmatprep.subr.mxu0 0.0
    %543 = vmatpush1.msra.mxu0 0.0
    %544 = vmatprep.subr.mxu0 0.0
    %545 = vmatpush1.msra.mxu0 0.0
    %546 = vmatprep.subr.mxu0 0.0
    %547 = vmatpush1.msra.mxu0 0.0
    %548 = vmatprep.subr.mxu0 0.0
    %549 = vmatpush1.msra.mxu0 0.0
    %550 = vmatprep.subr.mxu0 0.0
    %551 = vmatpush1.msra.mxu0 0.0
    %552 = vmatprep.subr.mxu0 0.0
    %553 = vmatpush1.msra.mxu0 0.0
    %554 = vmatprep.subr.mxu0 0.0
    %555 = vmatpush1.msra.mxu0 0.0
    %556 = vmatprep.subr.mxu0 0.0
    %557 = vmatpush1.msra.mxu0 0.0
    %558 = vmatprep.subr.mxu0 0.0
    %559 = vmatpush1.msra.mxu0 0.0
    %560 = vmatprep.subr.mxu0 0.0
    %561 = vmatpush1.msra.mxu0 0.0
    %562 = vmatprep.subr.mxu0 0.0
    %563 = vmatpush1.msra.mxu0 0.0
    %564 = vmatprep.subr.mxu0 0.0
    %565 = vmatpush1.msra.mxu0 0.0
    %566 = vmatprep.subr.mxu0 0.0
    %567 = vmatpush1.msra.mxu0 0.0
    %568 = vmatprep.subr.mxu0 0.0
    %569 = vmatpush1.msra.mxu0 0.0
    %570 = vmatprep.mubr.f32.mxu0 0.0
    %571 = vmatmul.mubr.f32.gmra.mrb[0].mxu0 0.0
    %v572 = vpop.f32.mrb[0].mxu0
    %v573 = vadd.f32 %v460, %v572
    %v574 = vpop.f32.mrb[0].mxu0
    %v575 = vadd.f32 %v464, %v574
    %576 = vdwg.mxu0
    %577 = vmatprep.subr.mxu0 0.0
    %578 = vmatpush1.msra.mxu0 %v313
    %579 = vmatprep.subr.mxu0 0.0
    %580 = vmatpush1.msra.mxu0 %v316
    %581 = vmatprep.subr.mxu0 0.0
    %582 = vmatpush1.msra.mxu0 %v319
    %583 = vmatprep.subr.mxu0 0.0
    %584 = vmatpush1.msra.mxu0 %v322
    %585 = vmatprep.subr.mxu0 0.0
    %586 = vmatpush1.msra.mxu0 %v325
    %587 = vmatprep.subr.mxu0 0.0
    %588 = vmatpush1.msra.mxu0 %v328
    %589 = vmatprep.subr.mxu0 0.0
    %590 = vmatpush1.msra.mxu0 %v331
    %591 = vmatprep.subr.mxu0 0.0
    %592 = vmatpush1.msra.mxu0 %v334
    %593 = vmatprep.subr.mxu0 0.0
    %594 = vmatpush1.msra.mxu0 %v337
    %595 = vmatprep.subr.mxu0 0.0
    %596 = vmatpush1.msra.mxu0 %v340
    %597 = vmatprep.subr.mxu0 0.0
    %598 = vmatpush1.msra.mxu0 %v343
    %599 = vmatprep.subr.mxu0 0.0
    %600 = vmatpush1.msra.mxu0 %v346
    %601 = vmatprep.subr.mxu0 0.0
    %602 = vmatpush1.msra.mxu0 %v349
    %603 = vmatprep.subr.mxu0 0.0
    %604 = vmatpush1.msra.mxu0 %v352
    %605 = vmatprep.subr.mxu0 0.0
    %606 = vmatpush1.msra.mxu0 %v355
    %607 = vmatprep.subr.mxu0 0.0
    %608 = vmatpush1.msra.mxu0 %v358
    %609 = vmatprep.subr.mxu0 0.0
    %610 = vmatpush1.msra.mxu0 0.0
    %611 = vmatprep.subr.mxu0 0.0
    %612 = vmatpush1.msra.mxu0 0.0
    %613 = vmatprep.subr.mxu0 0.0
    %614 = vmatpush1.msra.mxu0 0.0
    %615 = vmatprep.subr.mxu0 0.0
    %616 = vmatpush1.msra.mxu0 0.0
    %617 = vmatprep.subr.mxu0 0.0
    %618 = vmatpush1.msra.mxu0 0.0
    %619 = vmatprep.subr.mxu0 0.0
    %620 = vmatpush1.msra.mxu0 0.0
    %621 = vmatprep.subr.mxu0 0.0
    %622 = vmatpush1.msra.mxu0 0.0
    %623 = vmatprep.subr.mxu0 0.0
    %624 = vmatpush1.msra.mxu0 0.0
    %625 = vmatprep.subr.mxu0 0.0
    %626 = vmatpush1.msra.mxu0 0.0
    %627 = vmatprep.subr.mxu0 0.0
    %628 = vmatpush1.msra.mxu0 0.0
    %629 = vmatprep.subr.mxu0 0.0
    %630 = vmatpush1.msra.mxu0 0.0
    %631 = vmatprep.subr.mxu0 0.0
    %632 = vmatpush1.msra.mxu0 0.0
    %633 = vmatprep.subr.mxu0 0.0
    %634 = vmatpush1.msra.mxu0 0.0
    %635 = vmatprep.subr.mxu0 0.0
    %636 = vmatpush1.msra.mxu0 0.0
    %637 = vmatprep.subr.mxu0 0.0
    %638 = vmatpush1.msra.mxu0 0.0
    %639 = vmatprep.subr.mxu0 0.0
    %640 = vmatpush1.msra.mxu0 0.0
    %641 = vmatprep.mubr.f32.mxu0 0.0
    %642 = vmatmul.mubr.f32.gmra.mrb[0].mxu0 0.0
    %v643 = vpop.f32.mrb[0].mxu0
    %v644 = vadd.f32 %v468, %v643
    %v645 = vpop.f32.mrb[0].mxu0
    %646 = vdwg.mxu0
    %v647 = vadd.f32 %v226, %v573
    %v648 = vxor.u32 %v647, 2147483648
    %v649 = vmul.f32 %v648, 1.442695
    %v650 = vpow.pop %v649
    %v651 = vadd.f32 %v650, 1.0
    %v652 = vrcp.pop %v651
    %v653 = vmul.f32 1.0, %v652
    %v654 = vadd.f32 %v228, %v575
    %v655 = vxor.u32 %v654, 2147483648
    %v656 = vmul.f32 %v655, 1.442695
    %v657 = vpow.pop %v656
    %v658 = vadd.f32 %v657, 1.0
    %v659 = vrcp.pop %v658
    %v660 = vmul.f32 1.0, %v659
    %v661 = vmul.f32 %v653, %v644
    %v662 = vadd.f32 %v303, %v661
    %v663 = vtanh.pop %v662
    %v664 = vsub.f32 1.0, %v660
    %v665 = vmul.f32 %v664, %v663
    %v666 = vmul.f32 %v660, 0.0
    %v667 = vadd.f32 %v665, %v666
    %668 = vmatprep.subr.mxu0 %v360
    %669 = vmatpush1.msra.mxu0 %v359
    %670 = vmatprep.subr.mxu0 %v363
    %671 = vmatpush1.msra.mxu0 %v362
    %672 = vmatprep.subr.mxu0 %v366
    %673 = vmatpush1.msra.mxu0 %v365
    %674 = vmatprep.subr.mxu0 %v369
    %675 = vmatpush1.msra.mxu0 %v368
    %676 = vmatprep.subr.mxu0 %v372
    %677 = vmatpush1.msra.mxu0 %v371
    %678 = vmatprep.subr.mxu0 %v375
    %679 = vmatpush1.msra.mxu0 %v374
    %680 = vmatprep.subr.mxu0 %v378
    %681 = vmatpush1.msra.mxu0 %v377
    %682 = vmatprep.subr.mxu0 %v381
    %683 = vmatpush1.msra.mxu0 %v380
    %684 = vmatprep.subr.mxu0 %v384
    %685 = vmatpush1.msra.mxu0 %v383
    %686 = vmatprep.subr.mxu0 %v387
    %687 = vmatpush1.msra.mxu0 %v386
    %688 = vmatprep.subr.mxu0 %v390
    %689 = vmatpush1.msra.mxu0 %v389
    %690 = vmatprep.subr.mxu0 %v393
    %691 = vmatpush1.msra.mxu0 %v392
    %692 = vmatprep.subr.mxu0 %v396
    %693 = vmatpush1.msra.mxu0 %v395
    %694 = vmatprep.subr.mxu0 %v399
    %695 = vmatpush1.msra.mxu0 %v398
    %696 = vmatprep.subr.mxu0 %v402
    %697 = vmatpush1.msra.mxu0 %v401
    %698 = vmatprep.subr.mxu0 %v405
    %699 = vmatpush1.msra.mxu0 %v404
    %700 = vmatprep.subr.mxu0 0.0
    %701 = vmatpush1.msra.mxu0 0.0
    %702 = vmatprep.subr.mxu0 0.0
    %703 = vmatpush1.msra.mxu0 0.0
    %704 = vmatprep.subr.mxu0 0.0
    %705 = vmatpush1.msra.mxu0 0.0
    %706 = vmatprep.subr.mxu0 0.0
    %707 = vmatpush1.msra.mxu0 0.0
    %708 = vmatprep.subr.mxu0 0.0
    %709 = vmatpush1.msra.mxu0 0.0
    %710 = vmatprep.subr.mxu0 0.0
    %711 = vmatpush1.msra.mxu0 0.0
    %712 = vmatprep.subr.mxu0 0.0
    %713 = vmatpush1.msra.mxu0 0.0
    %714 = vmatprep.subr.mxu0 0.0
    %715 = vmatpush1.msra.mxu0 0.0
    %716 = vmatprep.subr.mxu0 0.0
    %717 = vmatpush1.msra.mxu0 0.0
    %718 = vmatprep.subr.mxu0 0.0
    %719 = vmatpush1.msra.mxu0 0.0
    %720 = vmatprep.subr.mxu0 0.0
    %721 = vmatpush1.msra.mxu0 0.0
    %722 = vmatprep.subr.mxu0 0.0
    %723 = vmatpush1.msra.mxu0 0.0
    %724 = vmatprep.subr.mxu0 0.0
    %725 = vmatpush1.msra.mxu0 0.0
    %726 = vmatprep.subr.mxu0 0.0
    %727 = vmatpush1.msra.mxu0 0.0
    %728 = vmatprep.subr.mxu0 0.0
    %729 = vmatpush1.msra.mxu0 0.0
    %730 = vmatprep.subr.mxu0 0.0
    %731 = vmatpush1.msra.mxu0 0.0
    %732 = vmatprep.mubr.f32.mxu0 0.0
    %733 = vmatmul.mubr.f32.gmra.mrb[0].mxu0 %v667
    %v734 = vpop.f32.mrb[0].mxu0
    %v735 = vadd.f32 %v477, %v734
    %v736 = vpop.f32.mrb[0].mxu0
    %v737 = vadd.f32 %v481, %v736
    %738 = vdwg.mxu0
    %739 = vmatprep.subr.mxu0 0.0
    %740 = vmatpush1.msra.mxu0 %v361
    %741 = vmatprep.subr.mxu0 0.0
    %742 = vmatpush1.msra.mxu0 %v364
    %743 = vmatprep.subr.mxu0 0.0
    %744 = vmatpush1.msra.mxu0 %v367
    %745 = vmatprep.subr.mxu0 0.0
    %746 = vmatpush1.msra.mxu0 %v370
    %747 = vmatprep.subr.mxu0 0.0
    %748 = vmatpush1.msra.mxu0 %v373
    %749 = vmatprep.subr.mxu0 0.0
    %750 = vmatpush1.msra.mxu0 %v376
    %751 = vmatprep.subr.mxu0 0.0
    %752 = vmatpush1.msra.mxu0 %v379
    %753 = vmatprep.subr.mxu0 0.0
    %754 = vmatpush1.msra.mxu0 %v382
    %755 = vmatprep.subr.mxu0 0.0
    %756 = vmatpush1.msra.mxu0 %v385
    %757 = vmatprep.subr.mxu0 0.0
    %758 = vmatpush1.msra.mxu0 %v388
    %759 = vmatprep.subr.mxu0 0.0
    %760 = vmatpush1.msra.mxu0 %v391
    %761 = vmatprep.subr.mxu0 0.0
    %762 = vmatpush1.msra.mxu0 %v394
    %763 = vmatprep.subr.mxu0 0.0
    %764 = vmatpush1.msra.mxu0 %v397
    %765 = vmatprep.subr.mxu0 0.0
    %766 = vmatpush1.msra.mxu0 %v400
    %767 = vmatprep.subr.mxu0 0.0
    %768 = vmatpush1.msra.mxu0 %v403
    %769 = vmatprep.subr.mxu0 0.0
    %770 = vmatpush1.msra.mxu0 %v406
    %771 = vmatprep.subr.mxu0 0.0
    %772 = vmatpush1.msra.mxu0 0.0
    %773 = vmatprep.subr.mxu0 0.0
    %774 = vmatpush1.msra.mxu0 0.0
    %775 = vmatprep.subr.mxu0 0.0
    %776 = vmatpush1.msra.mxu0 0.0
    %777 = vmatprep.subr.mxu0 0.0
    %778 = vmatpush1.msra.mxu0 0.0
    %779 = vmatprep.subr.mxu0 0.0
    %780 = vmatpush1.msra.mxu0 0.0
    %781 = vmatprep.subr.mxu0 0.0
    %782 = vmatpush1.msra.mxu0 0.0
    %783 = vmatprep.subr.mxu0 0.0
    %784 = vmatpush1.msra.mxu0 0.0
    %785 = vmatprep.subr.mxu0 0.0
    %786 = vmatpush1.msra.mxu0 0.0
    %787 = vmatprep.subr.mxu0 0.0
    %788 = vmatpush1.msra.mxu0 0.0
    %789 = vmatprep.subr.mxu0 0.0
    %790 = vmatpush1.msra.mxu0 0.0
    %791 = vmatprep.subr.mxu0 0.0
    %792 = vmatpush1.msra.mxu0 0.0
    %793 = vmatprep.subr.mxu0 0.0
    %794 = vmatpush1.msra.mxu0 0.0
    %795 = vmatprep.subr.mxu0 0.0
    %796 = vmatpush1.msra.mxu0 0.0
    %797 = vmatprep.subr.mxu0 0.0
    %798 = vmatpush1.msra.mxu0 0.0
    %799 = vmatprep.subr.mxu0 0.0
    %800 = vmatpush1.msra.mxu0 0.0
    %801 = vmatprep.subr.mxu0 0.0
    %802 = vmatpush1.msra.mxu0 0.0
    %803 = vmatprep.mubr.f32.mxu0 0.0
    %804 = vmatmul.mubr.f32.gmra.mrb[0].mxu0 %v667
    %v805 = vpop.f32.mrb[0].mxu0
    %v806 = vadd.f32 %v485, %v805
    %v807 = vpop.f32.mrb[0].mxu0
    %808 = vdwg.mxu0
    %809 = vmatprep.subr.mxu0 %v408
    %810 = vmatpush1.msra.mxu0 %v407
    %811 = vmatprep.subr.mxu0 %v411
    %812 = vmatpush1.msra.mxu0 %v410
    %813 = vmatprep.subr.mxu0 %v414
    %814 = vmatpush1.msra.mxu0 %v413
    %815 = vmatprep.subr.mxu0 %v417
    %816 = vmatpush1.msra.mxu0 %v416
    %817 = vmatprep.subr.mxu0 %v420
    %818 = vmatpush1.msra.mxu0 %v419
    %819 = vmatprep.subr.mxu0 %v423
    %820 = vmatpush1.msra.mxu0 %v422
    %821 = vmatprep.subr.mxu0 %v426
    %822 = vmatpush1.msra.mxu0 %v425
    %823 = vmatprep.subr.mxu0 %v429
    %824 = vmatpush1.msra.mxu0 %v428
    %825 = vmatprep.subr.mxu0 %v432
    %826 = vmatpush1.msra.mxu0 %v431
    %827 = vmatprep.subr.mxu0 %v435
    %828 = vmatpush1.msra.mxu0 %v434
    %829 = vmatprep.subr.mxu0 %v438
    %830 = vmatpush1.msra.mxu0 %v437
    %831 = vmatprep.subr.mxu0 %v441
    %832 = vmatpush1.msra.mxu0 %v440
    %833 = vmatprep.subr.mxu0 %v444
    %834 = vmatpush1.msra.mxu0 %v443
    %835 = vmatprep.subr.mxu0 %v447
    %836 = vmatpush1.msra.mxu0 %v446
    %837 = vmatprep.subr.mxu0 %v450
    %838 = vmatpush1.msra.mxu0 %v449
    %839 = vmatprep.subr.mxu0 %v453
    %840 = vmatpush1.msra.mxu0 %v452
    %841 = vmatprep.subr.mxu0 0.0
    %842 = vmatpush1.msra.mxu0 0.0
    %843 = vmatprep.subr.mxu0 0.0
    %844 = vmatpush1.msra.mxu0 0.0
    %845 = vmatprep.subr.mxu0 0.0
    %846 = vmatpush1.msra.mxu0 0.0
    %847 = vmatprep.subr.mxu0 0.0
    %848 = vmatpush1.msra.mxu0 0.0
    %849 = vmatprep.subr.mxu0 0.0
    %850 = vmatpush1.msra.mxu0 0.0
    %851 = vmatprep.subr.mxu0 0.0
    %852 = vmatpush1.msra.mxu0 0.0
    %853 = vmatprep.subr.mxu0 0.0
    %854 = vmatpush1.msra.mxu0 0.0
    %855 = vmatprep.subr.mxu0 0.0
    %856 = vmatpush1.msra.mxu0 0.0
    %857 = vmatprep.subr.mxu0 0.0
    %858 = vmatpush1.msra.mxu0 0.0
    %859 = vmatprep.subr.mxu0 0.0
    %860 = vmatpush1.msra.mxu0 0.0
    %861 = vmatprep.subr.mxu0 0.0
    %862 = vmatpush1.msra.mxu0 0.0
    %863 = vmatprep.subr.mxu0 0.0
    %864 = vmatpush1.msra.mxu0 0.0
    %865 = vmatprep.subr.mxu0 0.0
    %866 = vmatpush1.msra.mxu0 0.0
    %867 = vmatprep.subr.mxu0 0.0
    %868 = vmatpush1.msra.mxu0 0.0
    %869 = vmatprep.subr.mxu0 0.0
    %870 = vmatpush1.msra.mxu0 0.0
    %871 = vmatprep.subr.mxu0 0.0
    %872 = vmatpush1.msra.mxu0 0.0
    %873 = vmatprep.mubr.f32.mxu0 0.0
    %874 = vmatmul.mubr.f32.gmra.mrb[0].mxu0 0.0
    %v875 = vpop.f32.mrb[0].mxu0
    %v876 = vadd.f32 %v494, %v875
    %v877 = vpop.f32.mrb[0].mxu0
    %v878 = vadd.f32 %v498, %v877
    %879 = vdwg.mxu0
    %880 = vmatprep.subr.mxu0 0.0
    %881 = vmatpush1.msra.mxu0 %v409
    %882 = vmatprep.subr.mxu0 0.0
    %883 = vmatpush1.msra.mxu0 %v412
    %884 = vmatprep.subr.mxu0 0.0
    %885 = vmatpush1.msra.mxu0 %v415
    %886 = vmatprep.subr.mxu0 0.0
    %887 = vmatpush1.msra.mxu0 %v418
    %888 = vmatprep.subr.mxu0 0.0
    %889 = vmatpush1.msra.mxu0 %v421
    %890 = vmatprep.subr.mxu0 0.0
    %891 = vmatpush1.msra.mxu0 %v424
    %892 = vmatprep.subr.mxu0 0.0
    %893 = vmatpush1.msra.mxu0 %v427
    %894 = vmatprep.subr.mxu0 0.0
    %895 = vmatpush1.msra.mxu0 %v430
    %896 = vmatprep.subr.mxu0 0.0
    %897 = vmatpush1.msra.mxu0 %v433
    %898 = vmatprep.subr.mxu0 0.0
    %899 = vmatpush1.msra.mxu0 %v436
    %900 = vmatprep.subr.mxu0 0.0
    %901 = vmatpush1.msra.mxu0 %v439
    %902 = vmatprep.subr.mxu0 0.0
    %903 = vmatpush1.msra.mxu0 %v442
    %904 = vmatprep.subr.mxu0 0.0
    %905 = vmatpush1.msra.mxu0 %v445
    %906 = vmatprep.subr.mxu0 0.0
    %907 = vmatpush1.msra.mxu0 %v448
    %908 = vmatprep.subr.mxu0 0.0
    %909 = vmatpush1.msra.mxu0 %v451
    %910 = vmatprep.subr.mxu0 0.0
    %911 = vmatpush1.msra.mxu0 %v454
    %912 = vmatprep.subr.mxu0 0.0
    %913 = vmatpush1.msra.mxu0 0.0
    %914 = vmatprep.subr.mxu0 0.0
    %915 = vmatpush1.msra.mxu0 0.0
    %916 = vmatprep.subr.mxu0 0.0
    %917 = vmatpush1.msra.mxu0 0.0
    %918 = vmatprep.subr.mxu0 0.0
    %919 = vmatpush1.msra.mxu0 0.0
    %920 = vmatprep.subr.mxu0 0.0
    %921 = vmatpush1.msra.mxu0 0.0
    %922 = vmatprep.subr.mxu0 0.0
    %923 = vmatpush1.msra.mxu0 0.0
    %924 = vmatprep.subr.mxu0 0.0
    %925 = vmatpush1.msra.mxu0 0.0
    %926 = vmatprep.subr.mxu0 0.0
    %927 = vmatpush1.msra.mxu0 0.0
    %928 = vmatprep.subr.mxu0 0.0
    %929 = vmatpush1.msra.mxu0 0.0
    %930 = vmatprep.subr.mxu0 0.0
    %931 = vmatpush1.msra.mxu0 0.0
    %932 = vmatprep.subr.mxu0 0.0
    %933 = vmatpush1.msra.mxu0 0.0
    %934 = vmatprep.subr.mxu0 0.0
    %935 = vmatpush1.msra.mxu0 0.0
    %936 = vmatprep.subr.mxu0 0.0
    %937 = vmatpush1.msra.mxu0 0.0
    %938 = vmatprep.subr.mxu0 0.0
    %939 = vmatpush1.msra.mxu0 0.0
    %940 = vmatprep.subr.mxu0 0.0
    %941 = vmatpush1.msra.mxu0 0.0
    %942 = vmatprep.subr.mxu0 0.0
    %943 = vmatpush1.msra.mxu0 0.0
    %944 = vmatprep.mubr.f32.mxu0 0.0
    %945 = vmatmul.mubr.f32.gmra.mrb[0].mxu0 0.0
    %v946 = vpop.f32.mrb[0].mxu0
    %v947 = vadd.f32 %v502, %v946
    %v948 = vpop.f32.mrb[0].mxu0
    %949 = vdwg.mxu0
    %v950 = vadd.f32 %v735, %v876
    %v951 = vxor.u32 %v950, 2147483648
    %v952 = vmul.f32 %v951, 1.442695
    %v953 = vpow.pop %v952
    %v954 = vadd.f32 %v953, 1.0
    %v955 = vrcp.pop %v954
    %v956 = vmul.f32 1.0, %v955
    %v957 = vadd.f32 %v737, %v878
    %v958 = vxor.u32 %v957, 2147483648
    %v959 = vmul.f32 %v958, 1.442695
    %v960 = vpow.pop %v959
    %v961 = vadd.f32 %v960, 1.0
    %v962 = vrcp.pop %v961
    %v963 = vmul.f32 1.0, %v962
    %v964 = vmul.f32 %v956, %v947
    %v965 = vadd.f32 %v806, %v964
    %v966 = vtanh.pop %v965
    %v967 = vsub.f32 1.0, %v963
    %v968 = vmul.f32 %v967, %v966
    %v969 = vmul.f32 %v963, 0.0
    %v970 = vadd.f32 %v968, %v969
    %971 = vmatprep.subr.mxu0 %v312
    %972 = vmatpush1.msra.mxu0 %v311
    %973 = vmatprep.subr.mxu0 %v315
    %974 = vmatpush1.msra.mxu0 %v314
    %975 = vmatprep.subr.mxu0 %v318
    %976 = vmatpush1.msra.mxu0 %v317
    %977 = vmatprep.subr.mxu0 %v321
    %978 = vmatpush1.msra.mxu0 %v320
    %979 = vmatprep.subr.mxu0 %v324
    %980 = vmatpush1.msra.mxu0 %v323
    %981 = vmatprep.subr.mxu0 %v327
    %982 = vmatpush1.msra.mxu0 %v326
    %983 = vmatprep.subr.mxu0 %v330
    %984 = vmatpush1.msra.mxu0 %v329
    %985 = vmatprep.subr.mxu0 %v333
    %986 = vmatpush1.msra.mxu0 %v332
    %987 = vmatprep.subr.mxu0 %v336
    %988 = vmatpush1.msra.mxu0 %v335
    %989 = vmatprep.subr.mxu0 %v339
    %990 = vmatpush1.msra.mxu0 %v338
    %991 = vmatprep.subr.mxu0 %v342
    %992 = vmatpush1.msra.mxu0 %v341
    %993 = vmatprep.subr.mxu0 %v345
    %994 = vmatpush1.msra.mxu0 %v344
    %995 = vmatprep.subr.mxu0 %v348
    %996 = vmatpush1.msra.mxu0 %v347
    %997 = vmatprep.subr.mxu0 %v351
    %998 = vmatpush1.msra.mxu0 %v350
    %999 = vmatprep.subr.mxu0 %v354
    %1000 = vmatpush1.msra.mxu0 %v353
    %1001 = vmatprep.subr.mxu0 %v357
    %1002 = vmatpush1.msra.mxu0 %v356
    %1003 = vmatprep.subr.mxu0 0.0
    %1004 = vmatpush1.msra.mxu0 0.0
    %1005 = vmatprep.subr.mxu0 0.0
    %1006 = vmatpush1.msra.mxu0 0.0
    %1007 = vmatprep.subr.mxu0 0.0
    %1008 = vmatpush1.msra.mxu0 0.0
    %1009 = vmatprep.subr.mxu0 0.0
    %1010 = vmatpush1.msra.mxu0 0.0
    %1011 = vmatprep.subr.mxu0 0.0
    %1012 = vmatpush1.msra.mxu0 0.0
    %1013 = vmatprep.subr.mxu0 0.0
    %1014 = vmatpush1.msra.mxu0 0.0
    %1015 = vmatprep.subr.mxu0 0.0
    %1016 = vmatpush1.msra.mxu0 0.0
    %1017 = vmatprep.subr.mxu0 0.0
    %1018 = vmatpush1.msra.mxu0 0.0
    %1019 = vmatprep.subr.mxu0 0.0
    %1020 = vmatpush1.msra.mxu0 0.0
    %1021 = vmatprep.subr.mxu0 0.0
    %1022 = vmatpush1.msra.mxu0 0.0
    %1023 = vmatprep.subr.mxu0 0.0
    %1024 = vmatpush1.msra.mxu0 0.0
    %1025 = vmatprep.subr.mxu0 0.0
    %1026 = vmatpush1.msra.mxu0 0.0
    %1027 = vmatprep.subr.mxu0 0.0
    %1028 = vmatpush1.msra.mxu0 0.0
    %1029 = vmatprep.subr.mxu0 0.0
    %1030 = vmatpush1.msra.mxu0 0.0
    %1031 = vmatprep.subr.mxu0 0.0
    %1032 = vmatpush1.msra.mxu0 0.0
    %1033 = vmatprep.subr.mxu0 0.0
    %1034 = vmatpush1.msra.mxu0 0.0
    %1035 = vmatprep.mubr.f32.mxu0 0.0
    %1036 = vmatmul.mubr.f32.gmra.mrb[0].mxu0 %v667
    %v1037 = vpop.f32.mrb[0].mxu0
    %v1038 = vadd.f32 %v460, %v1037
    %v1039 = vpop.f32.mrb[0].mxu0
    %v1040 = vadd.f32 %v464, %v1039
    %1041 = vdwg.mxu0
    %1042 = vmatprep.subr.mxu0 0.0
    %1043 = vmatpush1.msra.mxu0 %v313
    %1044 = vmatprep.subr.mxu0 0.0
    %1045 = vmatpush1.msra.mxu0 %v316
    %1046 = vmatprep.subr.mxu0 0.0
    %1047 = vmatpush1.msra.mxu0 %v319
    %1048 = vmatprep.subr.mxu0 0.0
    %1049 = vmatpush1.msra.mxu0 %v322
    %1050 = vmatprep.subr.mxu0 0.0
    %1051 = vmatpush1.msra.mxu0 %v325
    %1052 = vmatprep.subr.mxu0 0.0
    %1053 = vmatpush1.msra.mxu0 %v328
    %1054 = vmatprep.subr.mxu0 0.0
    %1055 = vmatpush1.msra.mxu0 %v331
    %1056 = vmatprep.subr.mxu0 0.0
    %1057 = vmatpush1.msra.mxu0 %v334
    %1058 = vmatprep.subr.mxu0 0.0
    %1059 = vmatpush1.msra.mxu0 %v337
    %1060 = vmatprep.subr.mxu0 0.0
    %1061 = vmatpush1.msra.mxu0 %v340
    %1062 = vmatprep.subr.mxu0 0.0
    %1063 = vmatpush1.msra.mxu0 %v343
    %1064 = vmatprep.subr.mxu0 0.0
    %1065 = vmatpush1.msra.mxu0 %v346
    %1066 = vmatprep.subr.mxu0 0.0
    %1067 = vmatpush1.msra.mxu0 %v349
    %1068 = vmatprep.subr.mxu0 0.0
    %1069 = vmatpush1.msra.mxu0 %v352
    %1070 = vmatprep.subr.mxu0 0.0
    %1071 = vmatpush1.msra.mxu0 %v355
    %1072 = vmatprep.subr.mxu0 0.0
    %1073 = vmatpush1.msra.mxu0 %v358
    %1074 = vmatprep.subr.mxu0 0.0
    %1075 = vmatpush1.msra.mxu0 0.0
    %1076 = vmatprep.subr.mxu0 0.0
    %1077 = vmatpush1.msra.mxu0 0.0
    %1078 = vmatprep.subr.mxu0 0.0
    %1079 = vmatpush1.msra.mxu0 0.0
    %1080 = vmatprep.subr.mxu0 0.0
    %1081 = vmatpush1.msra.mxu0 0.0
    %1082 = vmatprep.subr.mxu0 0.0
    %1083 = vmatpush1.msra.mxu0 0.0
    %1084 = vmatprep.subr.mxu0 0.0
    %1085 = vmatpush1.msra.mxu0 0.0
    %1086 = vmatprep.subr.mxu0 0.0
    %1087 = vmatpush1.msra.mxu0 0.0
    %1088 = vmatprep.subr.mxu0 0.0
    %1089 = vmatpush1.msra.mxu0 0.0
    %1090 = vmatprep.subr.mxu0 0.0
    %1091 = vmatpush1.msra.mxu0 0.0
    %1092 = vmatprep.subr.mxu0 0.0
    %1093 = vmatpush1.msra.mxu0 0.0
    %1094 = vmatprep.subr.mxu0 0.0
    %1095 = vmatpush1.msra.mxu0 0.0
    %1096 = vmatprep.subr.mxu0 0.0
    %1097 = vmatpush1.msra.mxu0 0.0
    %1098 = vmatprep.subr.mxu0 0.0
    %1099 = vmatpush1.msra.mxu0 0.0
    %1100 = vmatprep.subr.mxu0 0.0
    %1101 = vmatpush1.msra.mxu0 0.0
    %1102 = vmatprep.subr.mxu0 0.0
    %1103 = vmatpush1.msra.mxu0 0.0
    %1104 = vmatprep.subr.mxu0 0.0
    %1105 = vmatpush1.msra.mxu0 0.0
    %1106 = vmatprep.mubr.f32.mxu0 0.0
    %1107 = vmatmul.mubr.f32.gmra.mrb[0].mxu0 %v667
    %v1108 = vpop.f32.mrb[0].mxu0
    %v1109 = vadd.f32 %v468, %v1108
    %v1110 = vpop.f32.mrb[0].mxu0
    %1111 = vdwg.mxu0
    %v1113 = vrot.slane %v1038, 6
    %v1115 = vadd.f32 %v226, %v1113
    %v1116 = vxor.u32 %v1115, 2147483648
    %v1117 = vmul.f32 %v1116, 1.442695
    %v1118 = vpow.pop %v1117
    %v1119 = vadd.f32 %v1118, 1.0
    %v1120 = vrcp.pop %v1119
    %v1121 = vmul.f32 1.0, %v1120
    %v1123 = vrot.slane %v1040, 6
    %v1125 = vadd.f32 %v228, %v1123
    %v1126 = vxor.u32 %v1125, 2147483648
    %v1127 = vmul.f32 %v1126, 1.442695
    %v1128 = vpow.pop %v1127
    %v1129 = vadd.f32 %v1128, 1.0
    %v1130 = vrcp.pop %v1129
    %v1131 = vmul.f32 1.0, %v1130
    %v1133 = vrot.slane %v1109, 6
    %v1135 = vmul.f32 %v1121, %v1133
    %v1136 = vadd.f32 %v303, %v1135
    %v1137 = vtanh.pop %v1136
    %v1138 = vsub.f32 1.0, %v1131
    %v1139 = vmul.f32 %v1138, %v1137
    %v1141 = vrot.slane %v667, 6
    %v1143 = vmul.f32 %v1131, %v1141
    %v1144 = vadd.f32 %v1139, %v1143
    %v1146 = vrot.slane %v1144, 2
    %1148 = vmatprep.subr.mxu0 %v360
    %1149 = vmatpush1.msra.mxu0 %v359
    %1150 = vmatprep.subr.mxu0 %v363
    %1151 = vmatpush1.msra.mxu0 %v362
    %1152 = vmatprep.subr.mxu0 %v366
    %1153 = vmatpush1.msra.mxu0 %v365
    %1154 = vmatprep.subr.mxu0 %v369
    %1155 = vmatpush1.msra.mxu0 %v368
    %1156 = vmatprep.subr.mxu0 %v372
    %1157 = vmatpush1.msra.mxu0 %v371
    %1158 = vmatprep.subr.mxu0 %v375
    %1159 = vmatpush1.msra.mxu0 %v374
    %1160 = vmatprep.subr.mxu0 %v378
    %1161 = vmatpush1.msra.mxu0 %v377
    %1162 = vmatprep.subr.mxu0 %v381
    %1163 = vmatpush1.msra.mxu0 %v380
    %1164 = vmatprep.subr.mxu0 %v384
    %1165 = vmatpush1.msra.mxu0 %v383
    %1166 = vmatprep.subr.mxu0 %v387
    %1167 = vmatpush1.msra.mxu0 %v386
    %1168 = vmatprep.subr.mxu0 %v390
    %1169 = vmatpush1.msra.mxu0 %v389
    %1170 = vmatprep.subr.mxu0 %v393
    %1171 = vmatpush1.msra.mxu0 %v392
    %1172 = vmatprep.subr.mxu0 %v396
    %1173 = vmatpush1.msra.mxu0 %v395
    %1174 = vmatprep.subr.mxu0 %v399
    %1175 = vmatpush1.msra.mxu0 %v398
    %1176 = vmatprep.subr.mxu0 %v402
    %1177 = vmatpush1.msra.mxu0 %v401
    %1178 = vmatprep.subr.mxu0 %v405
    %1179 = vmatpush1.msra.mxu0 %v404
    %1180 = vmatprep.subr.mxu0 0.0
    %1181 = vmatpush1.msra.mxu0 0.0
    %1182 = vmatprep.subr.mxu0 0.0
    %1183 = vmatpush1.msra.mxu0 0.0
    %1184 = vmatprep.subr.mxu0 0.0
    %1185 = vmatpush1.msra.mxu0 0.0
    %1186 = vmatprep.subr.mxu0 0.0
    %1187 = vmatpush1.msra.mxu0 0.0
    %1188 = vmatprep.subr.mxu0 0.0
    %1189 = vmatpush1.msra.mxu0 0.0
    %1190 = vmatprep.subr.mxu0 0.0
    %1191 = vmatpush1.msra.mxu0 0.0
    %1192 = vmatprep.subr.mxu0 0.0
    %1193 = vmatpush1.msra.mxu0 0.0
    %1194 = vmatprep.subr.mxu0 0.0
    %1195 = vmatpush1.msra.mxu0 0.0
    %1196 = vmatprep.subr.mxu0 0.0
    %1197 = vmatpush1.msra.mxu0 0.0
    %1198 = vmatprep.subr.mxu0 0.0
    %1199 = vmatpush1.msra.mxu0 0.0
    %1200 = vmatprep.subr.mxu0 0.0
    %1201 = vmatpush1.msra.mxu0 0.0
    %1202 = vmatprep.subr.mxu0 0.0
    %1203 = vmatpush1.msra.mxu0 0.0
    %1204 = vmatprep.subr.mxu0 0.0
    %1205 = vmatpush1.msra.mxu0 0.0
    %1206 = vmatprep.subr.mxu0 0.0
    %1207 = vmatpush1.msra.mxu0 0.0
    %1208 = vmatprep.subr.mxu0 0.0
    %1209 = vmatpush1.msra.mxu0 0.0
    %1210 = vmatprep.subr.mxu0 0.0
    %1211 = vmatpush1.msra.mxu0 0.0
    %1212 = vmatprep.mubr.f32.mxu0 0.0
    %1213 = vmatmul.mubr.f32.gmra.mrb[0].mxu0 %v1146
    %v1214 = vpop.f32.mrb[0].mxu0
    %v1215 = vadd.f32 %v477, %v1214
    %v1216 = vpop.f32.mrb[0].mxu0
    %v1217 = vadd.f32 %v481, %v1216
    %1218 = vdwg.mxu0
    %1219 = vmatprep.subr.mxu0 0.0
    %1220 = vmatpush1.msra.mxu0 %v361
    %1221 = vmatprep.subr.mxu0 0.0
    %1222 = vmatpush1.msra.mxu0 %v364
    %1223 = vmatprep.subr.mxu0 0.0
    %1224 = vmatpush1.msra.mxu0 %v367
    %1225 = vmatprep.subr.mxu0 0.0
    %1226 = vmatpush1.msra.mxu0 %v370
    %1227 = vmatprep.subr.mxu0 0.0
    %1228 = vmatpush1.msra.mxu0 %v373
    %1229 = vmatprep.subr.mxu0 0.0
    %1230 = vmatpush1.msra.mxu0 %v376
    %1231 = vmatprep.subr.mxu0 0.0
    %1232 = vmatpush1.msra.mxu0 %v379
    %1233 = vmatprep.subr.mxu0 0.0
    %1234 = vmatpush1.msra.mxu0 %v382
    %1235 = vmatprep.subr.mxu0 0.0
    %1236 = vmatpush1.msra.mxu0 %v385
    %1237 = vmatprep.subr.mxu0 0.0
    %1238 = vmatpush1.msra.mxu0 %v388
    %1239 = vmatprep.subr.mxu0 0.0
    %1240 = vmatpush1.msra.mxu0 %v391
    %1241 = vmatprep.subr.mxu0 0.0
    %1242 = vmatpush1.msra.mxu0 %v394
    %1243 = vmatprep.subr.mxu0 0.0
    %1244 = vmatpush1.msra.mxu0 %v397
    %1245 = vmatprep.subr.mxu0 0.0
    %1246 = vmatpush1.msra.mxu0 %v400
    %1247 = vmatprep.subr.mxu0 0.0
    %1248 = vmatpush1.msra.mxu0 %v403
    %1249 = vmatprep.subr.mxu0 0.0
    %1250 = vmatpush1.msra.mxu0 %v406
    %1251 = vmatprep.subr.mxu0 0.0
    %1252 = vmatpush1.msra.mxu0 0.0
    %1253 = vmatprep.subr.mxu0 0.0
    %1254 = vmatpush1.msra.mxu0 0.0
    %1255 = vmatprep.subr.mxu0 0.0
    %1256 = vmatpush1.msra.mxu0 0.0
    %1257 = vmatprep.subr.mxu0 0.0
    %1258 = vmatpush1.msra.mxu0 0.0
    %1259 = vmatprep.subr.mxu0 0.0
    %1260 = vmatpush1.msra.mxu0 0.0
    %1261 = vmatprep.subr.mxu0 0.0
    %1262 = vmatpush1.msra.mxu0 0.0
    %1263 = vmatprep.subr.mxu0 0.0
    %1264 = vmatpush1.msra.mxu0 0.0
    %1265 = vmatprep.subr.mxu0 0.0
    %1266 = vmatpush1.msra.mxu0 0.0
    %1267 = vmatprep.subr.mxu0 0.0
    %1268 = vmatpush1.msra.mxu0 0.0
    %1269 = vmatprep.subr.mxu0 0.0
    %1270 = vmatpush1.msra.mxu0 0.0
    %1271 = vmatprep.subr.mxu0 0.0
    %1272 = vmatpush1.msra.mxu0 0.0
    %1273 = vmatprep.subr.mxu0 0.0
    %1274 = vmatpush1.msra.mxu0 0.0
    %1275 = vmatprep.subr.mxu0 0.0
    %1276 = vmatpush1.msra.mxu0 0.0
    %1277 = vmatprep.subr.mxu0 0.0
    %1278 = vmatpush1.msra.mxu0 0.0
    %1279 = vmatprep.subr.mxu0 0.0
    %1280 = vmatpush1.msra.mxu0 0.0
    %1281 = vmatprep.subr.mxu0 0.0
    %1282 = vmatpush1.msra.mxu0 0.0
    %1283 = vmatprep.mubr.f32.mxu0 0.0
    %1284 = vmatmul.mubr.f32.gmra.mrb[0].mxu0 %v1146
    %v1285 = vpop.f32.mrb[0].mxu0
    %v1286 = vadd.f32 %v485, %v1285
    %v1287 = vpop.f32.mrb[0].mxu0
    %1288 = vdwg.mxu0
    %1289 = vmatprep.subr.mxu0 %v408
    %1290 = vmatpush1.msra.mxu0 %v407
    %1291 = vmatprep.subr.mxu0 %v411
    %1292 = vmatpush1.msra.mxu0 %v410
    %1293 = vmatprep.subr.mxu0 %v414
    %1294 = vmatpush1.msra.mxu0 %v413
    %1295 = vmatprep.subr.mxu0 %v417
    %1296 = vmatpush1.msra.mxu0 %v416
    %1297 = vmatprep.subr.mxu0 %v420
    %1298 = vmatpush1.msra.mxu0 %v419
    %1299 = vmatprep.subr.mxu0 %v423
    %1300 = vmatpush1.msra.mxu0 %v422
    %1301 = vmatprep.subr.mxu0 %v426
    %1302 = vmatpush1.msra.mxu0 %v425
    %1303 = vmatprep.subr.mxu0 %v429
    %1304 = vmatpush1.msra.mxu0 %v428
    %1305 = vmatprep.subr.mxu0 %v432
    %1306 = vmatpush1.msra.mxu0 %v431
    %1307 = vmatprep.subr.mxu0 %v435
    %1308 = vmatpush1.msra.mxu0 %v434
    %1309 = vmatprep.subr.mxu0 %v438
    %1310 = vmatpush1.msra.mxu0 %v437
    %1311 = vmatprep.subr.mxu0 %v441
    %1312 = vmatpush1.msra.mxu0 %v440
    %1313 = vmatprep.subr.mxu0 %v444
    %1314 = vmatpush1.msra.mxu0 %v443
    %1315 = vmatprep.subr.mxu0 %v447
    %1316 = vmatpush1.msra.mxu0 %v446
    %1317 = vmatprep.subr.mxu0 %v450
    %1318 = vmatpush1.msra.mxu0 %v449
    %1319 = vmatprep.subr.mxu0 %v453
    %1320 = vmatpush1.msra.mxu0 %v452
    %1321 = vmatprep.subr.mxu0 0.0
    %1322 = vmatpush1.msra.mxu0 0.0
    %1323 = vmatprep.subr.mxu0 0.0
    %1324 = vmatpush1.msra.mxu0 0.0
    %1325 = vmatprep.subr.mxu0 0.0
    %1326 = vmatpush1.msra.mxu0 0.0
    %1327 = vmatprep.subr.mxu0 0.0
    %1328 = vmatpush1.msra.mxu0 0.0
    %1329 = vmatprep.subr.mxu0 0.0
    %1330 = vmatpush1.msra.mxu0 0.0
    %1331 = vmatprep.subr.mxu0 0.0
    %1332 = vmatpush1.msra.mxu0 0.0
    %1333 = vmatprep.subr.mxu0 0.0
    %1334 = vmatpush1.msra.mxu0 0.0
    %1335 = vmatprep.subr.mxu0 0.0
    %1336 = vmatpush1.msra.mxu0 0.0
    %1337 = vmatprep.subr.mxu0 0.0
    %1338 = vmatpush1.msra.mxu0 0.0
    %1339 = vmatprep.subr.mxu0 0.0
    %1340 = vmatpush1.msra.mxu0 0.0
    %1341 = vmatprep.subr.mxu0 0.0
    %1342 = vmatpush1.msra.mxu0 0.0
    %1343 = vmatprep.subr.mxu0 0.0
    %1344 = vmatpush1.msra.mxu0 0.0
    %1345 = vmatprep.subr.mxu0 0.0
    %1346 = vmatpush1.msra.mxu0 0.0
    %1347 = vmatprep.subr.mxu0 0.0
    %1348 = vmatpush1.msra.mxu0 0.0
    %1349 = vmatprep.subr.mxu0 0.0
    %1350 = vmatpush1.msra.mxu0 0.0
    %1351 = vmatprep.subr.mxu0 0.0
    %1352 = vmatpush1.msra.mxu0 0.0
    %1353 = vmatprep.mubr.f32.mxu0 0.0
    %1354 = vmatmul.mubr.f32.gmra.mrb[0].mxu0 %v970
    %v1355 = vpop.f32.mrb[0].mxu0
    %v1356 = vadd.f32 %v494, %v1355
    %v1357 = vpop.f32.mrb[0].mxu0
    %v1358 = vadd.f32 %v498, %v1357
    %1359 = vdwg.mxu0
    %1360 = vmatprep.subr.mxu0 0.0
    %1361 = vmatpush1.msra.mxu0 %v409
    %1362 = vmatprep.subr.mxu0 0.0
    %1363 = vmatpush1.msra.mxu0 %v412
    %1364 = vmatprep.subr.mxu0 0.0
    %1365 = vmatpush1.msra.mxu0 %v415
    %1366 = vmatprep.subr.mxu0 0.0
    %1367 = vmatpush1.msra.mxu0 %v418
    %1368 = vmatprep.subr.mxu0 0.0
    %1369 = vmatpush1.msra.mxu0 %v421
    %1370 = vmatprep.subr.mxu0 0.0
    %1371 = vmatpush1.msra.mxu0 %v424
    %1372 = vmatprep.subr.mxu0 0.0
    %1373 = vmatpush1.msra.mxu0 %v427
    %1374 = vmatprep.subr.mxu0 0.0
    %1375 = vmatpush1.msra.mxu0 %v430
    %1376 = vmatprep.subr.mxu0 0.0
    %1377 = vmatpush1.msra.mxu0 %v433
    %1378 = vmatprep.subr.mxu0 0.0
    %1379 = vmatpush1.msra.mxu0 %v436
    %1380 = vmatprep.subr.mxu0 0.0
    %1381 = vmatpush1.msra.mxu0 %v439
    %1382 = vmatprep.subr.mxu0 0.0
    %1383 = vmatpush1.msra.mxu0 %v442
    %1384 = vmatprep.subr.mxu0 0.0
    %1385 = vmatpush1.msra.mxu0 %v445
    %1386 = vmatprep.subr.mxu0 0.0
    %1387 = vmatpush1.msra.mxu0 %v448
    %1388 = vmatprep.subr.mxu0 0.0
    %1389 = vmatpush1.msra.mxu0 %v451
    %1390 = vmatprep.subr.mxu0 0.0
    %1391 = vmatpush1.msra.mxu0 %v454
    %1392 = vmatprep.subr.mxu0 0.0
    %1393 = vmatpush1.msra.mxu0 0.0
    %1394 = vmatprep.subr.mxu0 0.0
    %1395 = vmatpush1.msra.mxu0 0.0
    %1396 = vmatprep.subr.mxu0 0.0
    %1397 = vmatpush1.msra.mxu0 0.0
    %1398 = vmatprep.subr.mxu0 0.0
    %1399 = vmatpush1.msra.mxu0 0.0
    %1400 = vmatprep.subr.mxu0 0.0
    %1401 = vmatpush1.msra.mxu0 0.0
    %1402 = vmatprep.subr.mxu0 0.0
    %1403 = vmatpush1.msra.mxu0 0.0
    %1404 = vmatprep.subr.mxu0 0.0
    %1405 = vmatpush1.msra.mxu0 0.0
    %1406 = vmatprep.subr.mxu0 0.0
    %1407 = vmatpush1.msra.mxu0 0.0
    %1408 = vmatprep.subr.mxu0 0.0
    %1409 = vmatpush1.msra.mxu0 0.0
    %1410 = vmatprep.subr.mxu0 0.0
    %1411 = vmatpush1.msra.mxu0 0.0
    %1412 = vmatprep.subr.mxu0 0.0
    %1413 = vmatpush1.msra.mxu0 0.0
    %1414 = vmatprep.subr.mxu0 0.0
    %1415 = vmatpush1.msra.mxu0 0.0
    %1416 = vmatprep.subr.mxu0 0.0
    %1417 = vmatpush1.msra.mxu0 0.0
    %1418 = vmatprep.subr.mxu0 0.0
    %1419 = vmatpush1.msra.mxu0 0.0
    %1420 = vmatprep.subr.mxu0 0.0
    %1421 = vmatpush1.msra.mxu0 0.0
    %1422 = vmatprep.subr.mxu0 0.0
    %1423 = vmatpush1.msra.mxu0 0.0
    %1424 = vmatprep.mubr.f32.mxu0 0.0
    %1425 = vmatmul.mubr.f32.gmra.mrb[0].mxu0 %v970
    %v1426 = vpop.f32.mrb[0].mxu0
    %v1427 = vadd.f32 %v502, %v1426
    %v1428 = vpop.f32.mrb[0].mxu0
    %1429 = vdwg.mxu0
    %v1430 = vadd.f32 %v1215, %v1356
    %v1431 = vxor.u32 %v1430, 2147483648
    %v1432 = vmul.f32 %v1431, 1.442695
    %v1433 = vpow.pop %v1432
    %v1434 = vadd.f32 %v1433, 1.0
    %v1435 = vrcp.pop %v1434
    %v1436 = vmul.f32 1.0, %v1435
    %v1437 = vadd.f32 %v1217, %v1358
    %v1438 = vxor.u32 %v1437, 2147483648
    %v1439 = vmul.f32 %v1438, 1.442695
    %v1440 = vpow.pop %v1439
    %v1441 = vadd.f32 %v1440, 1.0
    %v1442 = vrcp.pop %v1441
    %v1443 = vmul.f32 1.0, %v1442
    %v1444 = vmul.f32 %v1436, %v1427
    %v1445 = vadd.f32 %v1286, %v1444
    %v1446 = vtanh.pop %v1445
    %v1447 = vsub.f32 1.0, %v1443
    %v1448 = vmul.f32 %v1447, %v1446
    %v1449 = vmul.f32 %v1443, %v970
    %v1450 = vadd.f32 %v1448, %v1449
    %1451 = vmatprep.subr.mxu0 %v312
    %1452 = vmatpush1.msra.mxu0 %v311
    %1453 = vmatprep.subr.mxu0 %v315
    %1454 = vmatpush1.msra.mxu0 %v314
    %1455 = vmatprep.subr.mxu0 %v318
    %1456 = vmatpush1.msra.mxu0 %v317
    %1457 = vmatprep.subr.mxu0 %v321
    %1458 = vmatpush1.msra.mxu0 %v320
    %1459 = vmatprep.subr.mxu0 %v324
    %1460 = vmatpush1.msra.mxu0 %v323
    %1461 = vmatprep.subr.mxu0 %v327
    %1462 = vmatpush1.msra.mxu0 %v326
    %1463 = vmatprep.subr.mxu0 %v330
    %1464 = vmatpush1.msra.mxu0 %v329
    %1465 = vmatprep.subr.mxu0 %v333
    %1466 = vmatpush1.msra.mxu0 %v332
    %1467 = vmatprep.subr.mxu0 %v336
    %1468 = vmatpush1.msra.mxu0 %v335
    %1469 = vmatprep.subr.mxu0 %v339
    %1470 = vmatpush1.msra.mxu0 %v338
    %1471 = vmatprep.subr.mxu0 %v342
    %1472 = vmatpush1.msra.mxu0 %v341
    %1473 = vmatprep.subr.mxu0 %v345
    %1474 = vmatpush1.msra.mxu0 %v344
    %1475 = vmatprep.subr.mxu0 %v348
    %1476 = vmatpush1.msra.mxu0 %v347
    %1477 = vmatprep.subr.mxu0 %v351
    %1478 = vmatpush1.msra.mxu0 %v350
    %1479 = vmatprep.subr.mxu0 %v354
    %1480 = vmatpush1.msra.mxu0 %v353
    %1481 = vmatprep.subr.mxu0 %v357
    %1482 = vmatpush1.msra.mxu0 %v356
    %1483 = vmatprep.subr.mxu0 0.0
    %1484 = vmatpush1.msra.mxu0 0.0
    %1485 = vmatprep.subr.mxu0 0.0
    %1486 = vmatpush1.msra.mxu0 0.0
    %1487 = vmatprep.subr.mxu0 0.0
    %1488 = vmatpush1.msra.mxu0 0.0
    %1489 = vmatprep.subr.mxu0 0.0
    %1490 = vmatpush1.msra.mxu0 0.0
    %1491 = vmatprep.subr.mxu0 0.0
    %1492 = vmatpush1.msra.mxu0 0.0
    %1493 = vmatprep.subr.mxu0 0.0
    %1494 = vmatpush1.msra.mxu0 0.0
    %1495 = vmatprep.subr.mxu0 0.0
    %1496 = vmatpush1.msra.mxu0 0.0
    %1497 = vmatprep.subr.mxu0 0.0
    %1498 = vmatpush1.msra.mxu0 0.0
    %1499 = vmatprep.subr.mxu0 0.0
    %1500 = vmatpush1.msra.mxu0 0.0
    %1501 = vmatprep.subr.mxu0 0.0
    %1502 = vmatpush1.msra.mxu0 0.0
    %1503 = vmatprep.subr.mxu0 0.0
    %1504 = vmatpush1.msra.mxu0 0.0
    %1505 = vmatprep.subr.mxu0 0.0
    %1506 = vmatpush1.msra.mxu0 0.0
    %1507 = vmatprep.subr.mxu0 0.0
    %1508 = vmatpush1.msra.mxu0 0.0
    %1509 = vmatprep.subr.mxu0 0.0
    %1510 = vmatpush1.msra.mxu0 0.0
    %1511 = vmatprep.subr.mxu0 0.0
    %1512 = vmatpush1.msra.mxu0 0.0
    %1513 = vmatprep.subr.mxu0 0.0
    %1514 = vmatpush1.msra.mxu0 0.0
    %1515 = vmatprep.mubr.f32.mxu0 0.0
    %1516 = vmatmul.mubr.f32.gmra.mrb[0].mxu0 %v1146
    %v1517 = vpop.f32.mrb[0].mxu0
    %v1518 = vadd.f32 %v460, %v1517
    %v1519 = vpop.f32.mrb[0].mxu0
    %v1520 = vadd.f32 %v464, %v1519
    %1521 = vdwg.mxu0
    %1522 = vmatprep.subr.mxu0 0.0
    %1523 = vmatpush1.msra.mxu0 %v313
    %1524 = vmatprep.subr.mxu0 0.0
    %1525 = vmatpush1.msra.mxu0 %v316
    %1526 = vmatprep.subr.mxu0 0.0
    %1527 = vmatpush1.msra.mxu0 %v319
    %1528 = vmatprep.subr.mxu0 0.0
    %1529 = vmatpush1.msra.mxu0 %v322
    %1530 = vmatprep.subr.mxu0 0.0
    %1531 = vmatpush1.msra.mxu0 %v325
    %1532 = vmatprep.subr.mxu0 0.0
    %1533 = vmatpush1.msra.mxu0 %v328
    %1534 = vmatprep.subr.mxu0 0.0
    %1535 = vmatpush1.msra.mxu0 %v331
    %1536 = vmatprep.subr.mxu0 0.0
    %1537 = vmatpush1.msra.mxu0 %v334
    %1538 = vmatprep.subr.mxu0 0.0
    %1539 = vmatpush1.msra.mxu0 %v337
    %1540 = vmatprep.subr.mxu0 0.0
    %1541 = vmatpush1.msra.mxu0 %v340
    %1542 = vmatprep.subr.mxu0 0.0
    %1543 = vmatpush1.msra.mxu0 %v343
    %1544 = vmatprep.subr.mxu0 0.0
    %1545 = vmatpush1.msra.mxu0 %v346
    %1546 = vmatprep.subr.mxu0 0.0
    %1547 = vmatpush1.msra.mxu0 %v349
    %1548 = vmatprep.subr.mxu0 0.0
    %1549 = vmatpush1.msra.mxu0 %v352
    %1550 = vmatprep.subr.mxu0 0.0
    %1551 = vmatpush1.msra.mxu0 %v355
    %1552 = vmatprep.subr.mxu0 0.0
    %1553 = vmatpush1.msra.mxu0 %v358
    %1554 = vmatprep.subr.mxu0 0.0
    %1555 = vmatpush1.msra.mxu0 0.0
    %1556 = vmatprep.subr.mxu0 0.0
    %1557 = vmatpush1.msra.mxu0 0.0
    %1558 = vmatprep.subr.mxu0 0.0
    %1559 = vmatpush1.msra.mxu0 0.0
    %1560 = vmatprep.subr.mxu0 0.0
    %1561 = vmatpush1.msra.mxu0 0.0
    %1562 = vmatprep.subr.mxu0 0.0
    %1563 = vmatpush1.msra.mxu0 0.0
    %1564 = vmatprep.subr.mxu0 0.0
    %1565 = vmatpush1.msra.mxu0 0.0
    %1566 = vmatprep.subr.mxu0 0.0
    %1567 = vmatpush1.msra.mxu0 0.0
    %1568 = vmatprep.subr.mxu0 0.0
    %1569 = vmatpush1.msra.mxu0 0.0
    %1570 = vmatprep.subr.mxu0 0.0
    %1571 = vmatpush1.msra.mxu0 0.0
    %1572 = vmatprep.subr.mxu0 0.0
    %1573 = vmatpush1.msra.mxu0 0.0
    %1574 = vmatprep.subr.mxu0 0.0
    %1575 = vmatpush1.msra.mxu0 0.0
    %1576 = vmatprep.subr.mxu0 0.0
    %1577 = vmatpush1.msra.mxu0 0.0
    %1578 = vmatprep.subr.mxu0 0.0
    %1579 = vmatpush1.msra.mxu0 0.0
    %1580 = vmatprep.subr.mxu0 0.0
    %1581 = vmatpush1.msra.mxu0 0.0
    %1582 = vmatprep.subr.mxu0 0.0
    %1583 = vmatpush1.msra.mxu0 0.0
    %1584 = vmatprep.subr.mxu0 0.0
    %1585 = vmatpush1.msra.mxu0 0.0
    %1586 = vmatprep.mubr.f32.mxu0 0.0
    %1587 = vmatmul.mubr.f32.gmra.mrb[0].mxu0 %v1146
    %v1588 = vpop.f32.mrb[0].mxu0
    %v1589 = vadd.f32 %v468, %v1588
    %v1590 = vpop.f32.mrb[0].mxu0
    %1591 = vdwg.mxu0
    %v1593 = vrot.slane %v1518, 4
    %v1595 = vadd.f32 %v226, %v1593
    %v1596 = vxor.u32 %v1595, 2147483648
    %v1597 = vmul.f32 %v1596, 1.442695
    %v1598 = vpow.pop %v1597
    %v1599 = vadd.f32 %v1598, 1.0
    %v1600 = vrcp.pop %v1599
    %v1601 = vmul.f32 1.0, %v1600
    %v1603 = vrot.slane %v1520, 4
    %v1605 = vadd.f32 %v228, %v1603
    %v1606 = vxor.u32 %v1605, 2147483648
    %v1607 = vmul.f32 %v1606, 1.442695
    %v1608 = vpow.pop %v1607
    %v1609 = vadd.f32 %v1608, 1.0
    %v1610 = vrcp.pop %v1609
    %v1611 = vmul.f32 1.0, %v1610
    %v1613 = vrot.slane %v1589, 4
    %v1615 = vmul.f32 %v1601, %v1613
    %v1616 = vadd.f32 %v303, %v1615
    %v1617 = vtanh.pop %v1616
    %v1618 = vsub.f32 1.0, %v1611
    %v1619 = vmul.f32 %v1618, %v1617
    %v1620 = vrot.slane %v1144, 6
    %v1622 = vmul.f32 %v1611, %v1620
    %v1623 = vadd.f32 %v1619, %v1622
    %v1625 = vrot.slane %v1623, 4
    %1627 = vmatprep.subr.mxu0 %v360
    %1628 = vmatpush1.msra.mxu0 %v359
    %1629 = vmatprep.subr.mxu0 %v363
    %1630 = vmatpush1.msra.mxu0 %v362
    %1631 = vmatprep.subr.mxu0 %v366
    %1632 = vmatpush1.msra.mxu0 %v365
    %1633 = vmatprep.subr.mxu0 %v369
    %1634 = vmatpush1.msra.mxu0 %v368
    %1635 = vmatprep.subr.mxu0 %v372
    %1636 = vmatpush1.msra.mxu0 %v371
    %1637 = vmatprep.subr.mxu0 %v375
    %1638 = vmatpush1.msra.mxu0 %v374
    %1639 = vmatprep.subr.mxu0 %v378
    %1640 = vmatpush1.msra.mxu0 %v377
    %1641 = vmatprep.subr.mxu0 %v381
    %1642 = vmatpush1.msra.mxu0 %v380
    %1643 = vmatprep.subr.mxu0 %v384
    %1644 = vmatpush1.msra.mxu0 %v383
    %1645 = vmatprep.subr.mxu0 %v387
    %1646 = vmatpush1.msra.mxu0 %v386
    %1647 = vmatprep.subr.mxu0 %v390
    %1648 = vmatpush1.msra.mxu0 %v389
    %1649 = vmatprep.subr.mxu0 %v393
    %1650 = vmatpush1.msra.mxu0 %v392
    %1651 = vmatprep.subr.mxu0 %v396
    %1652 = vmatpush1.msra.mxu0 %v395
    %1653 = vmatprep.subr.mxu0 %v399
    %1654 = vmatpush1.msra.mxu0 %v398
    %1655 = vmatprep.subr.mxu0 %v402
    %1656 = vmatpush1.msra.mxu0 %v401
    %1657 = vmatprep.subr.mxu0 %v405
    %1658 = vmatpush1.msra.mxu0 %v404
    %1659 = vmatprep.subr.mxu0 0.0
    %1660 = vmatpush1.msra.mxu0 0.0
    %1661 = vmatprep.subr.mxu0 0.0
    %1662 = vmatpush1.msra.mxu0 0.0
    %1663 = vmatprep.subr.mxu0 0.0
    %1664 = vmatpush1.msra.mxu0 0.0
    %1665 = vmatprep.subr.mxu0 0.0
    %1666 = vmatpush1.msra.mxu0 0.0
    %1667 = vmatprep.subr.mxu0 0.0
    %1668 = vmatpush1.msra.mxu0 0.0
    %1669 = vmatprep.subr.mxu0 0.0
    %1670 = vmatpush1.msra.mxu0 0.0
    %1671 = vmatprep.subr.mxu0 0.0
    %1672 = vmatpush1.msra.mxu0 0.0
    %1673 = vmatprep.subr.mxu0 0.0
    %1674 = vmatpush1.msra.mxu0 0.0
    %1675 = vmatprep.subr.mxu0 0.0
    %1676 = vmatpush1.msra.mxu0 0.0
    %1677 = vmatprep.subr.mxu0 0.0
    %1678 = vmatpush1.msra.mxu0 0.0
    %1679 = vmatprep.subr.mxu0 0.0
    %1680 = vmatpush1.msra.mxu0 0.0
    %1681 = vmatprep.subr.mxu0 0.0
    %1682 = vmatpush1.msra.mxu0 0.0
    %1683 = vmatprep.subr.mxu0 0.0
    %1684 = vmatpush1.msra.mxu0 0.0
    %1685 = vmatprep.subr.mxu0 0.0
    %1686 = vmatpush1.msra.mxu0 0.0
    %1687 = vmatprep.subr.mxu0 0.0
    %1688 = vmatpush1.msra.mxu0 0.0
    %1689 = vmatprep.subr.mxu0 0.0
    %1690 = vmatpush1.msra.mxu0 0.0
    %1691 = vmatprep.mubr.f32.mxu0 0.0
    %1692 = vmatmul.mubr.f32.gmra.mrb[0].mxu0 %v1625
    %v1693 = vpop.f32.mrb[0].mxu0
    %v1694 = vadd.f32 %v477, %v1693
    %v1695 = vpop.f32.mrb[0].mxu0
    %v1696 = vadd.f32 %v481, %v1695
    %1697 = vdwg.mxu0
    %1698 = vmatprep.subr.mxu0 0.0
    %1699 = vmatpush1.msra.mxu0 %v361
    %1700 = vmatprep.subr.mxu0 0.0
    %1701 = vmatpush1.msra.mxu0 %v364
    %1702 = vmatprep.subr.mxu0 0.0
    %1703 = vmatpush1.msra.mxu0 %v367
    %1704 = vmatprep.subr.mxu0 0.0
    %1705 = vmatpush1.msra.mxu0 %v370
    %1706 = vmatprep.subr.mxu0 0.0
    %1707 = vmatpush1.msra.mxu0 %v373
    %1708 = vmatprep.subr.mxu0 0.0
    %1709 = vmatpush1.msra.mxu0 %v376
    %1710 = vmatprep.subr.mxu0 0.0
    %1711 = vmatpush1.msra.mxu0 %v379
    %1712 = vmatprep.subr.mxu0 0.0
    %1713 = vmatpush1.msra.mxu0 %v382
    %1714 = vmatprep.subr.mxu0 0.0
    %1715 = vmatpush1.msra.mxu0 %v385
    %1716 = vmatprep.subr.mxu0 0.0
    %1717 = vmatpush1.msra.mxu0 %v388
    %1718 = vmatprep.subr.mxu0 0.0
    %1719 = vmatpush1.msra.mxu0 %v391
    %1720 = vmatprep.subr.mxu0 0.0
    %1721 = vmatpush1.msra.mxu0 %v394
    %1722 = vmatprep.subr.mxu0 0.0
    %1723 = vmatpush1.msra.mxu0 %v397
    %1724 = vmatprep.subr.mxu0 0.0
    %1725 = vmatpush1.msra.mxu0 %v400
    %1726 = vmatprep.subr.mxu0 0.0
    %1727 = vmatpush1.msra.mxu0 %v403
    %1728 = vmatprep.subr.mxu0 0.0
    %1729 = vmatpush1.msra.mxu0 %v406
    %1730 = vmatprep.subr.mxu0 0.0
    %1731 = vmatpush1.msra.mxu0 0.0
    %1732 = vmatprep.subr.mxu0 0.0
    %1733 = vmatpush1.msra.mxu0 0.0
    %1734 = vmatprep.subr.mxu0 0.0
    %1735 = vmatpush1.msra.mxu0 0.0
    %1736 = vmatprep.subr.mxu0 0.0
    %1737 = vmatpush1.msra.mxu0 0.0
    %1738 = vmatprep.subr.mxu0 0.0
    %1739 = vmatpush1.msra.mxu0 0.0
    %1740 = vmatprep.subr.mxu0 0.0
    %1741 = vmatpush1.msra.mxu0 0.0
    %1742 = vmatprep.subr.mxu0 0.0
    %1743 = vmatpush1.msra.mxu0 0.0
    %1744 = vmatprep.subr.mxu0 0.0
    %1745 = vmatpush1.msra.mxu0 0.0
    %1746 = vmatprep.subr.mxu0 0.0
    %1747 = vmatpush1.msra.mxu0 0.0
    %1748 = vmatprep.subr.mxu0 0.0
    %1749 = vmatpush1.msra.mxu0 0.0
    %1750 = vmatprep.subr.mxu0 0.0
    %1751 = vmatpush1.msra.mxu0 0.0
    %1752 = vmatprep.subr.mxu0 0.0
    %1753 = vmatpush1.msra.mxu0 0.0
    %1754 = vmatprep.subr.mxu0 0.0
    %1755 = vmatpush1.msra.mxu0 0.0
    %1756 = vmatprep.subr.mxu0 0.0
    %1757 = vmatpush1.msra.mxu0 0.0
    %1758 = vmatprep.subr.mxu0 0.0
    %1759 = vmatpush1.msra.mxu0 0.0
    %1760 = vmatprep.subr.mxu0 0.0
    %1761 = vmatpush1.msra.mxu0 0.0
    %1762 = vmatprep.mubr.f32.mxu0 0.0
    %1763 = vmatmul.mubr.f32.gmra.mrb[0].mxu0 %v1625
    %v1764 = vpop.f32.mrb[0].mxu0
    %v1765 = vadd.f32 %v485, %v1764
    %v1766 = vpop.f32.mrb[0].mxu0
    %1767 = vdwg.mxu0
    %1768 = vmatprep.subr.mxu0 %v408
    %1769 = vmatpush1.msra.mxu0 %v407
    %1770 = vmatprep.subr.mxu0 %v411
    %1771 = vmatpush1.msra.mxu0 %v410
    %1772 = vmatprep.subr.mxu0 %v414
    %1773 = vmatpush1.msra.mxu0 %v413
    %1774 = vmatprep.subr.mxu0 %v417
    %1775 = vmatpush1.msra.mxu0 %v416
    %1776 = vmatprep.subr.mxu0 %v420
    %1777 = vmatpush1.msra.mxu0 %v419
    %1778 = vmatprep.subr.mxu0 %v423
    %1779 = vmatpush1.msra.mxu0 %v422
    %1780 = vmatprep.subr.mxu0 %v426
    %1781 = vmatpush1.msra.mxu0 %v425
    %1782 = vmatprep.subr.mxu0 %v429
    %1783 = vmatpush1.msra.mxu0 %v428
    %1784 = vmatprep.subr.mxu0 %v432
    %1785 = vmatpush1.msra.mxu0 %v431
    %1786 = vmatprep.subr.mxu0 %v435
    %1787 = vmatpush1.msra.mxu0 %v434
    %1788 = vmatprep.subr.mxu0 %v438
    %1789 = vmatpush1.msra.mxu0 %v437
    %1790 = vmatprep.subr.mxu0 %v441
    %1791 = vmatpush1.msra.mxu0 %v440
    %1792 = vmatprep.subr.mxu0 %v444
    %1793 = vmatpush1.msra.mxu0 %v443
    %1794 = vmatprep.subr.mxu0 %v447
    %1795 = vmatpush1.msra.mxu0 %v446
    %1796 = vmatprep.subr.mxu0 %v450
    %1797 = vmatpush1.msra.mxu0 %v449
    %1798 = vmatprep.subr.mxu0 %v453
    %1799 = vmatpush1.msra.mxu0 %v452
    %1800 = vmatprep.subr.mxu0 0.0
    %1801 = vmatpush1.msra.mxu0 0.0
    %1802 = vmatprep.subr.mxu0 0.0
    %1803 = vmatpush1.msra.mxu0 0.0
    %1804 = vmatprep.subr.mxu0 0.0
    %1805 = vmatpush1.msra.mxu0 0.0
    %1806 = vmatprep.subr.mxu0 0.0
    %1807 = vmatpush1.msra.mxu0 0.0
    %1808 = vmatprep.subr.mxu0 0.0
    %1809 = vmatpush1.msra.mxu0 0.0
    %1810 = vmatprep.subr.mxu0 0.0
    %1811 = vmatpush1.msra.mxu0 0.0
    %1812 = vmatprep.subr.mxu0 0.0
    %1813 = vmatpush1.msra.mxu0 0.0
    %1814 = vmatprep.subr.mxu0 0.0
    %1815 = vmatpush1.msra.mxu0 0.0
    %1816 = vmatprep.subr.mxu0 0.0
    %1817 = vmatpush1.msra.mxu0 0.0
    %1818 = vmatprep.subr.mxu0 0.0
    %1819 = vmatpush1.msra.mxu0 0.0
    %1820 = vmatprep.subr.mxu0 0.0
    %1821 = vmatpush1.msra.mxu0 0.0
    %1822 = vmatprep.subr.mxu0 0.0
    %1823 = vmatpush1.msra.mxu0 0.0
    %1824 = vmatprep.subr.mxu0 0.0
    %1825 = vmatpush1.msra.mxu0 0.0
    %1826 = vmatprep.subr.mxu0 0.0
    %1827 = vmatpush1.msra.mxu0 0.0
    %1828 = vmatprep.subr.mxu0 0.0
    %1829 = vmatpush1.msra.mxu0 0.0
    %1830 = vmatprep.subr.mxu0 0.0
    %1831 = vmatpush1.msra.mxu0 0.0
    %1832 = vmatprep.mubr.f32.mxu0 0.0
    %1833 = vmatmul.mubr.f32.gmra.mrb[0].mxu0 %v1450
    %v1834 = vpop.f32.mrb[0].mxu0
    %v1835 = vadd.f32 %v494, %v1834
    %v1836 = vpop.f32.mrb[0].mxu0
    %v1837 = vadd.f32 %v498, %v1836
    %1838 = vdwg.mxu0
    %1839 = vmatprep.subr.mxu0 0.0
    %1840 = vmatpush1.msra.mxu0 %v409
    %1841 = vmatprep.subr.mxu0 0.0
    %1842 = vmatpush1.msra.mxu0 %v412
    %1843 = vmatprep.subr.mxu0 0.0
    %1844 = vmatpush1.msra.mxu0 %v415
    %1845 = vmatprep.subr.mxu0 0.0
    %1846 = vmatpush1.msra.mxu0 %v418
    %1847 = vmatprep.subr.mxu0 0.0
    %1848 = vmatpush1.msra.mxu0 %v421
    %1849 = vmatprep.subr.mxu0 0.0
    %1850 = vmatpush1.msra.mxu0 %v424
    %1851 = vmatprep.subr.mxu0 0.0
    %1852 = vmatpush1.msra.mxu0 %v427
    %1853 = vmatprep.subr.mxu0 0.0
    %1854 = vmatpush1.msra.mxu0 %v430
    %1855 = vmatprep.subr.mxu0 0.0
    %1856 = vmatpush1.msra.mxu0 %v433
    %1857 = vmatprep.subr.mxu0 0.0
    %1858 = vmatpush1.msra.mxu0 %v436
    %1859 = vmatprep.subr.mxu0 0.0
    %1860 = vmatpush1.msra.mxu0 %v439
    %1861 = vmatprep.subr.mxu0 0.0
    %1862 = vmatpush1.msra.mxu0 %v442
    %1863 = vmatprep.subr.mxu0 0.0
    %1864 = vmatpush1.msra.mxu0 %v445
    %1865 = vmatprep.subr.mxu0 0.0
    %1866 = vmatpush1.msra.mxu0 %v448
    %1867 = vmatprep.subr.mxu0 0.0
    %1868 = vmatpush1.msra.mxu0 %v451
    %1869 = vmatprep.subr.mxu0 0.0
    %1870 = vmatpush1.msra.mxu0 %v454
    %1871 = vmatprep.subr.mxu0 0.0
    %1872 = vmatpush1.msra.mxu0 0.0
    %1873 = vmatprep.subr.mxu0 0.0
    %1874 = vmatpush1.msra.mxu0 0.0
    %1875 = vmatprep.subr.mxu0 0.0
    %1876 = vmatpush1.msra.mxu0 0.0
    %1877 = vmatprep.subr.mxu0 0.0
    %1878 = vmatpush1.msra.mxu0 0.0
    %1879 = vmatprep.subr.mxu0 0.0
    %1880 = vmatpush1.msra.mxu0 0.0
    %1881 = vmatprep.subr.mxu0 0.0
    %1882 = vmatpush1.msra.mxu0 0.0
    %1883 = vmatprep.subr.mxu0 0.0
    %1884 = vmatpush1.msra.mxu0 0.0
    %1885 = vmatprep.subr.mxu0 0.0
    %1886 = vmatpush1.msra.mxu0 0.0
    %1887 = vmatprep.subr.mxu0 0.0
    %1888 = vmatpush1.msra.mxu0 0.0
    %1889 = vmatprep.subr.mxu0 0.0
    %1890 = vmatpush1.msra.mxu0 0.0
    %1891 = vmatprep.subr.mxu0 0.0
    %1892 = vmatpush1.msra.mxu0 0.0
    %1893 = vmatprep.subr.mxu0 0.0
    %1894 = vmatpush1.msra.mxu0 0.0
    %1895 = vmatprep.subr.mxu0 0.0
    %1896 = vmatpush1.msra.mxu0 0.0
    %1897 = vmatprep.subr.mxu0 0.0
    %1898 = vmatpush1.msra.mxu0 0.0
    %1899 = vmatprep.subr.mxu0 0.0
    %1900 = vmatpush1.msra.mxu0 0.0
    %1901 = vmatprep.subr.mxu0 0.0
    %1902 = vmatpush1.msra.mxu0 0.0
    %1903 = vmatprep.mubr.f32.mxu0 0.0
    %1904 = vmatmul.mubr.f32.gmra.mrb[0].mxu0 %v1450
    %v1905 = vpop.f32.mrb[0].mxu0
    %v1906 = vadd.f32 %v502, %v1905
    %v1907 = vpop.f32.mrb[0].mxu0
    %1908 = vdwg.mxu0
    %v1909 = vadd.f32 %v1694, %v1835
    %v1910 = vxor.u32 %v1909, 2147483648
    %v1911 = vmul.f32 %v1910, 1.442695
    %v1912 = vpow.pop %v1911
    %v1913 = vadd.f32 %v1912, 1.0
    %v1914 = vrcp.pop %v1913
    %v1915 = vmul.f32 1.0, %v1914
    %v1916 = vadd.f32 %v1696, %v1837
    %v1917 = vxor.u32 %v1916, 2147483648
    %v1918 = vmul.f32 %v1917, 1.442695
    %v1919 = vpow.pop %v1918
    %v1920 = vadd.f32 %v1919, 1.0
    %v1921 = vrcp.pop %v1920
    %v1922 = vmul.f32 1.0, %v1921
    %v1923 = vmul.f32 %v1915, %v1906
    %v1924 = vadd.f32 %v1765, %v1923
    %v1925 = vtanh.pop %v1924
    %v1926 = vsub.f32 1.0, %v1922
    %v1927 = vmul.f32 %v1926, %v1925
    %v1928 = vmul.f32 %v1922, %v1450
    %v1929 = vadd.f32 %v1927, %v1928
    %1930 = vmatprep.subr.mxu0 %v312
    %1931 = vmatpush1.msra.mxu0 %v311
    %1932 = vmatprep.subr.mxu0 %v315
    %1933 = vmatpush1.msra.mxu0 %v314
    %1934 = vmatprep.subr.mxu0 %v318
    %1935 = vmatpush1.msra.mxu0 %v317
    %1936 = vmatprep.subr.mxu0 %v321
    %1937 = vmatpush1.msra.mxu0 %v320
    %1938 = vmatprep.subr.mxu0 %v324
    %1939 = vmatpush1.msra.mxu0 %v323
    %1940 = vmatprep.subr.mxu0 %v327
    %1941 = vmatpush1.msra.mxu0 %v326
    %1942 = vmatprep.subr.mxu0 %v330
    %1943 = vmatpush1.msra.mxu0 %v329
    %1944 = vmatprep.subr.mxu0 %v333
    %1945 = vmatpush1.msra.mxu0 %v332
    %1946 = vmatprep.subr.mxu0 %v336
    %1947 = vmatpush1.msra.mxu0 %v335
    %1948 = vmatprep.subr.mxu0 %v339
    %1949 = vmatpush1.msra.mxu0 %v338
    %1950 = vmatprep.subr.mxu0 %v342
    %1951 = vmatpush1.msra.mxu0 %v341
    %1952 = vmatprep.subr.mxu0 %v345
    %1953 = vmatpush1.msra.mxu0 %v344
    %1954 = vmatprep.subr.mxu0 %v348
    %1955 = vmatpush1.msra.mxu0 %v347
    %1956 = vmatprep.subr.mxu0 %v351
    %1957 = vmatpush1.msra.mxu0 %v350
    %1958 = vmatprep.subr.mxu0 %v354
    %1959 = vmatpush1.msra.mxu0 %v353
    %1960 = vmatprep.subr.mxu0 %v357
    %1961 = vmatpush1.msra.mxu0 %v356
    %1962 = vmatprep.subr.mxu0 0.0
    %1963 = vmatpush1.msra.mxu0 0.0
    %1964 = vmatprep.subr.mxu0 0.0
    %1965 = vmatpush1.msra.mxu0 0.0
    %1966 = vmatprep.subr.mxu0 0.0
    %1967 = vmatpush1.msra.mxu0 0.0
    %1968 = vmatprep.subr.mxu0 0.0
    %1969 = vmatpush1.msra.mxu0 0.0
    %1970 = vmatprep.subr.mxu0 0.0
    %1971 = vmatpush1.msra.mxu0 0.0
    %1972 = vmatprep.subr.mxu0 0.0
    %1973 = vmatpush1.msra.mxu0 0.0
    %1974 = vmatprep.subr.mxu0 0.0
    %1975 = vmatpush1.msra.mxu0 0.0
    %1976 = vmatprep.subr.mxu0 0.0
    %1977 = vmatpush1.msra.mxu0 0.0
    %1978 = vmatprep.subr.mxu0 0.0
    %1979 = vmatpush1.msra.mxu0 0.0
    %1980 = vmatprep.subr.mxu0 0.0
    %1981 = vmatpush1.msra.mxu0 0.0
    %1982 = vmatprep.subr.mxu0 0.0
    %1983 = vmatpush1.msra.mxu0 0.0
    %1984 = vmatprep.subr.mxu0 0.0
    %1985 = vmatpush1.msra.mxu0 0.0
    %1986 = vmatprep.subr.mxu0 0.0
    %1987 = vmatpush1.msra.mxu0 0.0
    %1988 = vmatprep.subr.mxu0 0.0
    %1989 = vmatpush1.msra.mxu0 0.0
    %1990 = vmatprep.subr.mxu0 0.0
    %1991 = vmatpush1.msra.mxu0 0.0
    %1992 = vmatprep.subr.mxu0 0.0
    %1993 = vmatpush1.msra.mxu0 0.0
    %1994 = vmatprep.mubr.f32.mxu0 0.0
    %1995 = vmatmul.mubr.f32.gmra.mrb[0].mxu0 %v1625
    %v1996 = vpop.f32.mrb[0].mxu0
    %v1997 = vadd.f32 %v460, %v1996
    %v1998 = vpop.f32.mrb[0].mxu0
    %v1999 = vadd.f32 %v464, %v1998
    %2000 = vdwg.mxu0
    %2001 = vmatprep.subr.mxu0 0.0
    %2002 = vmatpush1.msra.mxu0 %v313
    %2003 = vmatprep.subr.mxu0 0.0
    %2004 = vmatpush1.msra.mxu0 %v316
    %2005 = vmatprep.subr.mxu0 0.0
    %2006 = vmatpush1.msra.mxu0 %v319
    %2007 = vmatprep.subr.mxu0 0.0
    %2008 = vmatpush1.msra.mxu0 %v322
    %2009 = vmatprep.subr.mxu0 0.0
    %2010 = vmatpush1.msra.mxu0 %v325
    %2011 = vmatprep.subr.mxu0 0.0
    %2012 = vmatpush1.msra.mxu0 %v328
    %2013 = vmatprep.subr.mxu0 0.0
    %2014 = vmatpush1.msra.mxu0 %v331
    %2015 = vmatprep.subr.mxu0 0.0
    %2016 = vmatpush1.msra.mxu0 %v334
    %2017 = vmatprep.subr.mxu0 0.0
    %2018 = vmatpush1.msra.mxu0 %v337
    %2019 = vmatprep.subr.mxu0 0.0
    %2020 = vmatpush1.msra.mxu0 %v340
    %2021 = vmatprep.subr.mxu0 0.0
    %2022 = vmatpush1.msra.mxu0 %v343
    %2023 = vmatprep.subr.mxu0 0.0
    %2024 = vmatpush1.msra.mxu0 %v346
    %2025 = vmatprep.subr.mxu0 0.0
    %2026 = vmatpush1.msra.mxu0 %v349
    %2027 = vmatprep.subr.mxu0 0.0
    %2028 = vmatpush1.msra.mxu0 %v352
    %2029 = vmatprep.subr.mxu0 0.0
    %2030 = vmatpush1.msra.mxu0 %v355
    %2031 = vmatprep.subr.mxu0 0.0
    %2032 = vmatpush1.msra.mxu0 %v358
    %2033 = vmatprep.subr.mxu0 0.0
    %2034 = vmatpush1.msra.mxu0 0.0
    %2035 = vmatprep.subr.mxu0 0.0
    %2036 = vmatpush1.msra.mxu0 0.0
    %2037 = vmatprep.subr.mxu0 0.0
    %2038 = vmatpush1.msra.mxu0 0.0
    %2039 = vmatprep.subr.mxu0 0.0
    %2040 = vmatpush1.msra.mxu0 0.0
    %2041 = vmatprep.subr.mxu0 0.0
    %2042 = vmatpush1.msra.mxu0 0.0
    %2043 = vmatprep.subr.mxu0 0.0
    %2044 = vmatpush1.msra.mxu0 0.0
    %2045 = vmatprep.subr.mxu0 0.0
    %2046 = vmatpush1.msra.mxu0 0.0
    %2047 = vmatprep.subr.mxu0 0.0
    %2048 = vmatpush1.msra.mxu0 0.0
    %2049 = vmatprep.subr.mxu0 0.0
    %2050 = vmatpush1.msra.mxu0 0.0
    %2051 = vmatprep.subr.mxu0 0.0
    %2052 = vmatpush1.msra.mxu0 0.0
    %2053 = vmatprep.subr.mxu0 0.0
    %2054 = vmatpush1.msra.mxu0 0.0
    %2055 = vmatprep.subr.mxu0 0.0
    %2056 = vmatpush1.msra.mxu0 0.0
    %2057 = vmatprep.subr.mxu0 0.0
    %2058 = vmatpush1.msra.mxu0 0.0
    %2059 = vmatprep.subr.mxu0 0.0
    %2060 = vmatpush1.msra.mxu0 0.0
    %2061 = vmatprep.subr.mxu0 0.0
    %2062 = vmatpush1.msra.mxu0 0.0
    %2063 = vmatprep.subr.mxu0 0.0
    %2064 = vmatpush1.msra.mxu0 0.0
    %2065 = vmatprep.mubr.f32.mxu0 0.0
    %2066 = vmatmul.mubr.f32.gmra.mrb[0].mxu0 %v1625
    %v2067 = vpop.f32.mrb[0].mxu0
    %v2068 = vadd.f32 %v468, %v2067
    %v2069 = vpop.f32.mrb[0].mxu0
    %2070 = vdwg.mxu0
    %v2072 = vrot.slane %v1997, 2
    %v2074 = vadd.f32 %v226, %v2072
    %v2075 = vxor.u32 %v2074, 2147483648
    %v2076 = vmul.f32 %v2075, 1.442695
    %v2077 = vpow.pop %v2076
    %v2078 = vadd.f32 %v2077, 1.0
    %v2079 = vrcp.pop %v2078
    %v2080 = vmul.f32 1.0, %v2079
    %v2082 = vrot.slane %v1999, 2
    %v2084 = vadd.f32 %v228, %v2082
    %v2085 = vxor.u32 %v2084, 2147483648
    %v2086 = vmul.f32 %v2085, 1.442695
    %v2087 = vpow.pop %v2086
    %v2088 = vadd.f32 %v2087, 1.0
    %v2089 = vrcp.pop %v2088
    %v2090 = vmul.f32 1.0, %v2089
    %v2092 = vrot.slane %v2068, 2
    %v2094 = vmul.f32 %v2080, %v2092
    %v2095 = vadd.f32 %v303, %v2094
    %v2096 = vtanh.pop %v2095
    %v2097 = vsub.f32 1.0, %v2090
    %v2098 = vmul.f32 %v2097, %v2096
    %v2099 = vrot.slane %v1623, 6
    %v2101 = vmul.f32 %v2090, %v2099
    %v2102 = vadd.f32 %v2098, %v2101
    %v2104 = vrot.slane %v2102, 6
    %2106 = vmatprep.subr.mxu0 %v360
    %2107 = vmatpush1.msra.mxu0 %v359
    %2108 = vmatprep.subr.mxu0 %v363
    %2109 = vmatpush1.msra.mxu0 %v362
    %2110 = vmatprep.subr.mxu0 %v366
    %2111 = vmatpush1.msra.mxu0 %v365
    %2112 = vmatprep.subr.mxu0 %v369
    %2113 = vmatpush1.msra.mxu0 %v368
    %2114 = vmatprep.subr.mxu0 %v372
    %2115 = vmatpush1.msra.mxu0 %v371
    %2116 = vmatprep.subr.mxu0 %v375
    %2117 = vmatpush1.msra.mxu0 %v374
    %2118 = vmatprep.subr.mxu0 %v378
    %2119 = vmatpush1.msra.mxu0 %v377
    %2120 = vmatprep.subr.mxu0 %v381
    %2121 = vmatpush1.msra.mxu0 %v380
    %2122 = vmatprep.subr.mxu0 %v384
    %2123 = vmatpush1.msra.mxu0 %v383
    %2124 = vmatprep.subr.mxu0 %v387
    %2125 = vmatpush1.msra.mxu0 %v386
    %2126 = vmatprep.subr.mxu0 %v390
    %2127 = vmatpush1.msra.mxu0 %v389
    %2128 = vmatprep.subr.mxu0 %v393
    %2129 = vmatpush1.msra.mxu0 %v392
    %2130 = vmatprep.subr.mxu0 %v396
    %2131 = vmatpush1.msra.mxu0 %v395
    %2132 = vmatprep.subr.mxu0 %v399
    %2133 = vmatpush1.msra.mxu0 %v398
    %2134 = vmatprep.subr.mxu0 %v402
    %2135 = vmatpush1.msra.mxu0 %v401
    %2136 = vmatprep.subr.mxu0 %v405
    %2137 = vmatpush1.msra.mxu0 %v404
    %2138 = vmatprep.subr.mxu0 0.0
    %2139 = vmatpush1.msra.mxu0 0.0
    %2140 = vmatprep.subr.mxu0 0.0
    %2141 = vmatpush1.msra.mxu0 0.0
    %2142 = vmatprep.subr.mxu0 0.0
    %2143 = vmatpush1.msra.mxu0 0.0
    %2144 = vmatprep.subr.mxu0 0.0
    %2145 = vmatpush1.msra.mxu0 0.0
    %2146 = vmatprep.subr.mxu0 0.0
    %2147 = vmatpush1.msra.mxu0 0.0
    %2148 = vmatprep.subr.mxu0 0.0
    %2149 = vmatpush1.msra.mxu0 0.0
    %2150 = vmatprep.subr.mxu0 0.0
    %2151 = vmatpush1.msra.mxu0 0.0
    %2152 = vmatprep.subr.mxu0 0.0
    %2153 = vmatpush1.msra.mxu0 0.0
    %2154 = vmatprep.subr.mxu0 0.0
    %2155 = vmatpush1.msra.mxu0 0.0
    %2156 = vmatprep.subr.mxu0 0.0
    %2157 = vmatpush1.msra.mxu0 0.0
    %2158 = vmatprep.subr.mxu0 0.0
    %2159 = vmatpush1.msra.mxu0 0.0
    %2160 = vmatprep.subr.mxu0 0.0
    %2161 = vmatpush1.msra.mxu0 0.0
    %2162 = vmatprep.subr.mxu0 0.0
    %2163 = vmatpush1.msra.mxu0 0.0
    %2164 = vmatprep.subr.mxu0 0.0
    %2165 = vmatpush1.msra.mxu0 0.0
    %2166 = vmatprep.subr.mxu0 0.0
    %2167 = vmatpush1.msra.mxu0 0.0
    %2168 = vmatprep.subr.mxu0 0.0
    %2169 = vmatpush1.msra.mxu0 0.0
    %2170 = vmatprep.mubr.f32.mxu0 0.0
    %2171 = vmatmul.mubr.f32.gmra.mrb[0].mxu0 %v2104
    %v2172 = vpop.f32.mrb[0].mxu0
    %v2173 = vadd.f32 %v477, %v2172
    %v2174 = vpop.f32.mrb[0].mxu0
    %v2175 = vadd.f32 %v481, %v2174
    %2176 = vdwg.mxu0
    %2177 = vmatprep.subr.mxu0 0.0
    %2178 = vmatpush1.msra.mxu0 %v361
    %2179 = vmatprep.subr.mxu0 0.0
    %2180 = vmatpush1.msra.mxu0 %v364
    %2181 = vmatprep.subr.mxu0 0.0
    %2182 = vmatpush1.msra.mxu0 %v367
    %2183 = vmatprep.subr.mxu0 0.0
    %2184 = vmatpush1.msra.mxu0 %v370
    %2185 = vmatprep.subr.mxu0 0.0
    %2186 = vmatpush1.msra.mxu0 %v373
    %2187 = vmatprep.subr.mxu0 0.0
    %2188 = vmatpush1.msra.mxu0 %v376
    %2189 = vmatprep.subr.mxu0 0.0
    %2190 = vmatpush1.msra.mxu0 %v379
    %2191 = vmatprep.subr.mxu0 0.0
    %2192 = vmatpush1.msra.mxu0 %v382
    %2193 = vmatprep.subr.mxu0 0.0
    %2194 = vmatpush1.msra.mxu0 %v385
    %2195 = vmatprep.subr.mxu0 0.0
    %2196 = vmatpush1.msra.mxu0 %v388
    %2197 = vmatprep.subr.mxu0 0.0
    %2198 = vmatpush1.msra.mxu0 %v391
    %2199 = vmatprep.subr.mxu0 0.0
    %2200 = vmatpush1.msra.mxu0 %v394
    %2201 = vmatprep.subr.mxu0 0.0
    %2202 = vmatpush1.msra.mxu0 %v397
    %2203 = vmatprep.subr.mxu0 0.0
    %2204 = vmatpush1.msra.mxu0 %v400
    %2205 = vmatprep.subr.mxu0 0.0
    %2206 = vmatpush1.msra.mxu0 %v403
    %2207 = vmatprep.subr.mxu0 0.0
    %2208 = vmatpush1.msra.mxu0 %v406
    %2209 = vmatprep.subr.mxu0 0.0
    %2210 = vmatpush1.msra.mxu0 0.0
    %2211 = vmatprep.subr.mxu0 0.0
    %2212 = vmatpush1.msra.mxu0 0.0
    %2213 = vmatprep.subr.mxu0 0.0
    %2214 = vmatpush1.msra.mxu0 0.0
    %2215 = vmatprep.subr.mxu0 0.0
    %2216 = vmatpush1.msra.mxu0 0.0
    %2217 = vmatprep.subr.mxu0 0.0
    %2218 = vmatpush1.msra.mxu0 0.0
    %2219 = vmatprep.subr.mxu0 0.0
    %2220 = vmatpush1.msra.mxu0 0.0
    %2221 = vmatprep.subr.mxu0 0.0
    %2222 = vmatpush1.msra.mxu0 0.0
    %2223 = vmatprep.subr.mxu0 0.0
    %2224 = vmatpush1.msra.mxu0 0.0
    %2225 = vmatprep.subr.mxu0 0.0
    %2226 = vmatpush1.msra.mxu0 0.0
    %2227 = vmatprep.subr.mxu0 0.0
    %2228 = vmatpush1.msra.mxu0 0.0
    %2229 = vmatprep.subr.mxu0 0.0
    %2230 = vmatpush1.msra.mxu0 0.0
    %2231 = vmatprep.subr.mxu0 0.0
    %2232 = vmatpush1.msra.mxu0 0.0
    %2233 = vmatprep.subr.mxu0 0.0
    %2234 = vmatpush1.msra.mxu0 0.0
    %2235 = vmatprep.subr.mxu0 0.0
    %2236 = vmatpush1.msra.mxu0 0.0
    %2237 = vmatprep.subr.mxu0 0.0
    %2238 = vmatpush1.msra.mxu0 0.0
    %2239 = vmatprep.subr.mxu0 0.0
    %2240 = vmatpush1.msra.mxu0 0.0
    %2241 = vmatprep.mubr.f32.mxu0 0.0
    %2242 = vmatmul.mubr.f32.gmra.mrb[0].mxu0 %v2104
    %v2243 = vpop.f32.mrb[0].mxu0
    %v2244 = vadd.f32 %v485, %v2243
    %v2245 = vpop.f32.mrb[0].mxu0
    %2246 = vdwg.mxu0
    %2247 = vmatprep.subr.mxu0 %v408
    %2248 = vmatpush1.msra.mxu0 %v407
    %2249 = vmatprep.subr.mxu0 %v411
    %2250 = vmatpush1.msra.mxu0 %v410
    %2251 = vmatprep.subr.mxu0 %v414
    %2252 = vmatpush1.msra.mxu0 %v413
    %2253 = vmatprep.subr.mxu0 %v417
    %2254 = vmatpush1.msra.mxu0 %v416
    %2255 = vmatprep.subr.mxu0 %v420
    %2256 = vmatpush1.msra.mxu0 %v419
    %2257 = vmatprep.subr.mxu0 %v423
    %2258 = vmatpush1.msra.mxu0 %v422
    %2259 = vmatprep.subr.mxu0 %v426
    %2260 = vmatpush1.msra.mxu0 %v425
    %2261 = vmatprep.subr.mxu0 %v429
    %2262 = vmatpush1.msra.mxu0 %v428
    %2263 = vmatprep.subr.mxu0 %v432
    %2264 = vmatpush1.msra.mxu0 %v431
    %2265 = vmatprep.subr.mxu0 %v435
    %2266 = vmatpush1.msra.mxu0 %v434
    %2267 = vmatprep.subr.mxu0 %v438
    %2268 = vmatpush1.msra.mxu0 %v437
    %2269 = vmatprep.subr.mxu0 %v441
    %2270 = vmatpush1.msra.mxu0 %v440
    %2271 = vmatprep.subr.mxu0 %v444
    %2272 = vmatpush1.msra.mxu0 %v443
    %2273 = vmatprep.subr.mxu0 %v447
    %2274 = vmatpush1.msra.mxu0 %v446
    %2275 = vmatprep.subr.mxu0 %v450
    %2276 = vmatpush1.msra.mxu0 %v449
    %2277 = vmatprep.subr.mxu0 %v453
    %2278 = vmatpush1.msra.mxu0 %v452
    %2279 = vmatprep.subr.mxu0 0.0
    %2280 = vmatpush1.msra.mxu0 0.0
    %2281 = vmatprep.subr.mxu0 0.0
    %2282 = vmatpush1.msra.mxu0 0.0
    %2283 = vmatprep.subr.mxu0 0.0
    %2284 = vmatpush1.msra.mxu0 0.0
    %2285 = vmatprep.subr.mxu0 0.0
    %2286 = vmatpush1.msra.mxu0 0.0
    %2287 = vmatprep.subr.mxu0 0.0
    %2288 = vmatpush1.msra.mxu0 0.0
    %2289 = vmatprep.subr.mxu0 0.0
    %2290 = vmatpush1.msra.mxu0 0.0
    %2291 = vmatprep.subr.mxu0 0.0
    %2292 = vmatpush1.msra.mxu0 0.0
    %2293 = vmatprep.subr.mxu0 0.0
    %2294 = vmatpush1.msra.mxu0 0.0
    %2295 = vmatprep.subr.mxu0 0.0
    %2296 = vmatpush1.msra.mxu0 0.0
    %2297 = vmatprep.subr.mxu0 0.0
    %2298 = vmatpush1.msra.mxu0 0.0
    %2299 = vmatprep.subr.mxu0 0.0
    %2300 = vmatpush1.msra.mxu0 0.0
    %2301 = vmatprep.subr.mxu0 0.0
    %2302 = vmatpush1.msra.mxu0 0.0
    %2303 = vmatprep.subr.mxu0 0.0
    %2304 = vmatpush1.msra.mxu0 0.0
    %2305 = vmatprep.subr.mxu0 0.0
    %2306 = vmatpush1.msra.mxu0 0.0
    %2307 = vmatprep.subr.mxu0 0.0
    %2308 = vmatpush1.msra.mxu0 0.0
    %2309 = vmatprep.subr.mxu0 0.0
    %2310 = vmatpush1.msra.mxu0 0.0
    %2311 = vmatprep.mubr.f32.mxu0 0.0
    %2312 = vmatmul.mubr.f32.gmra.mrb[0].mxu0 %v1929
    %v2313 = vpop.f32.mrb[0].mxu0
    %v2314 = vadd.f32 %v494, %v2313
    %v2315 = vpop.f32.mrb[0].mxu0
    %v2316 = vadd.f32 %v498, %v2315
    %2317 = vdwg.mxu0
    %2318 = vmatprep.subr.mxu0 0.0
    %2319 = vmatpush1.msra.mxu0 %v409
    %2320 = vmatprep.subr.mxu0 0.0
    %2321 = vmatpush1.msra.mxu0 %v412
    %2322 = vmatprep.subr.mxu0 0.0
    %2323 = vmatpush1.msra.mxu0 %v415
    %2324 = vmatprep.subr.mxu0 0.0
    %2325 = vmatpush1.msra.mxu0 %v418
    %2326 = vmatprep.subr.mxu0 0.0
    %2327 = vmatpush1.msra.mxu0 %v421
    %2328 = vmatprep.subr.mxu0 0.0
    %2329 = vmatpush1.msra.mxu0 %v424
    %2330 = vmatprep.subr.mxu0 0.0
    %2331 = vmatpush1.msra.mxu0 %v427
    %2332 = vmatprep.subr.mxu0 0.0
    %2333 = vmatpush1.msra.mxu0 %v430
    %2334 = vmatprep.subr.mxu0 0.0
    %2335 = vmatpush1.msra.mxu0 %v433
    %2336 = vmatprep.subr.mxu0 0.0
    %2337 = vmatpush1.msra.mxu0 %v436
    %2338 = vmatprep.subr.mxu0 0.0
    %2339 = vmatpush1.msra.mxu0 %v439
    %2340 = vmatprep.subr.mxu0 0.0
    %2341 = vmatpush1.msra.mxu0 %v442
    %2342 = vmatprep.subr.mxu0 0.0
    %2343 = vmatpush1.msra.mxu0 %v445
    %2344 = vmatprep.subr.mxu0 0.0
    %2345 = vmatpush1.msra.mxu0 %v448
    %2346 = vmatprep.subr.mxu0 0.0
    %2347 = vmatpush1.msra.mxu0 %v451
    %2348 = vmatprep.subr.mxu0 0.0
    %2349 = vmatpush1.msra.mxu0 %v454
    %2350 = vmatprep.subr.mxu0 0.0
    %2351 = vmatpush1.msra.mxu0 0.0
    %2352 = vmatprep.subr.mxu0 0.0
    %2353 = vmatpush1.msra.mxu0 0.0
    %2354 = vmatprep.subr.mxu0 0.0
    %2355 = vmatpush1.msra.mxu0 0.0
    %2356 = vmatprep.subr.mxu0 0.0
    %2357 = vmatpush1.msra.mxu0 0.0
    %2358 = vmatprep.subr.mxu0 0.0
    %2359 = vmatpush1.msra.mxu0 0.0
    %2360 = vmatprep.subr.mxu0 0.0
    %2361 = vmatpush1.msra.mxu0 0.0
    %2362 = vmatprep.subr.mxu0 0.0
    %2363 = vmatpush1.msra.mxu0 0.0
    %2364 = vmatprep.subr.mxu0 0.0
    %2365 = vmatpush1.msra.mxu0 0.0
    %2366 = vmatprep.subr.mxu0 0.0
    %2367 = vmatpush1.msra.mxu0 0.0
    %2368 = vmatprep.subr.mxu0 0.0
    %2369 = vmatpush1.msra.mxu0 0.0
    %2370 = vmatprep.subr.mxu0 0.0
    %2371 = vmatpush1.msra.mxu0 0.0
    %2372 = vmatprep.subr.mxu0 0.0
    %2373 = vmatpush1.msra.mxu0 0.0
    %2374 = vmatprep.subr.mxu0 0.0
    %2375 = vmatpush1.msra.mxu0 0.0
    %2376 = vmatprep.subr.mxu0 0.0
    %2377 = vmatpush1.msra.mxu0 0.0
    %2378 = vmatprep.subr.mxu0 0.0
    %2379 = vmatpush1.msra.mxu0 0.0
    %2380 = vmatprep.subr.mxu0 0.0
    %2381 = vmatpush1.msra.mxu0 0.0
    %2382 = vmatprep.mubr.f32.mxu0 0.0
    %2383 = vmatmul.mubr.f32.gmra.mrb[0].mxu0 %v1929
    %v2384 = vpop.f32.mrb[0].mxu0
    %v2385 = vadd.f32 %v502, %v2384
    %v2386 = vpop.f32.mrb[0].mxu0
    %2387 = vdwg.mxu0
    %v2388 = vadd.f32 %v2173, %v2314
    %v2389 = vxor.u32 %v2388, 2147483648
    %v2390 = vmul.f32 %v2389, 1.442695
    %v2391 = vpow.pop %v2390
    %v2392 = vadd.f32 %v2391, 1.0
    %v2393 = vrcp.pop %v2392
    %v2394 = vmul.f32 1.0, %v2393
    %v2395 = vadd.f32 %v2175, %v2316
    %v2396 = vxor.u32 %v2395, 2147483648
    %v2397 = vmul.f32 %v2396, 1.442695
    %v2398 = vpow.pop %v2397
    %v2399 = vadd.f32 %v2398, 1.0
    %v2400 = vrcp.pop %v2399
    %v2401 = vmul.f32 1.0, %v2400
    %v2402 = vmul.f32 %v2394, %v2385
    %v2403 = vadd.f32 %v2244, %v2402
    %v2404 = vtanh.pop %v2403
    %v2405 = vsub.f32 1.0, %v2401
    %v2406 = vmul.f32 %v2405, %v2404
    %v2407 = vmul.f32 %v2401, %v1929
    %v2408 = vadd.f32 %v2406, %v2407
    %2409 = vmatprep.subr.mxu0 %v312
    %2410 = vmatpush1.msra.mxu0 %v311
    %2411 = vmatprep.subr.mxu0 %v315
    %2412 = vmatpush1.msra.mxu0 %v314
    %2413 = vmatprep.subr.mxu0 %v318
    %2414 = vmatpush1.msra.mxu0 %v317
    %2415 = vmatprep.subr.mxu0 %v321
    %2416 = vmatpush1.msra.mxu0 %v320
    %2417 = vmatprep.subr.mxu0 %v324
    %2418 = vmatpush1.msra.mxu0 %v323
    %2419 = vmatprep.subr.mxu0 %v327
    %2420 = vmatpush1.msra.mxu0 %v326
    %2421 = vmatprep.subr.mxu0 %v330
    %2422 = vmatpush1.msra.mxu0 %v329
    %2423 = vmatprep.subr.mxu0 %v333
    %2424 = vmatpush1.msra.mxu0 %v332
    %2425 = vmatprep.subr.mxu0 %v336
    %2426 = vmatpush1.msra.mxu0 %v335
    %2427 = vmatprep.subr.mxu0 %v339
    %2428 = vmatpush1.msra.mxu0 %v338
    %2429 = vmatprep.subr.mxu0 %v342
    %2430 = vmatpush1.msra.mxu0 %v341
    %2431 = vmatprep.subr.mxu0 %v345
    %2432 = vmatpush1.msra.mxu0 %v344
    %2433 = vmatprep.subr.mxu0 %v348
    %2434 = vmatpush1.msra.mxu0 %v347
    %2435 = vmatprep.subr.mxu0 %v351
    %2436 = vmatpush1.msra.mxu0 %v350
    %2437 = vmatprep.subr.mxu0 %v354
    %2438 = vmatpush1.msra.mxu0 %v353
    %2439 = vmatprep.subr.mxu0 %v357
    %2440 = vmatpush1.msra.mxu0 %v356
    %2441 = vmatprep.subr.mxu0 0.0
    %2442 = vmatpush1.msra.mxu0 0.0
    %2443 = vmatprep.subr.mxu0 0.0
    %2444 = vmatpush1.msra.mxu0 0.0
    %2445 = vmatprep.subr.mxu0 0.0
    %2446 = vmatpush1.msra.mxu0 0.0
    %2447 = vmatprep.subr.mxu0 0.0
    %2448 = vmatpush1.msra.mxu0 0.0
    %2449 = vmatprep.subr.mxu0 0.0
    %2450 = vmatpush1.msra.mxu0 0.0
    %2451 = vmatprep.subr.mxu0 0.0
    %2452 = vmatpush1.msra.mxu0 0.0
    %2453 = vmatprep.subr.mxu0 0.0
    %2454 = vmatpush1.msra.mxu0 0.0
    %2455 = vmatprep.subr.mxu0 0.0
    %2456 = vmatpush1.msra.mxu0 0.0
    %2457 = vmatprep.subr.mxu0 0.0
    %2458 = vmatpush1.msra.mxu0 0.0
    %2459 = vmatprep.subr.mxu0 0.0
    %2460 = vmatpush1.msra.mxu0 0.0
    %2461 = vmatprep.subr.mxu0 0.0
    %2462 = vmatpush1.msra.mxu0 0.0
    %2463 = vmatprep.subr.mxu0 0.0
    %2464 = vmatpush1.msra.mxu0 0.0
    %2465 = vmatprep.subr.mxu0 0.0
    %2466 = vmatpush1.msra.mxu0 0.0
    %2467 = vmatprep.subr.mxu0 0.0
    %2468 = vmatpush1.msra.mxu0 0.0
    %2469 = vmatprep.subr.mxu0 0.0
    %2470 = vmatpush1.msra.mxu0 0.0
    %2471 = vmatprep.subr.mxu0 0.0
    %2472 = vmatpush1.msra.mxu0 0.0
    %2473 = vmatprep.mubr.f32.mxu0 0.0
    %2474 = vmatmul.mubr.f32.gmra.mrb[0].mxu0 %v2104
    %v2475 = vpop.f32.mrb[0].mxu0
    %v2476 = vadd.f32 %v460, %v2475
    %v2477 = vpop.f32.mrb[0].mxu0
    %v2478 = vadd.f32 %v464, %v2477
    %2479 = vdwg.mxu0
    %2480 = vmatprep.subr.mxu0 0.0
    %2481 = vmatpush1.msra.mxu0 %v313
    %2482 = vmatprep.subr.mxu0 0.0
    %2483 = vmatpush1.msra.mxu0 %v316
    %2484 = vmatprep.subr.mxu0 0.0
    %2485 = vmatpush1.msra.mxu0 %v319
    %2486 = vmatprep.subr.mxu0 0.0
    %2487 = vmatpush1.msra.mxu0 %v322
    %2488 = vmatprep.subr.mxu0 0.0
    %2489 = vmatpush1.msra.mxu0 %v325
    %2490 = vmatprep.subr.mxu0 0.0
    %2491 = vmatpush1.msra.mxu0 %v328
    %2492 = vmatprep.subr.mxu0 0.0
    %2493 = vmatpush1.msra.mxu0 %v331
    %2494 = vmatprep.subr.mxu0 0.0
    %2495 = vmatpush1.msra.mxu0 %v334
    %2496 = vmatprep.subr.mxu0 0.0
    %2497 = vmatpush1.msra.mxu0 %v337
    %2498 = vmatprep.subr.mxu0 0.0
    %2499 = vmatpush1.msra.mxu0 %v340
    %2500 = vmatprep.subr.mxu0 0.0
    %2501 = vmatpush1.msra.mxu0 %v343
    %2502 = vmatprep.subr.mxu0 0.0
    %2503 = vmatpush1.msra.mxu0 %v346
    %2504 = vmatprep.subr.mxu0 0.0
    %2505 = vmatpush1.msra.mxu0 %v349
    %2506 = vmatprep.subr.mxu0 0.0
    %2507 = vmatpush1.msra.mxu0 %v352
    %2508 = vmatprep.subr.mxu0 0.0
    %2509 = vmatpush1.msra.mxu0 %v355
    %2510 = vmatprep.subr.mxu0 0.0
    %2511 = vmatpush1.msra.mxu0 %v358
    %2512 = vmatprep.subr.mxu0 0.0
    %2513 = vmatpush1.msra.mxu0 0.0
    %2514 = vmatprep.subr.mxu0 0.0
    %2515 = vmatpush1.msra.mxu0 0.0
    %2516 = vmatprep.subr.mxu0 0.0
    %2517 = vmatpush1.msra.mxu0 0.0
    %2518 = vmatprep.subr.mxu0 0.0
    %2519 = vmatpush1.msra.mxu0 0.0
    %2520 = vmatprep.subr.mxu0 0.0
    %2521 = vmatpush1.msra.mxu0 0.0
    %2522 = vmatprep.subr.mxu0 0.0
    %2523 = vmatpush1.msra.mxu0 0.0
    %2524 = vmatprep.subr.mxu0 0.0
    %2525 = vmatpush1.msra.mxu0 0.0
    %2526 = vmatprep.subr.mxu0 0.0
    %2527 = vmatpush1.msra.mxu0 0.0
    %2528 = vmatprep.subr.mxu0 0.0
    %2529 = vmatpush1.msra.mxu0 0.0
    %2530 = vmatprep.subr.mxu0 0.0
    %2531 = vmatpush1.msra.mxu0 0.0
    %2532 = vmatprep.subr.mxu0 0.0
    %2533 = vmatpush1.msra.mxu0 0.0
    %2534 = vmatprep.subr.mxu0 0.0
    %2535 = vmatpush1.msra.mxu0 0.0
    %2536 = vmatprep.subr.mxu0 0.0
    %2537 = vmatpush1.msra.mxu0 0.0
    %2538 = vmatprep.subr.mxu0 0.0
    %2539 = vmatpush1.msra.mxu0 0.0
    %2540 = vmatprep.subr.mxu0 0.0
    %2541 = vmatpush1.msra.mxu0 0.0
    %2542 = vmatprep.subr.mxu0 0.0
    %2543 = vmatpush1.msra.mxu0 0.0
    %2544 = vmatprep.mubr.f32.mxu0 0.0
    %2545 = vmatmul.mubr.f32.gmra.mrb[0].mxu0 %v2104
    %v2546 = vpop.f32.mrb[0].mxu0
    %v2547 = vadd.f32 %v468, %v2546
    %v2548 = vpop.f32.mrb[0].mxu0
    %2549 = vdwg.mxu0
    %v2550 = vadd.f32 %v232, %v2476
    %v2551 = vxor.u32 %v2550, 2147483648
    %v2552 = vmul.f32 %v2551, 1.442695
    %v2553 = vpow.pop %v2552
    %v2554 = vadd.f32 %v2553, 1.0
    %v2555 = vrcp.pop %v2554
    %v2556 = vmul.f32 1.0, %v2555
    %v2557 = vadd.f32 %v234, %v2478
    %v2558 = vxor.u32 %v2557, 2147483648
    %v2559 = vmul.f32 %v2558, 1.442695
    %v2560 = vpow.pop %v2559
    %v2561 = vadd.f32 %v2560, 1.0
    %v2562 = vrcp.pop %v2561
    %v2563 = vmul.f32 1.0, %v2562
    %v2564 = vmul.f32 %v2556, %v2547
    %v2565 = vadd.f32 %v308, %v2564
    %v2566 = vtanh.pop %v2565
    %v2567 = vsub.f32 1.0, %v2563
    %v2568 = vmul.f32 %v2567, %v2566
    %v2569 = vmul.f32 %v2563, %v2104
    %v2570 = vadd.f32 %v2568, %v2569
    %2571 = vmatprep.subr.mxu0 %v360
    %2572 = vmatpush1.msra.mxu0 %v359
    %2573 = vmatprep.subr.mxu0 %v363
    %2574 = vmatpush1.msra.mxu0 %v362
    %2575 = vmatprep.subr.mxu0 %v366
    %2576 = vmatpush1.msra.mxu0 %v365
    %2577 = vmatprep.subr.mxu0 %v369
    %2578 = vmatpush1.msra.mxu0 %v368
    %2579 = vmatprep.subr.mxu0 %v372
    %2580 = vmatpush1.msra.mxu0 %v371
    %2581 = vmatprep.subr.mxu0 %v375
    %2582 = vmatpush1.msra.mxu0 %v374
    %2583 = vmatprep.subr.mxu0 %v378
    %2584 = vmatpush1.msra.mxu0 %v377
    %2585 = vmatprep.subr.mxu0 %v381
    %2586 = vmatpush1.msra.mxu0 %v380
    %2587 = vmatprep.subr.mxu0 %v384
    %2588 = vmatpush1.msra.mxu0 %v383
    %2589 = vmatprep.subr.mxu0 %v387
    %2590 = vmatpush1.msra.mxu0 %v386
    %2591 = vmatprep.subr.mxu0 %v390
    %2592 = vmatpush1.msra.mxu0 %v389
    %2593 = vmatprep.subr.mxu0 %v393
    %2594 = vmatpush1.msra.mxu0 %v392
    %2595 = vmatprep.subr.mxu0 %v396
    %2596 = vmatpush1.msra.mxu0 %v395
    %2597 = vmatprep.subr.mxu0 %v399
    %2598 = vmatpush1.msra.mxu0 %v398
    %2599 = vmatprep.subr.mxu0 %v402
    %2600 = vmatpush1.msra.mxu0 %v401
    %2601 = vmatprep.subr.mxu0 %v405
    %2602 = vmatpush1.msra.mxu0 %v404
    %2603 = vmatprep.subr.mxu0 0.0
    %2604 = vmatpush1.msra.mxu0 0.0
    %2605 = vmatprep.subr.mxu0 0.0
    %2606 = vmatpush1.msra.mxu0 0.0
    %2607 = vmatprep.subr.mxu0 0.0
    %2608 = vmatpush1.msra.mxu0 0.0
    %2609 = vmatprep.subr.mxu0 0.0
    %2610 = vmatpush1.msra.mxu0 0.0
    %2611 = vmatprep.subr.mxu0 0.0
    %2612 = vmatpush1.msra.mxu0 0.0
    %2613 = vmatprep.subr.mxu0 0.0
    %2614 = vmatpush1.msra.mxu0 0.0
    %2615 = vmatprep.subr.mxu0 0.0
    %2616 = vmatpush1.msra.mxu0 0.0
    %2617 = vmatprep.subr.mxu0 0.0
    %2618 = vmatpush1.msra.mxu0 0.0
    %2619 = vmatprep.subr.mxu0 0.0
    %2620 = vmatpush1.msra.mxu0 0.0
    %2621 = vmatprep.subr.mxu0 0.0
    %2622 = vmatpush1.msra.mxu0 0.0
    %2623 = vmatprep.subr.mxu0 0.0
    %2624 = vmatpush1.msra.mxu0 0.0
    %2625 = vmatprep.subr.mxu0 0.0
    %2626 = vmatpush1.msra.mxu0 0.0
    %2627 = vmatprep.subr.mxu0 0.0
    %2628 = vmatpush1.msra.mxu0 0.0
    %2629 = vmatprep.subr.mxu0 0.0
    %2630 = vmatpush1.msra.mxu0 0.0
    %2631 = vmatprep.subr.mxu0 0.0
    %2632 = vmatpush1.msra.mxu0 0.0
    %2633 = vmatprep.subr.mxu0 0.0
    %2634 = vmatpush1.msra.mxu0 0.0
    %2635 = vmatprep.mubr.f32.mxu0 0.0
    %2636 = vmatmul.mubr.f32.gmra.mrb[0].mxu0 %v2570
    %v2637 = vpop.f32.mrb[0].mxu0
    %v2638 = vadd.f32 %v477, %v2637
    %v2639 = vpop.f32.mrb[0].mxu0
    %v2640 = vadd.f32 %v481, %v2639
    %2641 = vdwg.mxu0
    %2642 = vmatprep.subr.mxu0 0.0
    %2643 = vmatpush1.msra.mxu0 %v361
    %2644 = vmatprep.subr.mxu0 0.0
    %2645 = vmatpush1.msra.mxu0 %v364
    %2646 = vmatprep.subr.mxu0 0.0
    %2647 = vmatpush1.msra.mxu0 %v367
    %2648 = vmatprep.subr.mxu0 0.0
    %2649 = vmatpush1.msra.mxu0 %v370
    %2650 = vmatprep.subr.mxu0 0.0
    %2651 = vmatpush1.msra.mxu0 %v373
    %2652 = vmatprep.subr.mxu0 0.0
    %2653 = vmatpush1.msra.mxu0 %v376
    %2654 = vmatprep.subr.mxu0 0.0
    %2655 = vmatpush1.msra.mxu0 %v379
    %2656 = vmatprep.subr.mxu0 0.0
    %2657 = vmatpush1.msra.mxu0 %v382
    %2658 = vmatprep.subr.mxu0 0.0
    %2659 = vmatpush1.msra.mxu0 %v385
    %2660 = vmatprep.subr.mxu0 0.0
    %2661 = vmatpush1.msra.mxu0 %v388
    %2662 = vmatprep.subr.mxu0 0.0
    %2663 = vmatpush1.msra.mxu0 %v391
    %2664 = vmatprep.subr.mxu0 0.0
    %2665 = vmatpush1.msra.mxu0 %v394
    %2666 = vmatprep.subr.mxu0 0.0
    %2667 = vmatpush1.msra.mxu0 %v397
    %2668 = vmatprep.subr.mxu0 0.0
    %2669 = vmatpush1.msra.mxu0 %v400
    %2670 = vmatprep.subr.mxu0 0.0
    %2671 = vmatpush1.msra.mxu0 %v403
    %2672 = vmatprep.subr.mxu0 0.0
    %2673 = vmatpush1.msra.mxu0 %v406
    %2674 = vmatprep.subr.mxu0 0.0
    %2675 = vmatpush1.msra.mxu0 0.0
    %2676 = vmatprep.subr.mxu0 0.0
    %2677 = vmatpush1.msra.mxu0 0.0
    %2678 = vmatprep.subr.mxu0 0.0
    %2679 = vmatpush1.msra.mxu0 0.0
    %2680 = vmatprep.subr.mxu0 0.0
    %2681 = vmatpush1.msra.mxu0 0.0
    %2682 = vmatprep.subr.mxu0 0.0
    %2683 = vmatpush1.msra.mxu0 0.0
    %2684 = vmatprep.subr.mxu0 0.0
    %2685 = vmatpush1.msra.mxu0 0.0
    %2686 = vmatprep.subr.mxu0 0.0
    %2687 = vmatpush1.msra.mxu0 0.0
    %2688 = vmatprep.subr.mxu0 0.0
    %2689 = vmatpush1.msra.mxu0 0.0
    %2690 = vmatprep.subr.mxu0 0.0
    %2691 = vmatpush1.msra.mxu0 0.0
    %2692 = vmatprep.subr.mxu0 0.0
    %2693 = vmatpush1.msra.mxu0 0.0
    %2694 = vmatprep.subr.mxu0 0.0
    %2695 = vmatpush1.msra.mxu0 0.0
    %2696 = vmatprep.subr.mxu0 0.0
    %2697 = vmatpush1.msra.mxu0 0.0
    %2698 = vmatprep.subr.mxu0 0.0
    %2699 = vmatpush1.msra.mxu0 0.0
    %2700 = vmatprep.subr.mxu0 0.0
    %2701 = vmatpush1.msra.mxu0 0.0
    %2702 = vmatprep.subr.mxu0 0.0
    %2703 = vmatpush1.msra.mxu0 0.0
    %2704 = vmatprep.subr.mxu0 0.0
    %2705 = vmatpush1.msra.mxu0 0.0
    %2706 = vmatprep.mubr.f32.mxu0 0.0
    %2707 = vmatmul.mubr.f32.gmra.mrb[0].mxu0 %v2570
    %v2708 = vpop.f32.mrb[0].mxu0
    %v2709 = vadd.f32 %v485, %v2708
    %v2710 = vpop.f32.mrb[0].mxu0
    %2711 = vdwg.mxu0
    %2712 = vmatprep.subr.mxu0 %v408
    %2713 = vmatpush1.msra.mxu0 %v407
    %2714 = vmatprep.subr.mxu0 %v411
    %2715 = vmatpush1.msra.mxu0 %v410
    %2716 = vmatprep.subr.mxu0 %v414
    %2717 = vmatpush1.msra.mxu0 %v413
    %2718 = vmatprep.subr.mxu0 %v417
    %2719 = vmatpush1.msra.mxu0 %v416
    %2720 = vmatprep.subr.mxu0 %v420
    %2721 = vmatpush1.msra.mxu0 %v419
    %2722 = vmatprep.subr.mxu0 %v423
    %2723 = vmatpush1.msra.mxu0 %v422
    %2724 = vmatprep.subr.mxu0 %v426
    %2725 = vmatpush1.msra.mxu0 %v425
    %2726 = vmatprep.subr.mxu0 %v429
    %2727 = vmatpush1.msra.mxu0 %v428
    %2728 = vmatprep.subr.mxu0 %v432
    %2729 = vmatpush1.msra.mxu0 %v431
    %2730 = vmatprep.subr.mxu0 %v435
    %2731 = vmatpush1.msra.mxu0 %v434
    %2732 = vmatprep.subr.mxu0 %v438
    %2733 = vmatpush1.msra.mxu0 %v437
    %2734 = vmatprep.subr.mxu0 %v441
    %2735 = vmatpush1.msra.mxu0 %v440
    %2736 = vmatprep.subr.mxu0 %v444
    %2737 = vmatpush1.msra.mxu0 %v443
    %2738 = vmatprep.subr.mxu0 %v447
    %2739 = vmatpush1.msra.mxu0 %v446
    %2740 = vmatprep.subr.mxu0 %v450
    %2741 = vmatpush1.msra.mxu0 %v449
    %2742 = vmatprep.subr.mxu0 %v453
    %2743 = vmatpush1.msra.mxu0 %v452
    %2744 = vmatprep.subr.mxu0 0.0
    %2745 = vmatpush1.msra.mxu0 0.0
    %2746 = vmatprep.subr.mxu0 0.0
    %2747 = vmatpush1.msra.mxu0 0.0
    %2748 = vmatprep.subr.mxu0 0.0
    %2749 = vmatpush1.msra.mxu0 0.0
    %2750 = vmatprep.subr.mxu0 0.0
    %2751 = vmatpush1.msra.mxu0 0.0
    %2752 = vmatprep.subr.mxu0 0.0
    %2753 = vmatpush1.msra.mxu0 0.0
    %2754 = vmatprep.subr.mxu0 0.0
    %2755 = vmatpush1.msra.mxu0 0.0
    %2756 = vmatprep.subr.mxu0 0.0
    %2757 = vmatpush1.msra.mxu0 0.0
    %2758 = vmatprep.subr.mxu0 0.0
    %2759 = vmatpush1.msra.mxu0 0.0
    %2760 = vmatprep.subr.mxu0 0.0
    %2761 = vmatpush1.msra.mxu0 0.0
    %2762 = vmatprep.subr.mxu0 0.0
    %2763 = vmatpush1.msra.mxu0 0.0
    %2764 = vmatprep.subr.mxu0 0.0
    %2765 = vmatpush1.msra.mxu0 0.0
    %2766 = vmatprep.subr.mxu0 0.0
    %2767 = vmatpush1.msra.mxu0 0.0
    %2768 = vmatprep.subr.mxu0 0.0
    %2769 = vmatpush1.msra.mxu0 0.0
    %2770 = vmatprep.subr.mxu0 0.0
    %2771 = vmatpush1.msra.mxu0 0.0
    %2772 = vmatprep.subr.mxu0 0.0
    %2773 = vmatpush1.msra.mxu0 0.0
    %2774 = vmatprep.subr.mxu0 0.0
    %2775 = vmatpush1.msra.mxu0 0.0
    %2776 = vmatprep.mubr.f32.mxu0 0.0
    %2777 = vmatmul.mubr.f32.gmra.mrb[0].mxu0 %v2408
    %v2778 = vpop.f32.mrb[0].mxu0
    %v2779 = vadd.f32 %v494, %v2778
    %v2780 = vpop.f32.mrb[0].mxu0
    %v2781 = vadd.f32 %v498, %v2780
    %2782 = vdwg.mxu0
    %2783 = vmatprep.subr.mxu0 0.0
    %2784 = vmatpush1.msra.mxu0 %v409
    %2785 = vmatprep.subr.mxu0 0.0
    %2786 = vmatpush1.msra.mxu0 %v412
    %2787 = vmatprep.subr.mxu0 0.0
    %2788 = vmatpush1.msra.mxu0 %v415
    %2789 = vmatprep.subr.mxu0 0.0
    %2790 = vmatpush1.msra.mxu0 %v418
    %2791 = vmatprep.subr.mxu0 0.0
    %2792 = vmatpush1.msra.mxu0 %v421
    %2793 = vmatprep.subr.mxu0 0.0
    %2794 = vmatpush1.msra.mxu0 %v424
    %2795 = vmatprep.subr.mxu0 0.0
    %2796 = vmatpush1.msra.mxu0 %v427
    %2797 = vmatprep.subr.mxu0 0.0
    %2798 = vmatpush1.msra.mxu0 %v430
    %2799 = vmatprep.subr.mxu0 0.0
    %2800 = vmatpush1.msra.mxu0 %v433
    %2801 = vmatprep.subr.mxu0 0.0
    %2802 = vmatpush1.msra.mxu0 %v436
    %2803 = vmatprep.subr.mxu0 0.0
    %2804 = vmatpush1.msra.mxu0 %v439
    %2805 = vmatprep.subr.mxu0 0.0
    %2806 = vmatpush1.msra.mxu0 %v442
    %2807 = vmatprep.subr.mxu0 0.0
    %2808 = vmatpush1.msra.mxu0 %v445
    %2809 = vmatprep.subr.mxu0 0.0
    %2810 = vmatpush1.msra.mxu0 %v448
    %2811 = vmatprep.subr.mxu0 0.0
    %2812 = vmatpush1.msra.mxu0 %v451
    %2813 = vmatprep.subr.mxu0 0.0
    %2814 = vmatpush1.msra.mxu0 %v454
    %2815 = vmatprep.subr.mxu0 0.0
    %2816 = vmatpush1.msra.mxu0 0.0
    %2817 = vmatprep.subr.mxu0 0.0
    %2818 = vmatpush1.msra.mxu0 0.0
    %2819 = vmatprep.subr.mxu0 0.0
    %2820 = vmatpush1.msra.mxu0 0.0
    %2821 = vmatprep.subr.mxu0 0.0
    %2822 = vmatpush1.msra.mxu0 0.0
    %2823 = vmatprep.subr.mxu0 0.0
    %2824 = vmatpush1.msra.mxu0 0.0
    %2825 = vmatprep.subr.mxu0 0.0
    %2826 = vmatpush1.msra.mxu0 0.0
    %2827 = vmatprep.subr.mxu0 0.0
    %2828 = vmatpush1.msra.mxu0 0.0
    %2829 = vmatprep.subr.mxu0 0.0
    %2830 = vmatpush1.msra.mxu0 0.0
    %2831 = vmatprep.subr.mxu0 0.0
    %2832 = vmatpush1.msra.mxu0 0.0
    %2833 = vmatprep.subr.mxu0 0.0
    %2834 = vmatpush1.msra.mxu0 0.0
    %2835 = vmatprep.subr.mxu0 0.0
    %2836 = vmatpush1.msra.mxu0 0.0
    %2837 = vmatprep.subr.mxu0 0.0
    %2838 = vmatpush1.msra.mxu0 0.0
    %2839 = vmatprep.subr.mxu0 0.0
    %2840 = vmatpush1.msra.mxu0 0.0
    %2841 = vmatprep.subr.mxu0 0.0
    %2842 = vmatpush1.msra.mxu0 0.0
    %2843 = vmatprep.subr.mxu0 0.0
    %2844 = vmatpush1.msra.mxu0 0.0
    %2845 = vmatprep.subr.mxu0 0.0
    %2846 = vmatpush1.msra.mxu0 0.0
    %2847 = vmatprep.mubr.f32.mxu0 0.0
    %2848 = vmatmul.mubr.f32.gmra.mrb[0].mxu0 %v2408
    %v2849 = vpop.f32.mrb[0].mxu0
    %v2850 = vadd.f32 %v502, %v2849
    %v2851 = vpop.f32.mrb[0].mxu0
    %2852 = vdwg.mxu0
    %v2853 = vadd.f32 %v2638, %v2779
    %v2854 = vxor.u32 %v2853, 2147483648
    %v2855 = vmul.f32 %v2854, 1.442695
    %v2856 = vpow.pop %v2855
    %v2857 = vadd.f32 %v2856, 1.0
    %v2858 = vrcp.pop %v2857
    %v2859 = vmul.f32 1.0, %v2858
    %v2860 = vadd.f32 %v2640, %v2781
    %v2861 = vxor.u32 %v2860, 2147483648
    %v2862 = vmul.f32 %v2861, 1.442695
    %v2863 = vpow.pop %v2862
    %v2864 = vadd.f32 %v2863, 1.0
    %v2865 = vrcp.pop %v2864
    %v2866 = vmul.f32 1.0, %v2865
    %v2867 = vmul.f32 %v2859, %v2850
    %v2868 = vadd.f32 %v2709, %v2867
    %v2869 = vtanh.pop %v2868
    %v2870 = vsub.f32 1.0, %v2866
    %v2871 = vmul.f32 %v2870, %v2869
    %v2872 = vmul.f32 %v2866, %v2408
    %v2873 = vadd.f32 %v2871, %v2872
    %2874 = vmatprep.subr.mxu0 %v312
    %2875 = vmatpush1.msra.mxu0 %v311
    %2876 = vmatprep.subr.mxu0 %v315
    %2877 = vmatpush1.msra.mxu0 %v314
    %2878 = vmatprep.subr.mxu0 %v318
    %2879 = vmatpush1.msra.mxu0 %v317
    %2880 = vmatprep.subr.mxu0 %v321
    %2881 = vmatpush1.msra.mxu0 %v320
    %2882 = vmatprep.subr.mxu0 %v324
    %2883 = vmatpush1.msra.mxu0 %v323
    %2884 = vmatprep.subr.mxu0 %v327
    %2885 = vmatpush1.msra.mxu0 %v326
    %2886 = vmatprep.subr.mxu0 %v330
    %2887 = vmatpush1.msra.mxu0 %v329
    %2888 = vmatprep.subr.mxu0 %v333
    %2889 = vmatpush1.msra.mxu0 %v332
    %2890 = vmatprep.subr.mxu0 %v336
    %2891 = vmatpush1.msra.mxu0 %v335
    %2892 = vmatprep.subr.mxu0 %v339
    %2893 = vmatpush1.msra.mxu0 %v338
    %2894 = vmatprep.subr.mxu0 %v342
    %2895 = vmatpush1.msra.mxu0 %v341
    %2896 = vmatprep.subr.mxu0 %v345
    %2897 = vmatpush1.msra.mxu0 %v344
    %2898 = vmatprep.subr.mxu0 %v348
    %2899 = vmatpush1.msra.mxu0 %v347
    %2900 = vmatprep.subr.mxu0 %v351
    %2901 = vmatpush1.msra.mxu0 %v350
    %2902 = vmatprep.subr.mxu0 %v354
    %2903 = vmatpush1.msra.mxu0 %v353
    %2904 = vmatprep.subr.mxu0 %v357
    %2905 = vmatpush1.msra.mxu0 %v356
    %2906 = vmatprep.subr.mxu0 0.0
    %2907 = vmatpush1.msra.mxu0 0.0
    %2908 = vmatprep.subr.mxu0 0.0
    %2909 = vmatpush1.msra.mxu0 0.0
    %2910 = vmatprep.subr.mxu0 0.0
    %2911 = vmatpush1.msra.mxu0 0.0
    %2912 = vmatprep.subr.mxu0 0.0
    %2913 = vmatpush1.msra.mxu0 0.0
    %2914 = vmatprep.subr.mxu0 0.0
    %2915 = vmatpush1.msra.mxu0 0.0
    %2916 = vmatprep.subr.mxu0 0.0
    %2917 = vmatpush1.msra.mxu0 0.0
    %2918 = vmatprep.subr.mxu0 0.0
    %2919 = vmatpush1.msra.mxu0 0.0
    %2920 = vmatprep.subr.mxu0 0.0
    %2921 = vmatpush1.msra.mxu0 0.0
    %2922 = vmatprep.subr.mxu0 0.0
    %2923 = vmatpush1.msra.mxu0 0.0
    %2924 = vmatprep.subr.mxu0 0.0
    %2925 = vmatpush1.msra.mxu0 0.0
    %2926 = vmatprep.subr.mxu0 0.0
    %2927 = vmatpush1.msra.mxu0 0.0
    %2928 = vmatprep.subr.mxu0 0.0
    %2929 = vmatpush1.msra.mxu0 0.0
    %2930 = vmatprep.subr.mxu0 0.0
    %2931 = vmatpush1.msra.mxu0 0.0
    %2932 = vmatprep.subr.mxu0 0.0
    %2933 = vmatpush1.msra.mxu0 0.0
    %2934 = vmatprep.subr.mxu0 0.0
    %2935 = vmatpush1.msra.mxu0 0.0
    %2936 = vmatprep.subr.mxu0 0.0
    %2937 = vmatpush1.msra.mxu0 0.0
    %2938 = vmatprep.mubr.f32.mxu0 0.0
    %2939 = vmatmul.mubr.f32.gmra.mrb[0].mxu0 %v2570
    %v2940 = vpop.f32.mrb[0].mxu0
    %v2941 = vadd.f32 %v460, %v2940
    %v2942 = vpop.f32.mrb[0].mxu0
    %v2943 = vadd.f32 %v464, %v2942
    %2944 = vdwg.mxu0
    %2945 = vmatprep.subr.mxu0 0.0
    %2946 = vmatpush1.msra.mxu0 %v313
    %2947 = vmatprep.subr.mxu0 0.0
    %2948 = vmatpush1.msra.mxu0 %v316
    %2949 = vmatprep.subr.mxu0 0.0
    %2950 = vmatpush1.msra.mxu0 %v319
    %2951 = vmatprep.subr.mxu0 0.0
    %2952 = vmatpush1.msra.mxu0 %v322
    %2953 = vmatprep.subr.mxu0 0.0
    %2954 = vmatpush1.msra.mxu0 %v325
    %2955 = vmatprep.subr.mxu0 0.0
    %2956 = vmatpush1.msra.mxu0 %v328
    %2957 = vmatprep.subr.mxu0 0.0
    %2958 = vmatpush1.msra.mxu0 %v331
    %2959 = vmatprep.subr.mxu0 0.0
    %2960 = vmatpush1.msra.mxu0 %v334
    %2961 = vmatprep.subr.mxu0 0.0
    %2962 = vmatpush1.msra.mxu0 %v337
    %2963 = vmatprep.subr.mxu0 0.0
    %2964 = vmatpush1.msra.mxu0 %v340
    %2965 = vmatprep.subr.mxu0 0.0
    %2966 = vmatpush1.msra.mxu0 %v343
    %2967 = vmatprep.subr.mxu0 0.0
    %2968 = vmatpush1.msra.mxu0 %v346
    %2969 = vmatprep.subr.mxu0 0.0
    %2970 = vmatpush1.msra.mxu0 %v349
    %2971 = vmatprep.subr.mxu0 0.0
    %2972 = vmatpush1.msra.mxu0 %v352
    %2973 = vmatprep.subr.mxu0 0.0
    %2974 = vmatpush1.msra.mxu0 %v355
    %2975 = vmatprep.subr.mxu0 0.0
    %2976 = vmatpush1.msra.mxu0 %v358
    %2977 = vmatprep.subr.mxu0 0.0
    %2978 = vmatpush1.msra.mxu0 0.0
    %2979 = vmatprep.subr.mxu0 0.0
    %2980 = vmatpush1.msra.mxu0 0.0
    %2981 = vmatprep.subr.mxu0 0.0
    %2982 = vmatpush1.msra.mxu0 0.0
    %2983 = vmatprep.subr.mxu0 0.0
    %2984 = vmatpush1.msra.mxu0 0.0
    %2985 = vmatprep.subr.mxu0 0.0
    %2986 = vmatpush1.msra.mxu0 0.0
    %2987 = vmatprep.subr.mxu0 0.0
    %2988 = vmatpush1.msra.mxu0 0.0
    %2989 = vmatprep.subr.mxu0 0.0
    %2990 = vmatpush1.msra.mxu0 0.0
    %2991 = vmatprep.subr.mxu0 0.0
    %2992 = vmatpush1.msra.mxu0 0.0
    %2993 = vmatprep.subr.mxu0 0.0
    %2994 = vmatpush1.msra.mxu0 0.0
    %2995 = vmatprep.subr.mxu0 0.0
    %2996 = vmatpush1.msra.mxu0 0.0
    %2997 = vmatprep.subr.mxu0 0.0
    %2998 = vmatpush1.msra.mxu0 0.0
    %2999 = vmatprep.subr.mxu0 0.0
    %3000 = vmatpush1.msra.mxu0 0.0
    %3001 = vmatprep.subr.mxu0 0.0
    %3002 = vmatpush1.msra.mxu0 0.0
    %3003 = vmatprep.subr.mxu0 0.0
    %3004 = vmatpush1.msra.mxu0 0.0
    %3005 = vmatprep.subr.mxu0 0.0
    %3006 = vmatpush1.msra.mxu0 0.0
    %3007 = vmatprep.subr.mxu0 0.0
    %3008 = vmatpush1.msra.mxu0 0.0
    %3009 = vmatprep.mubr.f32.mxu0 0.0
    %3010 = vmatmul.mubr.f32.gmra.mrb[0].mxu0 %v2570
    %v3011 = vpop.f32.mrb[0].mxu0
    %v3012 = vadd.f32 %v468, %v3011
    %v3013 = vpop.f32.mrb[0].mxu0
    %3014 = vdwg.mxu0
    %v3016 = vrot.slane %v2941, 6
    %v3018 = vadd.f32 %v232, %v3016
    %v3019 = vxor.u32 %v3018, 2147483648
    %v3020 = vmul.f32 %v3019, 1.442695
    %v3021 = vpow.pop %v3020
    %v3022 = vadd.f32 %v3021, 1.0
    %v3023 = vrcp.pop %v3022
    %v3024 = vmul.f32 1.0, %v3023
    %v3026 = vrot.slane %v2943, 6
    %v3028 = vadd.f32 %v234, %v3026
    %v3029 = vxor.u32 %v3028, 2147483648
    %v3030 = vmul.f32 %v3029, 1.442695
    %v3031 = vpow.pop %v3030
    %v3032 = vadd.f32 %v3031, 1.0
    %v3033 = vrcp.pop %v3032
    %v3034 = vmul.f32 1.0, %v3033
    %v3036 = vrot.slane %v3012, 6
    %v3038 = vmul.f32 %v3024, %v3036
    %v3039 = vadd.f32 %v308, %v3038
    %v3040 = vtanh.pop %v3039
    %v3041 = vsub.f32 1.0, %v3034
    %v3042 = vmul.f32 %v3041, %v3040
    %v3044 = vrot.slane %v2570, 6
    %v3046 = vmul.f32 %v3034, %v3044
    %v3047 = vadd.f32 %v3042, %v3046
    %v3049 = vrot.slane %v3047, 2
    %3051 = vmatprep.subr.mxu0 %v360
    %3052 = vmatpush1.msra.mxu0 %v359
    %3053 = vmatprep.subr.mxu0 %v363
    %3054 = vmatpush1.msra.mxu0 %v362
    %3055 = vmatprep.subr.mxu0 %v366
    %3056 = vmatpush1.msra.mxu0 %v365
    %3057 = vmatprep.subr.mxu0 %v369
    %3058 = vmatpush1.msra.mxu0 %v368
    %3059 = vmatprep.subr.mxu0 %v372
    %3060 = vmatpush1.msra.mxu0 %v371
    %3061 = vmatprep.subr.mxu0 %v375
    %3062 = vmatpush1.msra.mxu0 %v374
    %3063 = vmatprep.subr.mxu0 %v378
    %3064 = vmatpush1.msra.mxu0 %v377
    %3065 = vmatprep.subr.mxu0 %v381
    %3066 = vmatpush1.msra.mxu0 %v380
    %3067 = vmatprep.subr.mxu0 %v384
    %3068 = vmatpush1.msra.mxu0 %v383
    %3069 = vmatprep.subr.mxu0 %v387
    %3070 = vmatpush1.msra.mxu0 %v386
    %3071 = vmatprep.subr.mxu0 %v390
    %3072 = vmatpush1.msra.mxu0 %v389
    %3073 = vmatprep.subr.mxu0 %v393
    %3074 = vmatpush1.msra.mxu0 %v392
    %3075 = vmatprep.subr.mxu0 %v396
    %3076 = vmatpush1.msra.mxu0 %v395
    %3077 = vmatprep.subr.mxu0 %v399
    %3078 = vmatpush1.msra.mxu0 %v398
    %3079 = vmatprep.subr.mxu0 %v402
    %3080 = vmatpush1.msra.mxu0 %v401
    %3081 = vmatprep.subr.mxu0 %v405
    %3082 = vmatpush1.msra.mxu0 %v404
    %3083 = vmatprep.subr.mxu0 0.0
    %3084 = vmatpush1.msra.mxu0 0.0
    %3085 = vmatprep.subr.mxu0 0.0
    %3086 = vmatpush1.msra.mxu0 0.0
    %3087 = vmatprep.subr.mxu0 0.0
    %3088 = vmatpush1.msra.mxu0 0.0
    %3089 = vmatprep.subr.mxu0 0.0
    %3090 = vmatpush1.msra.mxu0 0.0
    %3091 = vmatprep.subr.mxu0 0.0
    %3092 = vmatpush1.msra.mxu0 0.0
    %3093 = vmatprep.subr.mxu0 0.0
    %3094 = vmatpush1.msra.mxu0 0.0
    %3095 = vmatprep.subr.mxu0 0.0
    %3096 = vmatpush1.msra.mxu0 0.0
    %3097 = vmatprep.subr.mxu0 0.0
    %3098 = vmatpush1.msra.mxu0 0.0
    %3099 = vmatprep.subr.mxu0 0.0
    %3100 = vmatpush1.msra.mxu0 0.0
    %3101 = vmatprep.subr.mxu0 0.0
    %3102 = vmatpush1.msra.mxu0 0.0
    %3103 = vmatprep.subr.mxu0 0.0
    %3104 = vmatpush1.msra.mxu0 0.0
    %3105 = vmatprep.subr.mxu0 0.0
    %3106 = vmatpush1.msra.mxu0 0.0
    %3107 = vmatprep.subr.mxu0 0.0
    %3108 = vmatpush1.msra.mxu0 0.0
    %3109 = vmatprep.subr.mxu0 0.0
    %3110 = vmatpush1.msra.mxu0 0.0
    %3111 = vmatprep.subr.mxu0 0.0
    %3112 = vmatpush1.msra.mxu0 0.0
    %3113 = vmatprep.subr.mxu0 0.0
    %3114 = vmatpush1.msra.mxu0 0.0
    %3115 = vmatprep.mubr.f32.mxu0 0.0
    %3116 = vmatmul.mubr.f32.gmra.mrb[0].mxu0 %v3049
    %v3117 = vpop.f32.mrb[0].mxu0
    %v3118 = vadd.f32 %v477, %v3117
    %v3119 = vpop.f32.mrb[0].mxu0
    %v3120 = vadd.f32 %v481, %v3119
    %3121 = vdwg.mxu0
    %3122 = vmatprep.subr.mxu0 0.0
    %3123 = vmatpush1.msra.mxu0 %v361
    %3124 = vmatprep.subr.mxu0 0.0
    %3125 = vmatpush1.msra.mxu0 %v364
    %3126 = vmatprep.subr.mxu0 0.0
    %3127 = vmatpush1.msra.mxu0 %v367
    %3128 = vmatprep.subr.mxu0 0.0
    %3129 = vmatpush1.msra.mxu0 %v370
    %3130 = vmatprep.subr.mxu0 0.0
    %3131 = vmatpush1.msra.mxu0 %v373
    %3132 = vmatprep.subr.mxu0 0.0
    %3133 = vmatpush1.msra.mxu0 %v376
    %3134 = vmatprep.subr.mxu0 0.0
    %3135 = vmatpush1.msra.mxu0 %v379
    %3136 = vmatprep.subr.mxu0 0.0
    %3137 = vmatpush1.msra.mxu0 %v382
    %3138 = vmatprep.subr.mxu0 0.0
    %3139 = vmatpush1.msra.mxu0 %v385
    %3140 = vmatprep.subr.mxu0 0.0
    %3141 = vmatpush1.msra.mxu0 %v388
    %3142 = vmatprep.subr.mxu0 0.0
    %3143 = vmatpush1.msra.mxu0 %v391
    %3144 = vmatprep.subr.mxu0 0.0
    %3145 = vmatpush1.msra.mxu0 %v394
    %3146 = vmatprep.subr.mxu0 0.0
    %3147 = vmatpush1.msra.mxu0 %v397
    %3148 = vmatprep.subr.mxu0 0.0
    %3149 = vmatpush1.msra.mxu0 %v400
    %3150 = vmatprep.subr.mxu0 0.0
    %3151 = vmatpush1.msra.mxu0 %v403
    %3152 = vmatprep.subr.mxu0 0.0
    %3153 = vmatpush1.msra.mxu0 %v406
    %3154 = vmatprep.subr.mxu0 0.0
    %3155 = vmatpush1.msra.mxu0 0.0
    %3156 = vmatprep.subr.mxu0 0.0
    %3157 = vmatpush1.msra.mxu0 0.0
    %3158 = vmatprep.subr.mxu0 0.0
    %3159 = vmatpush1.msra.mxu0 0.0
    %3160 = vmatprep.subr.mxu0 0.0
    %3161 = vmatpush1.msra.mxu0 0.0
    %3162 = vmatprep.subr.mxu0 0.0
    %3163 = vmatpush1.msra.mxu0 0.0
    %3164 = vmatprep.subr.mxu0 0.0
    %3165 = vmatpush1.msra.mxu0 0.0
    %3166 = vmatprep.subr.mxu0 0.0
    %3167 = vmatpush1.msra.mxu0 0.0
    %3168 = vmatprep.subr.mxu0 0.0
    %3169 = vmatpush1.msra.mxu0 0.0
    %3170 = vmatprep.subr.mxu0 0.0
    %3171 = vmatpush1.msra.mxu0 0.0
    %3172 = vmatprep.subr.mxu0 0.0
    %3173 = vmatpush1.msra.mxu0 0.0
    %3174 = vmatprep.subr.mxu0 0.0
    %3175 = vmatpush1.msra.mxu0 0.0
    %3176 = vmatprep.subr.mxu0 0.0
    %3177 = vmatpush1.msra.mxu0 0.0
    %3178 = vmatprep.subr.mxu0 0.0
    %3179 = vmatpush1.msra.mxu0 0.0
    %3180 = vmatprep.subr.mxu0 0.0
    %3181 = vmatpush1.msra.mxu0 0.0
    %3182 = vmatprep.subr.mxu0 0.0
    %3183 = vmatpush1.msra.mxu0 0.0
    %3184 = vmatprep.subr.mxu0 0.0
    %3185 = vmatpush1.msra.mxu0 0.0
    %3186 = vmatprep.mubr.f32.mxu0 0.0
    %3187 = vmatmul.mubr.f32.gmra.mrb[0].mxu0 %v3049
    %v3188 = vpop.f32.mrb[0].mxu0
    %v3189 = vadd.f32 %v485, %v3188
    %v3190 = vpop.f32.mrb[0].mxu0
    %3191 = vdwg.mxu0
    %3192 = vmatprep.subr.mxu0 %v408
    %3193 = vmatpush1.msra.mxu0 %v407
    %3194 = vmatprep.subr.mxu0 %v411
    %3195 = vmatpush1.msra.mxu0 %v410
    %3196 = vmatprep.subr.mxu0 %v414
    %3197 = vmatpush1.msra.mxu0 %v413
    %3198 = vmatprep.subr.mxu0 %v417
    %3199 = vmatpush1.msra.mxu0 %v416
    %3200 = vmatprep.subr.mxu0 %v420
    %3201 = vmatpush1.msra.mxu0 %v419
    %3202 = vmatprep.subr.mxu0 %v423
    %3203 = vmatpush1.msra.mxu0 %v422
    %3204 = vmatprep.subr.mxu0 %v426
    %3205 = vmatpush1.msra.mxu0 %v425
    %3206 = vmatprep.subr.mxu0 %v429
    %3207 = vmatpush1.msra.mxu0 %v428
    %3208 = vmatprep.subr.mxu0 %v432
    %3209 = vmatpush1.msra.mxu0 %v431
    %3210 = vmatprep.subr.mxu0 %v435
    %3211 = vmatpush1.msra.mxu0 %v434
    %3212 = vmatprep.subr.mxu0 %v438
    %3213 = vmatpush1.msra.mxu0 %v437
    %3214 = vmatprep.subr.mxu0 %v441
    %3215 = vmatpush1.msra.mxu0 %v440
    %3216 = vmatprep.subr.mxu0 %v444
    %3217 = vmatpush1.msra.mxu0 %v443
    %3218 = vmatprep.subr.mxu0 %v447
    %3219 = vmatpush1.msra.mxu0 %v446
    %3220 = vmatprep.subr.mxu0 %v450
    %3221 = vmatpush1.msra.mxu0 %v449
    %3222 = vmatprep.subr.mxu0 %v453
    %3223 = vmatpush1.msra.mxu0 %v452
    %3224 = vmatprep.subr.mxu0 0.0
    %3225 = vmatpush1.msra.mxu0 0.0
    %3226 = vmatprep.subr.mxu0 0.0
    %3227 = vmatpush1.msra.mxu0 0.0
    %3228 = vmatprep.subr.mxu0 0.0
    %3229 = vmatpush1.msra.mxu0 0.0
    %3230 = vmatprep.subr.mxu0 0.0
    %3231 = vmatpush1.msra.mxu0 0.0
    %3232 = vmatprep.subr.mxu0 0.0
    %3233 = vmatpush1.msra.mxu0 0.0
    %3234 = vmatprep.subr.mxu0 0.0
    %3235 = vmatpush1.msra.mxu0 0.0
    %3236 = vmatprep.subr.mxu0 0.0
    %3237 = vmatpush1.msra.mxu0 0.0
    %3238 = vmatprep.subr.mxu0 0.0
    %3239 = vmatpush1.msra.mxu0 0.0
    %3240 = vmatprep.subr.mxu0 0.0
    %3241 = vmatpush1.msra.mxu0 0.0
    %3242 = vmatprep.subr.mxu0 0.0
    %3243 = vmatpush1.msra.mxu0 0.0
    %3244 = vmatprep.subr.mxu0 0.0
    %3245 = vmatpush1.msra.mxu0 0.0
    %3246 = vmatprep.subr.mxu0 0.0
    %3247 = vmatpush1.msra.mxu0 0.0
    %3248 = vmatprep.subr.mxu0 0.0
    %3249 = vmatpush1.msra.mxu0 0.0
    %3250 = vmatprep.subr.mxu0 0.0
    %3251 = vmatpush1.msra.mxu0 0.0
    %3252 = vmatprep.subr.mxu0 0.0
    %3253 = vmatpush1.msra.mxu0 0.0
    %3254 = vmatprep.subr.mxu0 0.0
    %3255 = vmatpush1.msra.mxu0 0.0
    %3256 = vmatprep.mubr.f32.mxu0 0.0
    %3257 = vmatmul.mubr.f32.gmra.mrb[0].mxu0 %v2873
    %v3258 = vpop.f32.mrb[0].mxu0
    %v3259 = vadd.f32 %v494, %v3258
    %v3260 = vpop.f32.mrb[0].mxu0
    %v3261 = vadd.f32 %v498, %v3260
    %3262 = vdwg.mxu0
    %3263 = vmatprep.subr.mxu0 0.0
    %3264 = vmatpush1.msra.mxu0 %v409
    %3265 = vmatprep.subr.mxu0 0.0
    %3266 = vmatpush1.msra.mxu0 %v412
    %3267 = vmatprep.subr.mxu0 0.0
    %3268 = vmatpush1.msra.mxu0 %v415
    %3269 = vmatprep.subr.mxu0 0.0
    %3270 = vmatpush1.msra.mxu0 %v418
    %3271 = vmatprep.subr.mxu0 0.0
    %3272 = vmatpush1.msra.mxu0 %v421
    %3273 = vmatprep.subr.mxu0 0.0
    %3274 = vmatpush1.msra.mxu0 %v424
    %3275 = vmatprep.subr.mxu0 0.0
    %3276 = vmatpush1.msra.mxu0 %v427
    %3277 = vmatprep.subr.mxu0 0.0
    %3278 = vmatpush1.msra.mxu0 %v430
    %3279 = vmatprep.subr.mxu0 0.0
    %3280 = vmatpush1.msra.mxu0 %v433
    %3281 = vmatprep.subr.mxu0 0.0
    %3282 = vmatpush1.msra.mxu0 %v436
    %3283 = vmatprep.subr.mxu0 0.0
    %3284 = vmatpush1.msra.mxu0 %v439
    %3285 = vmatprep.subr.mxu0 0.0
    %3286 = vmatpush1.msra.mxu0 %v442
    %3287 = vmatprep.subr.mxu0 0.0
    %3288 = vmatpush1.msra.mxu0 %v445
    %3289 = vmatprep.subr.mxu0 0.0
    %3290 = vmatpush1.msra.mxu0 %v448
    %3291 = vmatprep.subr.mxu0 0.0
    %3292 = vmatpush1.msra.mxu0 %v451
    %3293 = vmatprep.subr.mxu0 0.0
    %3294 = vmatpush1.msra.mxu0 %v454
    %3295 = vmatprep.subr.mxu0 0.0
    %3296 = vmatpush1.msra.mxu0 0.0
    %3297 = vmatprep.subr.mxu0 0.0
    %3298 = vmatpush1.msra.mxu0 0.0
    %3299 = vmatprep.subr.mxu0 0.0
    %3300 = vmatpush1.msra.mxu0 0.0
    %3301 = vmatprep.subr.mxu0 0.0
    %3302 = vmatpush1.msra.mxu0 0.0
    %3303 = vmatprep.subr.mxu0 0.0
    %3304 = vmatpush1.msra.mxu0 0.0
    %3305 = vmatprep.subr.mxu0 0.0
    %3306 = vmatpush1.msra.mxu0 0.0
    %3307 = vmatprep.subr.mxu0 0.0
    %3308 = vmatpush1.msra.mxu0 0.0
    %3309 = vmatprep.subr.mxu0 0.0
    %3310 = vmatpush1.msra.mxu0 0.0
    %3311 = vmatprep.subr.mxu0 0.0
    %3312 = vmatpush1.msra.mxu0 0.0
    %3313 = vmatprep.subr.mxu0 0.0
    %3314 = vmatpush1.msra.mxu0 0.0
    %3315 = vmatprep.subr.mxu0 0.0
    %3316 = vmatpush1.msra.mxu0 0.0
    %3317 = vmatprep.subr.mxu0 0.0
    %3318 = vmatpush1.msra.mxu0 0.0
    %3319 = vmatprep.subr.mxu0 0.0
    %3320 = vmatpush1.msra.mxu0 0.0
    %3321 = vmatprep.subr.mxu0 0.0
    %3322 = vmatpush1.msra.mxu0 0.0
    %3323 = vmatprep.subr.mxu0 0.0
    %3324 = vmatpush1.msra.mxu0 0.0
    %3325 = vmatprep.subr.mxu0 0.0
    %3326 = vmatpush1.msra.mxu0 0.0
    %3327 = vmatprep.mubr.f32.mxu0 0.0
    %3328 = vmatmul.mubr.f32.gmra.mrb[0].mxu0 %v2873
    %v3329 = vpop.f32.mrb[0].mxu0
    %v3330 = vadd.f32 %v502, %v3329
    %v3331 = vpop.f32.mrb[0].mxu0
    %3332 = vdwg.mxu0
    %v3333 = vadd.f32 %v3118, %v3259
    %v3334 = vxor.u32 %v3333, 2147483648
    %v3335 = vmul.f32 %v3334, 1.442695
    %v3336 = vpow.pop %v3335
    %v3337 = vadd.f32 %v3336, 1.0
    %v3338 = vrcp.pop %v3337
    %v3339 = vmul.f32 1.0, %v3338
    %v3340 = vadd.f32 %v3120, %v3261
    %v3341 = vxor.u32 %v3340, 2147483648
    %v3342 = vmul.f32 %v3341, 1.442695
    %v3343 = vpow.pop %v3342
    %v3344 = vadd.f32 %v3343, 1.0
    %v3345 = vrcp.pop %v3344
    %v3346 = vmul.f32 1.0, %v3345
    %v3347 = vmul.f32 %v3339, %v3330
    %v3348 = vadd.f32 %v3189, %v3347
    %v3349 = vtanh.pop %v3348
    %v3350 = vsub.f32 1.0, %v3346
    %v3351 = vmul.f32 %v3350, %v3349
    %v3352 = vmul.f32 %v3346, %v2873
    %v3353 = vadd.f32 %v3351, %v3352
    %3354 = vmatprep.subr.mxu0 %v312
    %3355 = vmatpush1.msra.mxu0 %v311
    %3356 = vmatprep.subr.mxu0 %v315
    %3357 = vmatpush1.msra.mxu0 %v314
    %3358 = vmatprep.subr.mxu0 %v318
    %3359 = vmatpush1.msra.mxu0 %v317
    %3360 = vmatprep.subr.mxu0 %v321
    %3361 = vmatpush1.msra.mxu0 %v320
    %3362 = vmatprep.subr.mxu0 %v324
    %3363 = vmatpush1.msra.mxu0 %v323
    %3364 = vmatprep.subr.mxu0 %v327
    %3365 = vmatpush1.msra.mxu0 %v326
    %3366 = vmatprep.subr.mxu0 %v330
    %3367 = vmatpush1.msra.mxu0 %v329
    %3368 = vmatprep.subr.mxu0 %v333
    %3369 = vmatpush1.msra.mxu0 %v332
    %3370 = vmatprep.subr.mxu0 %v336
    %3371 = vmatpush1.msra.mxu0 %v335
    %3372 = vmatprep.subr.mxu0 %v339
    %3373 = vmatpush1.msra.mxu0 %v338
    %3374 = vmatprep.subr.mxu0 %v342
    %3375 = vmatpush1.msra.mxu0 %v341
    %3376 = vmatprep.subr.mxu0 %v345
    %3377 = vmatpush1.msra.mxu0 %v344
    %3378 = vmatprep.subr.mxu0 %v348
    %3379 = vmatpush1.msra.mxu0 %v347
    %3380 = vmatprep.subr.mxu0 %v351
    %3381 = vmatpush1.msra.mxu0 %v350
    %3382 = vmatprep.subr.mxu0 %v354
    %3383 = vmatpush1.msra.mxu0 %v353
    %3384 = vmatprep.subr.mxu0 %v357
    %3385 = vmatpush1.msra.mxu0 %v356
    %3386 = vmatprep.subr.mxu0 0.0
    %3387 = vmatpush1.msra.mxu0 0.0
    %3388 = vmatprep.subr.mxu0 0.0
    %3389 = vmatpush1.msra.mxu0 0.0
    %3390 = vmatprep.subr.mxu0 0.0
    %3391 = vmatpush1.msra.mxu0 0.0
    %3392 = vmatprep.subr.mxu0 0.0
    %3393 = vmatpush1.msra.mxu0 0.0
    %3394 = vmatprep.subr.mxu0 0.0
    %3395 = vmatpush1.msra.mxu0 0.0
    %3396 = vmatprep.subr.mxu0 0.0
    %3397 = vmatpush1.msra.mxu0 0.0
    %3398 = vmatprep.subr.mxu0 0.0
    %3399 = vmatpush1.msra.mxu0 0.0
    %3400 = vmatprep.subr.mxu0 0.0
    %3401 = vmatpush1.msra.mxu0 0.0
    %3402 = vmatprep.subr.mxu0 0.0
    %3403 = vmatpush1.msra.mxu0 0.0
    %3404 = vmatprep.subr.mxu0 0.0
    %3405 = vmatpush1.msra.mxu0 0.0
    %3406 = vmatprep.subr.mxu0 0.0
    %3407 = vmatpush1.msra.mxu0 0.0
    %3408 = vmatprep.subr.mxu0 0.0
    %3409 = vmatpush1.msra.mxu0 0.0
    %3410 = vmatprep.subr.mxu0 0.0
    %3411 = vmatpush1.msra.mxu0 0.0
    %3412 = vmatprep.subr.mxu0 0.0
    %3413 = vmatpush1.msra.mxu0 0.0
    %3414 = vmatprep.subr.mxu0 0.0
    %3415 = vmatpush1.msra.mxu0 0.0
    %3416 = vmatprep.subr.mxu0 0.0
    %3417 = vmatpush1.msra.mxu0 0.0
    %3418 = vmatprep.mubr.f32.mxu0 0.0
    %3419 = vmatmul.mubr.f32.gmra.mrb[0].mxu0 %v3049
    %v3420 = vpop.f32.mrb[0].mxu0
    %v3421 = vadd.f32 %v460, %v3420
    %v3422 = vpop.f32.mrb[0].mxu0
    %v3423 = vadd.f32 %v464, %v3422
    %3424 = vdwg.mxu0
    %3425 = vmatprep.subr.mxu0 0.0
    %3426 = vmatpush1.msra.mxu0 %v313
    %3427 = vmatprep.subr.mxu0 0.0
    %3428 = vmatpush1.msra.mxu0 %v316
    %3429 = vmatprep.subr.mxu0 0.0
    %3430 = vmatpush1.msra.mxu0 %v319
    %3431 = vmatprep.subr.mxu0 0.0
    %3432 = vmatpush1.msra.mxu0 %v322
    %3433 = vmatprep.subr.mxu0 0.0
    %3434 = vmatpush1.msra.mxu0 %v325
    %3435 = vmatprep.subr.mxu0 0.0
    %3436 = vmatpush1.msra.mxu0 %v328
    %3437 = vmatprep.subr.mxu0 0.0
    %3438 = vmatpush1.msra.mxu0 %v331
    %3439 = vmatprep.subr.mxu0 0.0
    %3440 = vmatpush1.msra.mxu0 %v334
    %3441 = vmatprep.subr.mxu0 0.0
    %3442 = vmatpush1.msra.mxu0 %v337
    %3443 = vmatprep.subr.mxu0 0.0
    %3444 = vmatpush1.msra.mxu0 %v340
    %3445 = vmatprep.subr.mxu0 0.0
    %3446 = vmatpush1.msra.mxu0 %v343
    %3447 = vmatprep.subr.mxu0 0.0
    %3448 = vmatpush1.msra.mxu0 %v346
    %3449 = vmatprep.subr.mxu0 0.0
    %3450 = vmatpush1.msra.mxu0 %v349
    %3451 = vmatprep.subr.mxu0 0.0
    %3452 = vmatpush1.msra.mxu0 %v352
    %3453 = vmatprep.subr.mxu0 0.0
    %3454 = vmatpush1.msra.mxu0 %v355
    %3455 = vmatprep.subr.mxu0 0.0
    %3456 = vmatpush1.msra.mxu0 %v358
    %3457 = vmatprep.subr.mxu0 0.0
    %3458 = vmatpush1.msra.mxu0 0.0
    %3459 = vmatprep.subr.mxu0 0.0
    %3460 = vmatpush1.msra.mxu0 0.0
    %3461 = vmatprep.subr.mxu0 0.0
    %3462 = vmatpush1.msra.mxu0 0.0
    %3463 = vmatprep.subr.mxu0 0.0
    %3464 = vmatpush1.msra.mxu0 0.0
    %3465 = vmatprep.subr.mxu0 0.0
    %3466 = vmatpush1.msra.mxu0 0.0
    %3467 = vmatprep.subr.mxu0 0.0
    %3468 = vmatpush1.msra.mxu0 0.0
    %3469 = vmatprep.subr.mxu0 0.0
    %3470 = vmatpush1.msra.mxu0 0.0
    %3471 = vmatprep.subr.mxu0 0.0
    %3472 = vmatpush1.msra.mxu0 0.0
    %3473 = vmatprep.subr.mxu0 0.0
    %3474 = vmatpush1.msra.mxu0 0.0
    %3475 = vmatprep.subr.mxu0 0.0
    %3476 = vmatpush1.msra.mxu0 0.0
    %3477 = vmatprep.subr.mxu0 0.0
    %3478 = vmatpush1.msra.mxu0 0.0
    %3479 = vmatprep.subr.mxu0 0.0
    %3480 = vmatpush1.msra.mxu0 0.0
    %3481 = vmatprep.subr.mxu0 0.0
    %3482 = vmatpush1.msra.mxu0 0.0
    %3483 = vmatprep.subr.mxu0 0.0
    %3484 = vmatpush1.msra.mxu0 0.0
    %3485 = vmatprep.subr.mxu0 0.0
    %3486 = vmatpush1.msra.mxu0 0.0
    %3487 = vmatprep.subr.mxu0 0.0
    %3488 = vmatpush1.msra.mxu0 0.0
    %3489 = vmatprep.mubr.f32.mxu0 0.0
    %3490 = vmatmul.mubr.f32.gmra.mrb[0].mxu0 %v3049
    %v3491 = vpop.f32.mrb[0].mxu0
    %v3492 = vadd.f32 %v468, %v3491
    %v3493 = vpop.f32.mrb[0].mxu0
    %3494 = vdwg.mxu0
    %v3496 = vrot.slane %v3421, 4
    %v3498 = vadd.f32 %v232, %v3496
    %v3499 = vxor.u32 %v3498, 2147483648
    %v3500 = vmul.f32 %v3499, 1.442695
    %v3501 = vpow.pop %v3500
    %v3502 = vadd.f32 %v3501, 1.0
    %v3503 = vrcp.pop %v3502
    %v3504 = vmul.f32 1.0, %v3503
    %v3506 = vrot.slane %v3423, 4
    %v3508 = vadd.f32 %v234, %v3506
    %v3509 = vxor.u32 %v3508, 2147483648
    %v3510 = vmul.f32 %v3509, 1.442695
    %v3511 = vpow.pop %v3510
    %v3512 = vadd.f32 %v3511, 1.0
    %v3513 = vrcp.pop %v3512
    %v3514 = vmul.f32 1.0, %v3513
    %v3516 = vrot.slane %v3492, 4
    %v3518 = vmul.f32 %v3504, %v3516
    %v3519 = vadd.f32 %v308, %v3518
    %v3520 = vtanh.pop %v3519
    %v3521 = vsub.f32 1.0, %v3514
    %v3522 = vmul.f32 %v3521, %v3520
    %v3523 = vrot.slane %v3047, 6
    %v3525 = vmul.f32 %v3514, %v3523
    %v3526 = vadd.f32 %v3522, %v3525
    %v3528 = vrot.slane %v3526, 4
    %3530 = vmatprep.subr.mxu0 %v360
    %3531 = vmatpush1.msra.mxu0 %v359
    %3532 = vmatprep.subr.mxu0 %v363
    %3533 = vmatpush1.msra.mxu0 %v362
    %3534 = vmatprep.subr.mxu0 %v366
    %3535 = vmatpush1.msra.mxu0 %v365
    %3536 = vmatprep.subr.mxu0 %v369
    %3537 = vmatpush1.msra.mxu0 %v368
    %3538 = vmatprep.subr.mxu0 %v372
    %3539 = vmatpush1.msra.mxu0 %v371
    %3540 = vmatprep.subr.mxu0 %v375
    %3541 = vmatpush1.msra.mxu0 %v374
    %3542 = vmatprep.subr.mxu0 %v378
    %3543 = vmatpush1.msra.mxu0 %v377
    %3544 = vmatprep.subr.mxu0 %v381
    %3545 = vmatpush1.msra.mxu0 %v380
    %3546 = vmatprep.subr.mxu0 %v384
    %3547 = vmatpush1.msra.mxu0 %v383
    %3548 = vmatprep.subr.mxu0 %v387
    %3549 = vmatpush1.msra.mxu0 %v386
    %3550 = vmatprep.subr.mxu0 %v390
    %3551 = vmatpush1.msra.mxu0 %v389
    %3552 = vmatprep.subr.mxu0 %v393
    %3553 = vmatpush1.msra.mxu0 %v392
    %3554 = vmatprep.subr.mxu0 %v396
    %3555 = vmatpush1.msra.mxu0 %v395
    %3556 = vmatprep.subr.mxu0 %v399
    %3557 = vmatpush1.msra.mxu0 %v398
    %3558 = vmatprep.subr.mxu0 %v402
    %3559 = vmatpush1.msra.mxu0 %v401
    %3560 = vmatprep.subr.mxu0 %v405
    %3561 = vmatpush1.msra.mxu0 %v404
    %3562 = vmatprep.subr.mxu0 0.0
    %3563 = vmatpush1.msra.mxu0 0.0
    %3564 = vmatprep.subr.mxu0 0.0
    %3565 = vmatpush1.msra.mxu0 0.0
    %3566 = vmatprep.subr.mxu0 0.0
    %3567 = vmatpush1.msra.mxu0 0.0
    %3568 = vmatprep.subr.mxu0 0.0
    %3569 = vmatpush1.msra.mxu0 0.0
    %3570 = vmatprep.subr.mxu0 0.0
    %3571 = vmatpush1.msra.mxu0 0.0
    %3572 = vmatprep.subr.mxu0 0.0
    %3573 = vmatpush1.msra.mxu0 0.0
    %3574 = vmatprep.subr.mxu0 0.0
    %3575 = vmatpush1.msra.mxu0 0.0
    %3576 = vmatprep.subr.mxu0 0.0
    %3577 = vmatpush1.msra.mxu0 0.0
    %3578 = vmatprep.subr.mxu0 0.0
    %3579 = vmatpush1.msra.mxu0 0.0
    %3580 = vmatprep.subr.mxu0 0.0
    %3581 = vmatpush1.msra.mxu0 0.0
    %3582 = vmatprep.subr.mxu0 0.0
    %3583 = vmatpush1.msra.mxu0 0.0
    %3584 = vmatprep.subr.mxu0 0.0
    %3585 = vmatpush1.msra.mxu0 0.0
    %3586 = vmatprep.subr.mxu0 0.0
    %3587 = vmatpush1.msra.mxu0 0.0
    %3588 = vmatprep.subr.mxu0 0.0
    %3589 = vmatpush1.msra.mxu0 0.0
    %3590 = vmatprep.subr.mxu0 0.0
    %3591 = vmatpush1.msra.mxu0 0.0
    %3592 = vmatprep.subr.mxu0 0.0
    %3593 = vmatpush1.msra.mxu0 0.0
    %3594 = vmatprep.mubr.f32.mxu0 0.0
    %3595 = vmatmul.mubr.f32.gmra.mrb[0].mxu0 %v3528
    %v3596 = vpop.f32.mrb[0].mxu0
    %v3597 = vadd.f32 %v477, %v3596
    %v3598 = vpop.f32.mrb[0].mxu0
    %v3599 = vadd.f32 %v481, %v3598
    %3600 = vdwg.mxu0
    %3601 = vmatprep.subr.mxu0 0.0
    %3602 = vmatpush1.msra.mxu0 %v361
    %3603 = vmatprep.subr.mxu0 0.0
    %3604 = vmatpush1.msra.mxu0 %v364
    %3605 = vmatprep.subr.mxu0 0.0
    %3606 = vmatpush1.msra.mxu0 %v367
    %3607 = vmatprep.subr.mxu0 0.0
    %3608 = vmatpush1.msra.mxu0 %v370
    %3609 = vmatprep.subr.mxu0 0.0
    %3610 = vmatpush1.msra.mxu0 %v373
    %3611 = vmatprep.subr.mxu0 0.0
    %3612 = vmatpush1.msra.mxu0 %v376
    %3613 = vmatprep.subr.mxu0 0.0
    %3614 = vmatpush1.msra.mxu0 %v379
    %3615 = vmatprep.subr.mxu0 0.0
    %3616 = vmatpush1.msra.mxu0 %v382
    %3617 = vmatprep.subr.mxu0 0.0
    %3618 = vmatpush1.msra.mxu0 %v385
    %3619 = vmatprep.subr.mxu0 0.0
    %3620 = vmatpush1.msra.mxu0 %v388
    %3621 = vmatprep.subr.mxu0 0.0
    %3622 = vmatpush1.msra.mxu0 %v391
    %3623 = vmatprep.subr.mxu0 0.0
    %3624 = vmatpush1.msra.mxu0 %v394
    %3625 = vmatprep.subr.mxu0 0.0
    %3626 = vmatpush1.msra.mxu0 %v397
    %3627 = vmatprep.subr.mxu0 0.0
    %3628 = vmatpush1.msra.mxu0 %v400
    %3629 = vmatprep.subr.mxu0 0.0
    %3630 = vmatpush1.msra.mxu0 %v403
    %3631 = vmatprep.subr.mxu0 0.0
    %3632 = vmatpush1.msra.mxu0 %v406
    %3633 = vmatprep.subr.mxu0 0.0
    %3634 = vmatpush1.msra.mxu0 0.0
    %3635 = vmatprep.subr.mxu0 0.0
    %3636 = vmatpush1.msra.mxu0 0.0
    %3637 = vmatprep.subr.mxu0 0.0
    %3638 = vmatpush1.msra.mxu0 0.0
    %3639 = vmatprep.subr.mxu0 0.0
    %3640 = vmatpush1.msra.mxu0 0.0
    %3641 = vmatprep.subr.mxu0 0.0
    %3642 = vmatpush1.msra.mxu0 0.0
    %3643 = vmatprep.subr.mxu0 0.0
    %3644 = vmatpush1.msra.mxu0 0.0
    %3645 = vmatprep.subr.mxu0 0.0
    %3646 = vmatpush1.msra.mxu0 0.0
    %3647 = vmatprep.subr.mxu0 0.0
    %3648 = vmatpush1.msra.mxu0 0.0
    %3649 = vmatprep.subr.mxu0 0.0
    %3650 = vmatpush1.msra.mxu0 0.0
    %3651 = vmatprep.subr.mxu0 0.0
    %3652 = vmatpush1.msra.mxu0 0.0
    %3653 = vmatprep.subr.mxu0 0.0
    %3654 = vmatpush1.msra.mxu0 0.0
    %3655 = vmatprep.subr.mxu0 0.0
    %3656 = vmatpush1.msra.mxu0 0.0
    %3657 = vmatprep.subr.mxu0 0.0
    %3658 = vmatpush1.msra.mxu0 0.0
    %3659 = vmatprep.subr.mxu0 0.0
    %3660 = vmatpush1.msra.mxu0 0.0
    %3661 = vmatprep.subr.mxu0 0.0
    %3662 = vmatpush1.msra.mxu0 0.0
    %3663 = vmatprep.subr.mxu0 0.0
    %3664 = vmatpush1.msra.mxu0 0.0
    %3665 = vmatprep.mubr.f32.mxu0 0.0
    %3666 = vmatmul.mubr.f32.gmra.mrb[0].mxu0 %v3528
    %v3667 = vpop.f32.mrb[0].mxu0
    %v3668 = vadd.f32 %v485, %v3667
    %v3669 = vpop.f32.mrb[0].mxu0
    %3670 = vdwg.mxu0
    %3671 = vmatprep.subr.mxu0 %v408
    %3672 = vmatpush1.msra.mxu0 %v407
    %3673 = vmatprep.subr.mxu0 %v411
    %3674 = vmatpush1.msra.mxu0 %v410
    %3675 = vmatprep.subr.mxu0 %v414
    %3676 = vmatpush1.msra.mxu0 %v413
    %3677 = vmatprep.subr.mxu0 %v417
    %3678 = vmatpush1.msra.mxu0 %v416
    %3679 = vmatprep.subr.mxu0 %v420
    %3680 = vmatpush1.msra.mxu0 %v419
    %3681 = vmatprep.subr.mxu0 %v423
    %3682 = vmatpush1.msra.mxu0 %v422
    %3683 = vmatprep.subr.mxu0 %v426
    %3684 = vmatpush1.msra.mxu0 %v425
    %3685 = vmatprep.subr.mxu0 %v429
    %3686 = vmatpush1.msra.mxu0 %v428
    %3687 = vmatprep.subr.mxu0 %v432
    %3688 = vmatpush1.msra.mxu0 %v431
    %3689 = vmatprep.subr.mxu0 %v435
    %3690 = vmatpush1.msra.mxu0 %v434
    %3691 = vmatprep.subr.mxu0 %v438
    %3692 = vmatpush1.msra.mxu0 %v437
    %3693 = vmatprep.subr.mxu0 %v441
    %3694 = vmatpush1.msra.mxu0 %v440
    %3695 = vmatprep.subr.mxu0 %v444
    %3696 = vmatpush1.msra.mxu0 %v443
    %3697 = vmatprep.subr.mxu0 %v447
    %3698 = vmatpush1.msra.mxu0 %v446
    %3699 = vmatprep.subr.mxu0 %v450
    %3700 = vmatpush1.msra.mxu0 %v449
    %3701 = vmatprep.subr.mxu0 %v453
    %3702 = vmatpush1.msra.mxu0 %v452
    %3703 = vmatprep.subr.mxu0 0.0
    %3704 = vmatpush1.msra.mxu0 0.0
    %3705 = vmatprep.subr.mxu0 0.0
    %3706 = vmatpush1.msra.mxu0 0.0
    %3707 = vmatprep.subr.mxu0 0.0
    %3708 = vmatpush1.msra.mxu0 0.0
    %3709 = vmatprep.subr.mxu0 0.0
    %3710 = vmatpush1.msra.mxu0 0.0
    %3711 = vmatprep.subr.mxu0 0.0
    %3712 = vmatpush1.msra.mxu0 0.0
    %3713 = vmatprep.subr.mxu0 0.0
    %3714 = vmatpush1.msra.mxu0 0.0
    %3715 = vmatprep.subr.mxu0 0.0
    %3716 = vmatpush1.msra.mxu0 0.0
    %3717 = vmatprep.subr.mxu0 0.0
    %3718 = vmatpush1.msra.mxu0 0.0
    %3719 = vmatprep.subr.mxu0 0.0
    %3720 = vmatpush1.msra.mxu0 0.0
    %3721 = vmatprep.subr.mxu0 0.0
    %3722 = vmatpush1.msra.mxu0 0.0
    %3723 = vmatprep.subr.mxu0 0.0
    %3724 = vmatpush1.msra.mxu0 0.0
    %3725 = vmatprep.subr.mxu0 0.0
    %3726 = vmatpush1.msra.mxu0 0.0
    %3727 = vmatprep.subr.mxu0 0.0
    %3728 = vmatpush1.msra.mxu0 0.0
    %3729 = vmatprep.subr.mxu0 0.0
    %3730 = vmatpush1.msra.mxu0 0.0
    %3731 = vmatprep.subr.mxu0 0.0
    %3732 = vmatpush1.msra.mxu0 0.0
    %3733 = vmatprep.subr.mxu0 0.0
    %3734 = vmatpush1.msra.mxu0 0.0
    %3735 = vmatprep.mubr.f32.mxu0 0.0
    %3736 = vmatmul.mubr.f32.gmra.mrb[0].mxu0 %v3353
    %v3737 = vpop.f32.mrb[0].mxu0
    %v3738 = vadd.f32 %v494, %v3737
    %v3739 = vpop.f32.mrb[0].mxu0
    %v3740 = vadd.f32 %v498, %v3739
    %3741 = vdwg.mxu0
    %3742 = vmatprep.subr.mxu0 0.0
    %3743 = vmatpush1.msra.mxu0 %v409
    %3744 = vmatprep.subr.mxu0 0.0
    %3745 = vmatpush1.msra.mxu0 %v412
    %3746 = vmatprep.subr.mxu0 0.0
    %3747 = vmatpush1.msra.mxu0 %v415
    %3748 = vmatprep.subr.mxu0 0.0
    %3749 = vmatpush1.msra.mxu0 %v418
    %3750 = vmatprep.subr.mxu0 0.0
    %3751 = vmatpush1.msra.mxu0 %v421
    %3752 = vmatprep.subr.mxu0 0.0
    %3753 = vmatpush1.msra.mxu0 %v424
    %3754 = vmatprep.subr.mxu0 0.0
    %3755 = vmatpush1.msra.mxu0 %v427
    %3756 = vmatprep.subr.mxu0 0.0
    %3757 = vmatpush1.msra.mxu0 %v430
    %3758 = vmatprep.subr.mxu0 0.0
    %3759 = vmatpush1.msra.mxu0 %v433
    %3760 = vmatprep.subr.mxu0 0.0
    %3761 = vmatpush1.msra.mxu0 %v436
    %3762 = vmatprep.subr.mxu0 0.0
    %3763 = vmatpush1.msra.mxu0 %v439
    %3764 = vmatprep.subr.mxu0 0.0
    %3765 = vmatpush1.msra.mxu0 %v442
    %3766 = vmatprep.subr.mxu0 0.0
    %3767 = vmatpush1.msra.mxu0 %v445
    %3768 = vmatprep.subr.mxu0 0.0
    %3769 = vmatpush1.msra.mxu0 %v448
    %3770 = vmatprep.subr.mxu0 0.0
    %3771 = vmatpush1.msra.mxu0 %v451
    %3772 = vmatprep.subr.mxu0 0.0
    %3773 = vmatpush1.msra.mxu0 %v454
    %3774 = vmatprep.subr.mxu0 0.0
    %3775 = vmatpush1.msra.mxu0 0.0
    %3776 = vmatprep.subr.mxu0 0.0
    %3777 = vmatpush1.msra.mxu0 0.0
    %3778 = vmatprep.subr.mxu0 0.0
    %3779 = vmatpush1.msra.mxu0 0.0
    %3780 = vmatprep.subr.mxu0 0.0
    %3781 = vmatpush1.msra.mxu0 0.0
    %3782 = vmatprep.subr.mxu0 0.0
    %3783 = vmatpush1.msra.mxu0 0.0
    %3784 = vmatprep.subr.mxu0 0.0
    %3785 = vmatpush1.msra.mxu0 0.0
    %3786 = vmatprep.subr.mxu0 0.0
    %3787 = vmatpush1.msra.mxu0 0.0
    %3788 = vmatprep.subr.mxu0 0.0
    %3789 = vmatpush1.msra.mxu0 0.0
    %3790 = vmatprep.subr.mxu0 0.0
    %3791 = vmatpush1.msra.mxu0 0.0
    %3792 = vmatprep.subr.mxu0 0.0
    %3793 = vmatpush1.msra.mxu0 0.0
    %3794 = vmatprep.subr.mxu0 0.0
    %3795 = vmatpush1.msra.mxu0 0.0
    %3796 = vmatprep.subr.mxu0 0.0
    %3797 = vmatpush1.msra.mxu0 0.0
    %3798 = vmatprep.subr.mxu0 0.0
    %3799 = vmatpush1.msra.mxu0 0.0
    %3800 = vmatprep.subr.mxu0 0.0
    %3801 = vmatpush1.msra.mxu0 0.0
    %3802 = vmatprep.subr.mxu0 0.0
    %3803 = vmatpush1.msra.mxu0 0.0
    %3804 = vmatprep.subr.mxu0 0.0
    %3805 = vmatpush1.msra.mxu0 0.0
    %3806 = vmatprep.mubr.f32.mxu0 0.0
    %3807 = vmatmul.mubr.f32.gmra.mrb[0].mxu0 %v3353
    %v3808 = vpop.f32.mrb[0].mxu0
    %v3809 = vadd.f32 %v502, %v3808
    %v3810 = vpop.f32.mrb[0].mxu0
    %3811 = vdwg.mxu0
    %v3812 = vadd.f32 %v3597, %v3738
    %v3813 = vxor.u32 %v3812, 2147483648
    %v3814 = vmul.f32 %v3813, 1.442695
    %v3815 = vpow.pop %v3814
    %v3816 = vadd.f32 %v3815, 1.0
    %v3817 = vrcp.pop %v3816
    %v3818 = vmul.f32 1.0, %v3817
    %v3819 = vadd.f32 %v3599, %v3740
    %v3820 = vxor.u32 %v3819, 2147483648
    %v3821 = vmul.f32 %v3820, 1.442695
    %v3822 = vpow.pop %v3821
    %v3823 = vadd.f32 %v3822, 1.0
    %v3824 = vrcp.pop %v3823
    %v3825 = vmul.f32 1.0, %v3824
    %v3826 = vmul.f32 %v3818, %v3809
    %v3827 = vadd.f32 %v3668, %v3826
    %v3828 = vtanh.pop %v3827
    %v3829 = vsub.f32 1.0, %v3825
    %v3830 = vmul.f32 %v3829, %v3828
    %v3831 = vmul.f32 %v3825, %v3353
    %v3832 = vadd.f32 %v3830, %v3831
    %3833 = vmatprep.subr.mxu0 %v312
    %3834 = vmatpush1.msra.mxu0 %v311
    %3835 = vmatprep.subr.mxu0 %v315
    %3836 = vmatpush1.msra.mxu0 %v314
    %3837 = vmatprep.subr.mxu0 %v318
    %3838 = vmatpush1.msra.mxu0 %v317
    %3839 = vmatprep.subr.mxu0 %v321
    %3840 = vmatpush1.msra.mxu0 %v320
    %3841 = vmatprep.subr.mxu0 %v324
    %3842 = vmatpush1.msra.mxu0 %v323
    %3843 = vmatprep.subr.mxu0 %v327
    %3844 = vmatpush1.msra.mxu0 %v326
    %3845 = vmatprep.subr.mxu0 %v330
    %3846 = vmatpush1.msra.mxu0 %v329
    %3847 = vmatprep.subr.mxu0 %v333
    %3848 = vmatpush1.msra.mxu0 %v332
    %3849 = vmatprep.subr.mxu0 %v336
    %3850 = vmatpush1.msra.mxu0 %v335
    %3851 = vmatprep.subr.mxu0 %v339
    %3852 = vmatpush1.msra.mxu0 %v338
    %3853 = vmatprep.subr.mxu0 %v342
    %3854 = vmatpush1.msra.mxu0 %v341
    %3855 = vmatprep.subr.mxu0 %v345
    %3856 = vmatpush1.msra.mxu0 %v344
    %3857 = vmatprep.subr.mxu0 %v348
    %3858 = vmatpush1.msra.mxu0 %v347
    %3859 = vmatprep.subr.mxu0 %v351
    %3860 = vmatpush1.msra.mxu0 %v350
    %3861 = vmatprep.subr.mxu0 %v354
    %3862 = vmatpush1.msra.mxu0 %v353
    %3863 = vmatprep.subr.mxu0 %v357
    %3864 = vmatpush1.msra.mxu0 %v356
    %3865 = vmatprep.subr.mxu0 0.0
    %3866 = vmatpush1.msra.mxu0 0.0
    %3867 = vmatprep.subr.mxu0 0.0
    %3868 = vmatpush1.msra.mxu0 0.0
    %3869 = vmatprep.subr.mxu0 0.0
    %3870 = vmatpush1.msra.mxu0 0.0
    %3871 = vmatprep.subr.mxu0 0.0
    %3872 = vmatpush1.msra.mxu0 0.0
    %3873 = vmatprep.subr.mxu0 0.0
    %3874 = vmatpush1.msra.mxu0 0.0
    %3875 = vmatprep.subr.mxu0 0.0
    %3876 = vmatpush1.msra.mxu0 0.0
    %3877 = vmatprep.subr.mxu0 0.0
    %3878 = vmatpush1.msra.mxu0 0.0
    %3879 = vmatprep.subr.mxu0 0.0
    %3880 = vmatpush1.msra.mxu0 0.0
    %3881 = vmatprep.subr.mxu0 0.0
    %3882 = vmatpush1.msra.mxu0 0.0
    %3883 = vmatprep.subr.mxu0 0.0
    %3884 = vmatpush1.msra.mxu0 0.0
    %3885 = vmatprep.subr.mxu0 0.0
    %3886 = vmatpush1.msra.mxu0 0.0
    %3887 = vmatprep.subr.mxu0 0.0
    %3888 = vmatpush1.msra.mxu0 0.0
    %3889 = vmatprep.subr.mxu0 0.0
    %3890 = vmatpush1.msra.mxu0 0.0
    %3891 = vmatprep.subr.mxu0 0.0
    %3892 = vmatpush1.msra.mxu0 0.0
    %3893 = vmatprep.subr.mxu0 0.0
    %3894 = vmatpush1.msra.mxu0 0.0
    %3895 = vmatprep.subr.mxu0 0.0
    %3896 = vmatpush1.msra.mxu0 0.0
    %3897 = vmatprep.mubr.f32.mxu0 0.0
    %3898 = vmatmul.mubr.f32.gmra.mrb[0].mxu0 %v3528
    %v3899 = vpop.f32.mrb[0].mxu0
    %v3900 = vadd.f32 %v460, %v3899
    %v3901 = vpop.f32.mrb[0].mxu0
    %v3902 = vadd.f32 %v464, %v3901
    %3903 = vdwg.mxu0
    %3904 = vmatprep.subr.mxu0 0.0
    %3905 = vmatpush1.msra.mxu0 %v313
    %3906 = vmatprep.subr.mxu0 0.0
    %3907 = vmatpush1.msra.mxu0 %v316
    %3908 = vmatprep.subr.mxu0 0.0
    %3909 = vmatpush1.msra.mxu0 %v319
    %3910 = vmatprep.subr.mxu0 0.0
    %3911 = vmatpush1.msra.mxu0 %v322
    %3912 = vmatprep.subr.mxu0 0.0
    %3913 = vmatpush1.msra.mxu0 %v325
    %3914 = vmatprep.subr.mxu0 0.0
    %3915 = vmatpush1.msra.mxu0 %v328
    %3916 = vmatprep.subr.mxu0 0.0
    %3917 = vmatpush1.msra.mxu0 %v331
    %3918 = vmatprep.subr.mxu0 0.0
    %3919 = vmatpush1.msra.mxu0 %v334
    %3920 = vmatprep.subr.mxu0 0.0
    %3921 = vmatpush1.msra.mxu0 %v337
    %3922 = vmatprep.subr.mxu0 0.0
    %3923 = vmatpush1.msra.mxu0 %v340
    %3924 = vmatprep.subr.mxu0 0.0
    %3925 = vmatpush1.msra.mxu0 %v343
    %3926 = vmatprep.subr.mxu0 0.0
    %3927 = vmatpush1.msra.mxu0 %v346
    %3928 = vmatprep.subr.mxu0 0.0
    %3929 = vmatpush1.msra.mxu0 %v349
    %3930 = vmatprep.subr.mxu0 0.0
    %3931 = vmatpush1.msra.mxu0 %v352
    %3932 = vmatprep.subr.mxu0 0.0
    %3933 = vmatpush1.msra.mxu0 %v355
    %3934 = vmatprep.subr.mxu0 0.0
    %3935 = vmatpush1.msra.mxu0 %v358
    %3936 = vmatprep.subr.mxu0 0.0
    %3937 = vmatpush1.msra.mxu0 0.0
    %3938 = vmatprep.subr.mxu0 0.0
    %3939 = vmatpush1.msra.mxu0 0.0
    %3940 = vmatprep.subr.mxu0 0.0
    %3941 = vmatpush1.msra.mxu0 0.0
    %3942 = vmatprep.subr.mxu0 0.0
    %3943 = vmatpush1.msra.mxu0 0.0
    %3944 = vmatprep.subr.mxu0 0.0
    %3945 = vmatpush1.msra.mxu0 0.0
    %3946 = vmatprep.subr.mxu0 0.0
    %3947 = vmatpush1.msra.mxu0 0.0
    %3948 = vmatprep.subr.mxu0 0.0
    %3949 = vmatpush1.msra.mxu0 0.0
    %3950 = vmatprep.subr.mxu0 0.0
    %3951 = vmatpush1.msra.mxu0 0.0
    %3952 = vmatprep.subr.mxu0 0.0
    %3953 = vmatpush1.msra.mxu0 0.0
    %3954 = vmatprep.subr.mxu0 0.0
    %3955 = vmatpush1.msra.mxu0 0.0
    %3956 = vmatprep.subr.mxu0 0.0
    %3957 = vmatpush1.msra.mxu0 0.0
    %3958 = vmatprep.subr.mxu0 0.0
    %3959 = vmatpush1.msra.mxu0 0.0
    %3960 = vmatprep.subr.mxu0 0.0
    %3961 = vmatpush1.msra.mxu0 0.0
    %3962 = vmatprep.subr.mxu0 0.0
    %3963 = vmatpush1.msra.mxu0 0.0
    %3964 = vmatprep.subr.mxu0 0.0
    %3965 = vmatpush1.msra.mxu0 0.0
    %3966 = vmatprep.subr.mxu0 0.0
    %3967 = vmatpush1.msra.mxu0 0.0
    %3968 = vmatprep.mubr.f32.mxu0 0.0
    %3969 = vmatmul.mubr.f32.gmra.mrb[0].mxu0 %v3528
    %v3970 = vpop.f32.mrb[0].mxu0
    %v3971 = vadd.f32 %v468, %v3970
    %v3972 = vpop.f32.mrb[0].mxu0
    %3973 = vdwg.mxu0
    %v3975 = vrot.slane %v3900, 2
    %v3977 = vadd.f32 %v232, %v3975
    %v3978 = vxor.u32 %v3977, 2147483648
    %v3979 = vmul.f32 %v3978, 1.442695
    %v3980 = vpow.pop %v3979
    %v3981 = vadd.f32 %v3980, 1.0
    %v3982 = vrcp.pop %v3981
    %v3983 = vmul.f32 1.0, %v3982
    %v3985 = vrot.slane %v3902, 2
    %v3987 = vadd.f32 %v234, %v3985
    %v3988 = vxor.u32 %v3987, 2147483648
    %v3989 = vmul.f32 %v3988, 1.442695
    %v3990 = vpow.pop %v3989
    %v3991 = vadd.f32 %v3990, 1.0
    %v3992 = vrcp.pop %v3991
    %v3993 = vmul.f32 1.0, %v3992
    %v3995 = vrot.slane %v3971, 2
    %v3997 = vmul.f32 %v3983, %v3995
    %v3998 = vadd.f32 %v308, %v3997
    %v3999 = vtanh.pop %v3998
    %v4000 = vsub.f32 1.0, %v3993
    %v4001 = vmul.f32 %v4000, %v3999
    %v4002 = vrot.slane %v3526, 6
    %v4004 = vmul.f32 %v3993, %v4002
    %v4005 = vadd.f32 %v4001, %v4004
    %v4007 = vrot.slane %v4005, 6
    %4009 = vmatprep.subr.mxu0 %v360
    %4010 = vmatpush1.msra.mxu0 %v359
    %4011 = vmatprep.subr.mxu0 %v363
    %4012 = vmatpush1.msra.mxu0 %v362
    %4013 = vmatprep.subr.mxu0 %v366
    %4014 = vmatpush1.msra.mxu0 %v365
    %4015 = vmatprep.subr.mxu0 %v369
    %4016 = vmatpush1.msra.mxu0 %v368
    %4017 = vmatprep.subr.mxu0 %v372
    %4018 = vmatpush1.msra.mxu0 %v371
    %4019 = vmatprep.subr.mxu0 %v375
    %4020 = vmatpush1.msra.mxu0 %v374
    %4021 = vmatprep.subr.mxu0 %v378
    %4022 = vmatpush1.msra.mxu0 %v377
    %4023 = vmatprep.subr.mxu0 %v381
    %4024 = vmatpush1.msra.mxu0 %v380
    %4025 = vmatprep.subr.mxu0 %v384
    %4026 = vmatpush1.msra.mxu0 %v383
    %4027 = vmatprep.subr.mxu0 %v387
    %4028 = vmatpush1.msra.mxu0 %v386
    %4029 = vmatprep.subr.mxu0 %v390
    %4030 = vmatpush1.msra.mxu0 %v389
    %4031 = vmatprep.subr.mxu0 %v393
    %4032 = vmatpush1.msra.mxu0 %v392
    %4033 = vmatprep.subr.mxu0 %v396
    %4034 = vmatpush1.msra.mxu0 %v395
    %4035 = vmatprep.subr.mxu0 %v399
    %4036 = vmatpush1.msra.mxu0 %v398
    %4037 = vmatprep.subr.mxu0 %v402
    %4038 = vmatpush1.msra.mxu0 %v401
    %4039 = vmatprep.subr.mxu0 %v405
    %4040 = vmatpush1.msra.mxu0 %v404
    %4041 = vmatprep.subr.mxu0 0.0
    %4042 = vmatpush1.msra.mxu0 0.0
    %4043 = vmatprep.subr.mxu0 0.0
    %4044 = vmatpush1.msra.mxu0 0.0
    %4045 = vmatprep.subr.mxu0 0.0
    %4046 = vmatpush1.msra.mxu0 0.0
    %4047 = vmatprep.subr.mxu0 0.0
    %4048 = vmatpush1.msra.mxu0 0.0
    %4049 = vmatprep.subr.mxu0 0.0
    %4050 = vmatpush1.msra.mxu0 0.0
    %4051 = vmatprep.subr.mxu0 0.0
    %4052 = vmatpush1.msra.mxu0 0.0
    %4053 = vmatprep.subr.mxu0 0.0
    %4054 = vmatpush1.msra.mxu0 0.0
    %4055 = vmatprep.subr.mxu0 0.0
    %4056 = vmatpush1.msra.mxu0 0.0
    %4057 = vmatprep.subr.mxu0 0.0
    %4058 = vmatpush1.msra.mxu0 0.0
    %4059 = vmatprep.subr.mxu0 0.0
    %4060 = vmatpush1.msra.mxu0 0.0
    %4061 = vmatprep.subr.mxu0 0.0
    %4062 = vmatpush1.msra.mxu0 0.0
    %4063 = vmatprep.subr.mxu0 0.0
    %4064 = vmatpush1.msra.mxu0 0.0
    %4065 = vmatprep.subr.mxu0 0.0
    %4066 = vmatpush1.msra.mxu0 0.0
    %4067 = vmatprep.subr.mxu0 0.0
    %4068 = vmatpush1.msra.mxu0 0.0
    %4069 = vmatprep.subr.mxu0 0.0
    %4070 = vmatpush1.msra.mxu0 0.0
    %4071 = vmatprep.subr.mxu0 0.0
    %4072 = vmatpush1.msra.mxu0 0.0
    %4073 = vmatprep.mubr.f32.mxu0 0.0
    %4074 = vmatmul.mubr.f32.gmra.mrb[0].mxu0 %v4007
    %v4075 = vpop.f32.mrb[0].mxu0
    %v4076 = vadd.f32 %v477, %v4075
    %v4077 = vpop.f32.mrb[0].mxu0
    %v4078 = vadd.f32 %v481, %v4077
    %4079 = vdwg.mxu0
    %4080 = vmatprep.subr.mxu0 0.0
    %4081 = vmatpush1.msra.mxu0 %v361
    %4082 = vmatprep.subr.mxu0 0.0
    %4083 = vmatpush1.msra.mxu0 %v364
    %4084 = vmatprep.subr.mxu0 0.0
    %4085 = vmatpush1.msra.mxu0 %v367
    %4086 = vmatprep.subr.mxu0 0.0
    %4087 = vmatpush1.msra.mxu0 %v370
    %4088 = vmatprep.subr.mxu0 0.0
    %4089 = vmatpush1.msra.mxu0 %v373
    %4090 = vmatprep.subr.mxu0 0.0
    %4091 = vmatpush1.msra.mxu0 %v376
    %4092 = vmatprep.subr.mxu0 0.0
    %4093 = vmatpush1.msra.mxu0 %v379
    %4094 = vmatprep.subr.mxu0 0.0
    %4095 = vmatpush1.msra.mxu0 %v382
    %4096 = vmatprep.subr.mxu0 0.0
    %4097 = vmatpush1.msra.mxu0 %v385
    %4098 = vmatprep.subr.mxu0 0.0
    %4099 = vmatpush1.msra.mxu0 %v388
    %4100 = vmatprep.subr.mxu0 0.0
    %4101 = vmatpush1.msra.mxu0 %v391
    %4102 = vmatprep.subr.mxu0 0.0
    %4103 = vmatpush1.msra.mxu0 %v394
    %4104 = vmatprep.subr.mxu0 0.0
    %4105 = vmatpush1.msra.mxu0 %v397
    %4106 = vmatprep.subr.mxu0 0.0
    %4107 = vmatpush1.msra.mxu0 %v400
    %4108 = vmatprep.subr.mxu0 0.0
    %4109 = vmatpush1.msra.mxu0 %v403
    %4110 = vmatprep.subr.mxu0 0.0
    %4111 = vmatpush1.msra.mxu0 %v406
    %4112 = vmatprep.subr.mxu0 0.0
    %4113 = vmatpush1.msra.mxu0 0.0
    %4114 = vmatprep.subr.mxu0 0.0
    %4115 = vmatpush1.msra.mxu0 0.0
    %4116 = vmatprep.subr.mxu0 0.0
    %4117 = vmatpush1.msra.mxu0 0.0
    %4118 = vmatprep.subr.mxu0 0.0
    %4119 = vmatpush1.msra.mxu0 0.0
    %4120 = vmatprep.subr.mxu0 0.0
    %4121 = vmatpush1.msra.mxu0 0.0
    %4122 = vmatprep.subr.mxu0 0.0
    %4123 = vmatpush1.msra.mxu0 0.0
    %4124 = vmatprep.subr.mxu0 0.0
    %4125 = vmatpush1.msra.mxu0 0.0
    %4126 = vmatprep.subr.mxu0 0.0
    %4127 = vmatpush1.msra.mxu0 0.0
    %4128 = vmatprep.subr.mxu0 0.0
    %4129 = vmatpush1.msra.mxu0 0.0
    %4130 = vmatprep.subr.mxu0 0.0
    %4131 = vmatpush1.msra.mxu0 0.0
    %4132 = vmatprep.subr.mxu0 0.0
    %4133 = vmatpush1.msra.mxu0 0.0
    %4134 = vmatprep.subr.mxu0 0.0
    %4135 = vmatpush1.msra.mxu0 0.0
    %4136 = vmatprep.subr.mxu0 0.0
    %4137 = vmatpush1.msra.mxu0 0.0
    %4138 = vmatprep.subr.mxu0 0.0
    %4139 = vmatpush1.msra.mxu0 0.0
    %4140 = vmatprep.subr.mxu0 0.0
    %4141 = vmatpush1.msra.mxu0 0.0
    %4142 = vmatprep.subr.mxu0 0.0
    %4143 = vmatpush1.msra.mxu0 0.0
    %4144 = vmatprep.mubr.f32.mxu0 0.0
    %4145 = vmatmul.mubr.f32.gmra.mrb[0].mxu0 %v4007
    %v4146 = vpop.f32.mrb[0].mxu0
    %v4147 = vadd.f32 %v485, %v4146
    %v4148 = vpop.f32.mrb[0].mxu0
    %4149 = vdwg.mxu0
    %4150 = vmatprep.subr.mxu0 %v408
    %4151 = vmatpush1.msra.mxu0 %v407
    %4152 = vmatprep.subr.mxu0 %v411
    %4153 = vmatpush1.msra.mxu0 %v410
    %4154 = vmatprep.subr.mxu0 %v414
    %4155 = vmatpush1.msra.mxu0 %v413
    %4156 = vmatprep.subr.mxu0 %v417
    %4157 = vmatpush1.msra.mxu0 %v416
    %4158 = vmatprep.subr.mxu0 %v420
    %4159 = vmatpush1.msra.mxu0 %v419
    %4160 = vmatprep.subr.mxu0 %v423
    %4161 = vmatpush1.msra.mxu0 %v422
    %4162 = vmatprep.subr.mxu0 %v426
    %4163 = vmatpush1.msra.mxu0 %v425
    %4164 = vmatprep.subr.mxu0 %v429
    %4165 = vmatpush1.msra.mxu0 %v428
    %4166 = vmatprep.subr.mxu0 %v432
    %4167 = vmatpush1.msra.mxu0 %v431
    %4168 = vmatprep.subr.mxu0 %v435
    %4169 = vmatpush1.msra.mxu0 %v434
    %4170 = vmatprep.subr.mxu0 %v438
    %4171 = vmatpush1.msra.mxu0 %v437
    %4172 = vmatprep.subr.mxu0 %v441
    %4173 = vmatpush1.msra.mxu0 %v440
    %4174 = vmatprep.subr.mxu0 %v444
    %4175 = vmatpush1.msra.mxu0 %v443
    %4176 = vmatprep.subr.mxu0 %v447
    %4177 = vmatpush1.msra.mxu0 %v446
    %4178 = vmatprep.subr.mxu0 %v450
    %4179 = vmatpush1.msra.mxu0 %v449
    %4180 = vmatprep.subr.mxu0 %v453
    %4181 = vmatpush1.msra.mxu0 %v452
    %4182 = vmatprep.subr.mxu0 0.0
    %4183 = vmatpush1.msra.mxu0 0.0
    %4184 = vmatprep.subr.mxu0 0.0
    %4185 = vmatpush1.msra.mxu0 0.0
    %4186 = vmatprep.subr.mxu0 0.0
    %4187 = vmatpush1.msra.mxu0 0.0
    %4188 = vmatprep.subr.mxu0 0.0
    %4189 = vmatpush1.msra.mxu0 0.0
    %4190 = vmatprep.subr.mxu0 0.0
    %4191 = vmatpush1.msra.mxu0 0.0
    %4192 = vmatprep.subr.mxu0 0.0
    %4193 = vmatpush1.msra.mxu0 0.0
    %4194 = vmatprep.subr.mxu0 0.0
    %4195 = vmatpush1.msra.mxu0 0.0
    %4196 = vmatprep.subr.mxu0 0.0
    %4197 = vmatpush1.msra.mxu0 0.0
    %4198 = vmatprep.subr.mxu0 0.0
    %4199 = vmatpush1.msra.mxu0 0.0
    %4200 = vmatprep.subr.mxu0 0.0
    %4201 = vmatpush1.msra.mxu0 0.0
    %4202 = vmatprep.subr.mxu0 0.0
    %4203 = vmatpush1.msra.mxu0 0.0
    %4204 = vmatprep.subr.mxu0 0.0
    %4205 = vmatpush1.msra.mxu0 0.0
    %4206 = vmatprep.subr.mxu0 0.0
    %4207 = vmatpush1.msra.mxu0 0.0
    %4208 = vmatprep.subr.mxu0 0.0
    %4209 = vmatpush1.msra.mxu0 0.0
    %4210 = vmatprep.subr.mxu0 0.0
    %4211 = vmatpush1.msra.mxu0 0.0
    %4212 = vmatprep.subr.mxu0 0.0
    %4213 = vmatpush1.msra.mxu0 0.0
    %4214 = vmatprep.mubr.f32.mxu0 0.0
    %4215 = vmatmul.mubr.f32.gmra.mrb[0].mxu0 %v3832
    %v4216 = vpop.f32.mrb[0].mxu0
    %v4217 = vadd.f32 %v494, %v4216
    %v4218 = vpop.f32.mrb[0].mxu0
    %v4219 = vadd.f32 %v498, %v4218
    %4220 = vdwg.mxu0
    %4221 = vmatprep.subr.mxu0 0.0
    %4222 = vmatpush1.msra.mxu0 %v409
    %4223 = vmatprep.subr.mxu0 0.0
    %4224 = vmatpush1.msra.mxu0 %v412
    %4225 = vmatprep.subr.mxu0 0.0
    %4226 = vmatpush1.msra.mxu0 %v415
    %4227 = vmatprep.subr.mxu0 0.0
    %4228 = vmatpush1.msra.mxu0 %v418
    %4229 = vmatprep.subr.mxu0 0.0
    %4230 = vmatpush1.msra.mxu0 %v421
    %4231 = vmatprep.subr.mxu0 0.0
    %4232 = vmatpush1.msra.mxu0 %v424
    %4233 = vmatprep.subr.mxu0 0.0
    %4234 = vmatpush1.msra.mxu0 %v427
    %4235 = vmatprep.subr.mxu0 0.0
    %4236 = vmatpush1.msra.mxu0 %v430
    %4237 = vmatprep.subr.mxu0 0.0
    %4238 = vmatpush1.msra.mxu0 %v433
    %4239 = vmatprep.subr.mxu0 0.0
    %4240 = vmatpush1.msra.mxu0 %v436
    %4241 = vmatprep.subr.mxu0 0.0
    %4242 = vmatpush1.msra.mxu0 %v439
    %4243 = vmatprep.subr.mxu0 0.0
    %4244 = vmatpush1.msra.mxu0 %v442
    %4245 = vmatprep.subr.mxu0 0.0
    %4246 = vmatpush1.msra.mxu0 %v445
    %4247 = vmatprep.subr.mxu0 0.0
    %4248 = vmatpush1.msra.mxu0 %v448
    %4249 = vmatprep.subr.mxu0 0.0
    %4250 = vmatpush1.msra.mxu0 %v451
    %4251 = vmatprep.subr.mxu0 0.0
    %4252 = vmatpush1.msra.mxu0 %v454
    %4253 = vmatprep.subr.mxu0 0.0
    %4254 = vmatpush1.msra.mxu0 0.0
    %4255 = vmatprep.subr.mxu0 0.0
    %4256 = vmatpush1.msra.mxu0 0.0
    %4257 = vmatprep.subr.mxu0 0.0
    %4258 = vmatpush1.msra.mxu0 0.0
    %4259 = vmatprep.subr.mxu0 0.0
    %4260 = vmatpush1.msra.mxu0 0.0
    %4261 = vmatprep.subr.mxu0 0.0
    %4262 = vmatpush1.msra.mxu0 0.0
    %4263 = vmatprep.subr.mxu0 0.0
    %4264 = vmatpush1.msra.mxu0 0.0
    %4265 = vmatprep.subr.mxu0 0.0
    %4266 = vmatpush1.msra.mxu0 0.0
    %4267 = vmatprep.subr.mxu0 0.0
    %4268 = vmatpush1.msra.mxu0 0.0
    %4269 = vmatprep.subr.mxu0 0.0
    %4270 = vmatpush1.msra.mxu0 0.0
    %4271 = vmatprep.subr.mxu0 0.0
    %4272 = vmatpush1.msra.mxu0 0.0
    %4273 = vmatprep.subr.mxu0 0.0
    %4274 = vmatpush1.msra.mxu0 0.0
    %4275 = vmatprep.subr.mxu0 0.0
    %4276 = vmatpush1.msra.mxu0 0.0
    %4277 = vmatprep.subr.mxu0 0.0
    %4278 = vmatpush1.msra.mxu0 0.0
    %4279 = vmatprep.subr.mxu0 0.0
    %4280 = vmatpush1.msra.mxu0 0.0
    %4281 = vmatprep.subr.mxu0 0.0
    %4282 = vmatpush1.msra.mxu0 0.0
    %4283 = vmatprep.subr.mxu0 0.0
    %4284 = vmatpush1.msra.mxu0 0.0
    %4285 = vmatprep.mubr.f32.mxu0 0.0
    %4286 = vmatmul.mubr.f32.gmra.mrb[0].mxu0 %v3832
    %v4287 = vpop.f32.mrb[0].mxu0
    %v4288 = vadd.f32 %v502, %v4287
    %v4289 = vpop.f32.mrb[0].mxu0
    %4290 = vdwg.mxu0
    %v4291 = vadd.f32 %v4076, %v4217
    %v4292 = vxor.u32 %v4291, 2147483648
    %v4293 = vmul.f32 %v4292, 1.442695
    %v4294 = vpow.pop %v4293
    %v4295 = vadd.f32 %v4294, 1.0
    %v4296 = vrcp.pop %v4295
    %v4297 = vmul.f32 1.0, %v4296
    %v4298 = vadd.f32 %v4078, %v4219
    %v4299 = vxor.u32 %v4298, 2147483648
    %v4300 = vmul.f32 %v4299, 1.442695
    %v4301 = vpow.pop %v4300
    %v4302 = vadd.f32 %v4301, 1.0
    %v4303 = vrcp.pop %v4302
    %v4304 = vmul.f32 1.0, %v4303
    %v4305 = vmul.f32 %v4297, %v4288
    %v4306 = vadd.f32 %v4147, %v4305
    %v4307 = vtanh.pop %v4306
    %v4308 = vsub.f32 1.0, %v4304
    %v4309 = vmul.f32 %v4308, %v4307
    %v4310 = vmul.f32 %v4304, %v3832
    %v4311 = vadd.f32 %v4309, %v4310
    %v4312 = vld [vmem:[%s9] sm:$0x1]
    %v4313 = vld [vmem:[%s10] sm:$0x1]
    %vm4314 = vcmask 254976
    %v4315 = vsel %vm4314, %v4311, 0.0
    %4316 = vadd.xlane.f32.xlu0 %v4315
    %v4317 = vpop.xlane.xlu0 %4316
    %v4318 = vrcp.pop 32.0
    %v4319 = vmul.f32 %v4317, %v4318
    %v4320 = vsub.f32 %v4311, %v4319
    %v4321 = vmul.f32 %v4320, %v4320
    %v4322 = vsel %vm4314, %v4321, 0.0
    %4323 = vadd.xlane.f32.xlu0 %v4322
    %v4324 = vpop.xlane.xlu0 %4323
    %v4325 = vmul.f32 %v4324, %v4318
    %v4326 = vadd.f32 %v4325, 1e-05
    %v4327 = vrsqrt.pop %v4326
    %v4328 = vmul.f32 %v4320, %v4327
    %v4330 = vlaneseq
    %v4331 = vshrl.u32 %v4330, 7
    %v4332 = vsub.s32 0, %v4331
    %v4333 = vrot.slane %v4312, %v4332
    %v4335 = vmul.f32 %v4328, %v4333
    %v4337 = vlaneseq
    %v4338 = vshrl.u32 %v4337, 7
    %v4339 = vsub.s32 0, %v4338
    %v4340 = vrot.slane %v4313, %v4339
    %v4342 = vadd.f32 %v4335, %v4340
    %v4343 = vtanh.pop %v4342
    %v4344 = vld [vmem:[%s11] sm:$0xff]
    %v4345 = vld [vmem:[%s11 + $0x8] sm:$0xff]
    %v4346 = vld [vmem:[%s11 + $0x10] sm:$0xff]
    %v4347 = vld [vmem:[%s11 + $0x18] sm:$0xff]
    %v4348 = vld [vmem:[%s12] sm:$0x1]
    %v4350 = vlaneseq
    %v4351 = vshrl.u32 %v4350, 7
    %v4352 = vsub.s32 0, %v4351
    %v4353 = vrot.slane %v4348, %v4352
    %vm4355 = vcmask 261120
    %v4357 = vsel %vm4355, %v4343, 0
    %4359 = vmatprep.subr.mxu0 0.0
    %4360 = vmatpush1.msra.mxu0 %v4344
    %4361 = vmatprep.subr.mxu0 0.0
    %4362 = vmatpush1.msra.mxu0 %v4345
    %4363 = vmatprep.subr.mxu0 0.0
    %4364 = vmatpush1.msra.mxu0 %v4346
    %4365 = vmatprep.subr.mxu0 0.0
    %4366 = vmatpush1.msra.mxu0 %v4347
    %4367 = vmatprep.subr.mxu0 0.0
    %4368 = vmatpush1.msra.mxu0 0.0
    %4369 = vmatprep.subr.mxu0 0.0
    %4370 = vmatpush1.msra.mxu0 0.0
    %4371 = vmatprep.subr.mxu0 0.0
    %4372 = vmatpush1.msra.mxu0 0.0
    %4373 = vmatprep.subr.mxu0 0.0
    %4374 = vmatpush1.msra.mxu0 0.0
    %4375 = vmatprep.subr.mxu0 0.0
    %4376 = vmatpush1.msra.mxu0 0.0
    %4377 = vmatprep.subr.mxu0 0.0
    %4378 = vmatpush1.msra.mxu0 0.0
    %4379 = vmatprep.subr.mxu0 0.0
    %4380 = vmatpush1.msra.mxu0 0.0
    %4381 = vmatprep.subr.mxu0 0.0
    %4382 = vmatpush1.msra.mxu0 0.0
    %4383 = vmatprep.subr.mxu0 0.0
    %4384 = vmatpush1.msra.mxu0 0.0
    %4385 = vmatprep.subr.mxu0 0.0
    %4386 = vmatpush1.msra.mxu0 0.0
    %4387 = vmatprep.subr.mxu0 0.0
    %4388 = vmatpush1.msra.mxu0 0.0
    %4389 = vmatprep.subr.mxu0 0.0
    %4390 = vmatpush1.msra.mxu0 0.0
    %4391 = vmatprep.subr.mxu0 0.0
    %4392 = vmatpush1.msra.mxu0 0.0
    %4393 = vmatprep.subr.mxu0 0.0
    %4394 = vmatpush1.msra.mxu0 0.0
    %4395 = vmatprep.subr.mxu0 0.0
    %4396 = vmatpush1.msra.mxu0 0.0
    %4397 = vmatprep.subr.mxu0 0.0
    %4398 = vmatpush1.msra.mxu0 0.0
    %4399 = vmatprep.subr.mxu0 0.0
    %4400 = vmatpush1.msra.mxu0 0.0
    %4401 = vmatprep.subr.mxu0 0.0
    %4402 = vmatpush1.msra.mxu0 0.0
    %4403 = vmatprep.subr.mxu0 0.0
    %4404 = vmatpush1.msra.mxu0 0.0
    %4405 = vmatprep.subr.mxu0 0.0
    %4406 = vmatpush1.msra.mxu0 0.0
    %4407 = vmatprep.subr.mxu0 0.0
    %4408 = vmatpush1.msra.mxu0 0.0
    %4409 = vmatprep.subr.mxu0 0.0
    %4410 = vmatpush1.msra.mxu0 0.0
    %4411 = vmatprep.subr.mxu0 0.0
    %4412 = vmatpush1.msra.mxu0 0.0
    %4413 = vmatprep.subr.mxu0 0.0
    %4414 = vmatpush1.msra.mxu0 0.0
    %4415 = vmatprep.subr.mxu0 0.0
    %4416 = vmatpush1.msra.mxu0 0.0
    %4417 = vmatprep.subr.mxu0 0.0
    %4418 = vmatpush1.msra.mxu0 0.0
    %4419 = vmatprep.subr.mxu0 0.0
    %4420 = vmatpush1.msra.mxu0 0.0
    %4421 = vmatprep.subr.mxu0 0.0
    %4422 = vmatpush1.msra.mxu0 0.0
    %4423 = vmatprep.mubr.f32.mxu0 0.0
    %4424 = vmatmul.mubr.f32.gmra.mrb[0].mxu0 %v4357
    %v4425 = vpop.f32.mrb[0].mxu0
    %v4426 = vadd.f32 %v4353, %v4425
    %v4427 = vpop.f32.mrb[0].mxu0
    %4428 = vdwg.mxu0
    %v4429 = vld [vmem:[%s13] sm:$0x1]
    %v4430 = vld [vmem:[%s14] sm:$0x1]
    %vm4431 = vcmask 123904
    %v4432 = vsel %vm4431, %v4426, 0.0
    %4433 = vadd.xlane.f32.xlu0 %v4432
    %v4434 = vpop.xlane.xlu0 %4433
    %v4435 = vrcp.pop 16.0
    %v4436 = vmul.f32 %v4434, %v4435
    %v4437 = vsub.f32 %v4426, %v4436
    %v4438 = vmul.f32 %v4437, %v4437
    %v4439 = vsel %vm4431, %v4438, 0.0
    %4440 = vadd.xlane.f32.xlu0 %v4439
    %v4441 = vpop.xlane.xlu0 %4440
    %v4442 = vmul.f32 %v4441, %v4435
    %v4443 = vadd.f32 %v4442, 1e-05
    %v4444 = vrsqrt.pop %v4443
    %v4445 = vmul.f32 %v4437, %v4444
    %v4447 = vlaneseq
    %v4448 = vshrl.u32 %v4447, 7
    %v4449 = vsub.s32 0, %v4448
    %v4450 = vrot.slane %v4429, %v4449
    %v4452 = vmul.f32 %v4445, %v4450
    %v4454 = vlaneseq
    %v4455 = vshrl.u32 %v4454, 7
    %v4456 = vsub.s32 0, %v4455
    %v4457 = vrot.slane %v4430, %v4456
    %v4459 = vadd.f32 %v4452, %v4457
    %v4460 = vtanh.pop %v4459
    %v4461 = vld [vmem:[%s15] sm:$0xff]
    %v4462 = vld [vmem:[%s15 + $0x8] sm:$0xff]
    %v4463 = vld [vmem:[%s16] sm:$0x1]
    %v4465 = vlaneseq
    %v4466 = vshrl.u32 %v4465, 7
    %v4467 = vsub.s32 0, %v4466
    %v4468 = vrot.slane %v4463, %v4467
    %v4471 = vsel %vm152, %v4460, 0
    %4473 = vmatprep.subr.mxu0 0.0
    %4474 = vmatpush1.msra.mxu0 %v4461
    %4475 = vmatprep.subr.mxu0 0.0
    %4476 = vmatpush1.msra.mxu0 %v4462
    %4477 = vmatprep.subr.mxu0 0.0
    %4478 = vmatpush1.msra.mxu0 0.0
    %4479 = vmatprep.subr.mxu0 0.0
    %4480 = vmatpush1.msra.mxu0 0.0
    %4481 = vmatprep.subr.mxu0 0.0
    %4482 = vmatpush1.msra.mxu0 0.0
    %4483 = vmatprep.subr.mxu0 0.0
    %4484 = vmatpush1.msra.mxu0 0.0
    %4485 = vmatprep.subr.mxu0 0.0
    %4486 = vmatpush1.msra.mxu0 0.0
    %4487 = vmatprep.subr.mxu0 0.0
    %4488 = vmatpush1.msra.mxu0 0.0
    %4489 = vmatprep.subr.mxu0 0.0
    %4490 = vmatpush1.msra.mxu0 0.0
    %4491 = vmatprep.subr.mxu0 0.0
    %4492 = vmatpush1.msra.mxu0 0.0
    %4493 = vmatprep.subr.mxu0 0.0
    %4494 = vmatpush1.msra.mxu0 0.0
    %4495 = vmatprep.subr.mxu0 0.0
    %4496 = vmatpush1.msra.mxu0 0.0
    %4497 = vmatprep.subr.mxu0 0.0
    %4498 = vmatpush1.msra.mxu0 0.0
    %4499 = vmatprep.subr.mxu0 0.0
    %4500 = vmatpush1.msra.mxu0 0.0
    %4501 = vmatprep.subr.mxu0 0.0
    %4502 = vmatpush1.msra.mxu0 0.0
    %4503 = vmatprep.subr.mxu0 0.0
    %4504 = vmatpush1.msra.mxu0 0.0
    %4505 = vmatprep.subr.mxu0 0.0
    %4506 = vmatpush1.msra.mxu0 0.0
    %4507 = vmatprep.subr.mxu0 0.0
    %4508 = vmatpush1.msra.mxu0 0.0
    %4509 = vmatprep.subr.mxu0 0.0
    %4510 = vmatpush1.msra.mxu0 0.0
    %4511 = vmatprep.subr.mxu0 0.0
    %4512 = vmatpush1.msra.mxu0 0.0
    %4513 = vmatprep.subr.mxu0 0.0
    %4514 = vmatpush1.msra.mxu0 0.0
    %4515 = vmatprep.subr.mxu0 0.0
    %4516 = vmatpush1.msra.mxu0 0.0
    %4517 = vmatprep.subr.mxu0 0.0
    %4518 = vmatpush1.msra.mxu0 0.0
    %4519 = vmatprep.subr.mxu0 0.0
    %4520 = vmatpush1.msra.mxu0 0.0
    %4521 = vmatprep.subr.mxu0 0.0
    %4522 = vmatpush1.msra.mxu0 0.0
    %4523 = vmatprep.subr.mxu0 0.0
    %4524 = vmatpush1.msra.mxu0 0.0
    %4525 = vmatprep.subr.mxu0 0.0
    %4526 = vmatpush1.msra.mxu0 0.0
    %4527 = vmatprep.subr.mxu0 0.0
    %4528 = vmatpush1.msra.mxu0 0.0
    %4529 = vmatprep.subr.mxu0 0.0
    %4530 = vmatpush1.msra.mxu0 0.0
    %4531 = vmatprep.subr.mxu0 0.0
    %4532 = vmatpush1.msra.mxu0 0.0
    %4533 = vmatprep.subr.mxu0 0.0
    %4534 = vmatpush1.msra.mxu0 0.0
    %4535 = vmatprep.subr.mxu0 0.0
    %4536 = vmatpush1.msra.mxu0 0.0
    %4537 = vmatprep.mubr.f32.mxu0 0.0
    %4538 = vmatmul.mubr.f32.gmra.mrb[0].mxu0 %v4471
    %v4539 = vpop.f32.mrb[0].mxu0
    %v4540 = vadd.f32 %v4468, %v4539
    %v4541 = vpop.f32.mrb[0].mxu0
    %4542 = vdwg.mxu0
    %v4543 = vld [vmem:[%s17] sm:$0x1]
    %v4544 = vld [vmem:[%s18] sm:$0x1]
    %vm4545 = vcmask 58368
    %v4546 = vsel %vm4545, %v4540, 0.0
    %4547 = vadd.xlane.f32.xlu0 %v4546
    %v4548 = vpop.xlane.xlu0 %4547
    %v4549 = vrcp.pop 8.0
    %v4550 = vmul.f32 %v4548, %v4549
    %v4551 = vsub.f32 %v4540, %v4550
    %v4552 = vmul.f32 %v4551, %v4551
    %v4553 = vsel %vm4545, %v4552, 0.0
    %4554 = vadd.xlane.f32.xlu0 %v4553
    %v4555 = vpop.xlane.xlu0 %4554
    %v4556 = vmul.f32 %v4555, %v4549
    %v4557 = vadd.f32 %v4556, 1e-05
    %v4558 = vrsqrt.pop %v4557
    %v4559 = vmul.f32 %v4551, %v4558
    %v4561 = vlaneseq
    %v4562 = vshrl.u32 %v4561, 7
    %v4563 = vsub.s32 0, %v4562
    %v4564 = vrot.slane %v4543, %v4563
    %v4566 = vmul.f32 %v4559, %v4564
    %v4568 = vlaneseq
    %v4569 = vshrl.u32 %v4568, 7
    %v4570 = vsub.s32 0, %v4569
    %v4571 = vrot.slane %v4544, %v4570
    %v4573 = vadd.f32 %v4566, %v4571
    %v4574 = vtanh.pop %v4573
    %4575 = vst.msk [vmem:[#allocation11] sm:$0x3] %vm4545, %v4574
    // Predicated region
    $region98: #{tpu_custom_call.1} parent=1 // pred_check
      _
    $region99: #{tpu_custom_call.1} parent=1 // pred_check_branch
      %4577 = sbr.rel (0) target = $region101
    $region100: #{tpu_custom_call.1} parent=1 // pred_region
      %s4579 = ssub.s32 32, 32
      %4580 = vsyncadd [#allocation4], %s4579
      %s4582 = sshll.u32 [#allocation11], 4
      %s4583 = int_to_ptr.vmem [resolvable:$true] %s4582
      %4585 = dma.vmem_to_hbm [thread:$0]  %s4583, 32, %s19, [#allocation4]
    $region101: #{tpu_custom_call.1} parent=1 // pred_fallthru
      _
    // Predicated region
    $region102: #{tpu_custom_call.1} parent=1 // pred_check
      _
    $region103: #{tpu_custom_call.1} parent=1 // pred_check_branch
      %4587 = sbr.rel (0) target = $region105
    $region104: #{tpu_custom_call.1} parent=1 // pred_region
      %4588 = dma.done [#allocation4], 32
    $region105: #{tpu_custom_call.1} parent=1 // pred_fallthru
      _
    %4589 = vsyncpa [#allocation3], 1
    %4590 = vsyncpa [#allocation6], 1
    %4591 = vsyncpa [#allocation9], 1
    %4592 = vsyncpa [#allocation4], 1

</llo_original>
